<compile_context>
chip_gen: v7x
topology: tpu7x:2x2x1
jax: 0.10.0
libtpu: 0.0.40
codegen_flags: <defaults>
</compile_context>

<pallas_src>
import jax
import jax.numpy as jnp
import numpy as np
from jax.experimental import pallas as pl
from jax.experimental.pallas import tpu as pltpu

_LANE = 128
_LPAD = 8  # left zero-pad columns in the h1 scratch (keeps interior store aligned)


def _round_up(v, m):
    return (v + m - 1) // m * m


def _pick_divisor(n, target):
    best = 1
    for d in range(1, n + 1):
        if n % d == 0 and d <= target:
            best = d
    return best


def _vmem_limit_bytes():
    cap = 64 * 1024 * 1024          # safe fallback (fits every generation)
    try:
        info = pltpu.get_tpu_info()
        cap = int(getattr(info, "vmem_capacity_bytes", cap))
    except Exception:
        pass
    return int(cap * 4 // 5)        # ~102 MiB on v5e/v6e, ~51 MiB on v7x


_VMEM_LIMIT = _vmem_limit_bytes()


def bottleneck_kernel(xm_ref, xt_ref, xb_ref,
                      w1_ref, b1_ref, w2_ref, b2_ref, w3_ref, b3_ref,
                      o_ref, pad_ref):
    # xm_ref: (Nb, Th, W, Cp) main rows (bf16); xt_ref/xb_ref: (Nb, 1, W, Cp) halo rows.
    Nb, Th, W, Cp = xm_ref.shape
    Pp = w1_ref.shape[1]
    Wp = pad_ref.shape[2]
    L = _LPAD
    hb = pl.program_id(1)
    n_hb = pl.num_programs(1)

    # ---- conv1 (1x1) + folded-bn1 + ReLU on main rows AND the 2 halo rows ----
    # (halo conv1 is recomputed per row block; 2 rows of extra work)
    xfull = jnp.concatenate([xt_ref[...], xm_ref[...], xb_ref[...]], axis=1)
    h1 = jnp.dot(xfull.reshape(Nb * (Th + 2) * W, Cp), w1_ref[...],
                 preferred_element_type=jnp.float32)
    h1 = jnp.maximum(h1 + b1_ref[...], 0.0)

    # ---- zero-padded h1 scratch (bf16): interior store starts at col 8 (aligned) ----
    pad_ref[:, :, 0:L, :] = jnp.zeros((Nb, Th + 2, L, Pp), jnp.bfloat16)
    pad_ref[:, :, L + W:Wp, :] = jnp.zeros((Nb, Th + 2, Wp - L - W, Pp), jnp.bfloat16)
    pad_ref[:, :, L:L + W, :] = h1.reshape(Nb, Th + 2, W, Pp).astype(jnp.bfloat16)

    # conv2's zero padding at the image top/bottom: overwrite the halo rows with zeros
    # (kept per-step so "parallel" grid axes / per-core scratch stay safe).
    @pl.when(hb == 0)
    def _():
        pad_ref[:, 0:1, L:L + W, :] = jnp.zeros((Nb, 1, W, Pp), jnp.bfloat16)

    @pl.when(hb == n_hb - 1)
    def _():
        pad_ref[:, Th + 1:Th + 2, L:L + W, :] = jnp.zeros((Nb, 1, W, Pp), jnp.bfloat16)

    # ---- conv2 (3x3, stride=1, pad=1) + folded-bn2 + ReLU ----
    # 9 accumulated K=Pp matmuls reading shifted windows of pad_ref directly
    # (no materialized 9*Pp im2col slab).
    h2 = jnp.zeros((Nb * Th * W, Pp), jnp.float32)
    for dy in range(3):
        rows = pad_ref[:, dy:dy + Th, :, :]               # (Nb, Th, Wp, Pp) bf16
        for dx in range(3):
            lhs = rows[:, :, L - 1 + dx:L - 1 + dx + W, :].reshape(Nb * Th * W, Pp)
            h2 = h2 + jnp.dot(lhs, w2_ref[dy * 3 + dx],
                              preferred_element_type=jnp.float32)
    h2 = jnp.maximum(h2 + b2_ref[...], 0.0)

    # ---- conv3 (1x1) + folded-bn3 + identity residual + ReLU ----
    h3 = jnp.dot(h2.astype(jnp.bfloat16), w3_ref[...],
                 preferred_element_type=jnp.float32)
    h3 = h3 + b3_ref[...]
    res = xm_ref[...].reshape(Nb * Th * W, Cp).astype(jnp.float32)
    out = jnp.maximum(h3 + res, 0.0)
    o_ref[...] = out.reshape(Nb, Th, W, Cp).astype(o_ref.dtype)


def prepare_params(params):
    """Fold BN into conv weights, pad channel dims to multiples of 128, cast to bf16."""
    w1, s1, b1, w2, s2, b2, w3, s3, b3 = params
    Cin, P = w1.shape
    Cout = w3.shape[1]
    Cp = _round_up(max(Cin, Cout), _LANE)
    Pp = _round_up(P, _LANE)

    w1f = jnp.zeros((Cp, Pp), jnp.float32).at[:Cin, :P].set(w1 * s1.reshape(1, P))
    b1f = jnp.zeros((1, Pp), jnp.float32).at[:, :P].set(b1.reshape(1, P))
    w2f = jnp.zeros((3, 3, Pp, Pp), jnp.float32).at[:, :, :P, :P].set(
        w2 * s2.reshape(1, 1, 1, P))
    w2f = w2f.reshape(9, Pp, Pp)                       # tap index t = 3*dy + dx
    b2f = jnp.zeros((1, Pp), jnp.float32).at[:, :P].set(b2.reshape(1, P))
    w3f = jnp.zeros((Pp, Cp), jnp.float32).at[:P, :Cout].set(w3 * s3.reshape(1, Cout))
    b3f = jnp.zeros((1, Cp), jnp.float32).at[:, :Cout].set(b3.reshape(1, Cout))

    fp = (w1f.astype(jnp.bfloat16), b1f,
          w2f.astype(jnp.bfloat16), b2f,
          w3f.astype(jnp.bfloat16), b3f)
    return fp, Cp, Pp


def bottleneck_core(x, fp, *, row_block=None, batch_block=None):
    """Core kernel on padded NHWC bf16 activations (use directly between stacked blocks)."""
    w1f, b1f, w2f, b2f, w3f, b3f = fp
    N, H, W, Cp = x.shape
    Pp = w1f.shape[1]
    assert Cp % _LANE == 0 and w3f.shape[1] == Cp

    if batch_block is None:
        # keep matmul M = Nb*H*W >= 256 when the spatial extent is small
        batch_block = _pick_divisor(N, max(1, 256 // max(H * W, 1)))
    Nb = batch_block
    if row_block is None:
        row_block = _pick_divisor(H, 16)
    Th = row_block
    assert N % Nb == 0 and H % Th == 0

    L = _LPAD
    Wp = L + _round_up(W + 1, 8)     # >= 1 zero col left of / right of the data

    def _const_spec(arr):
        nd = arr.ndim
        return pl.BlockSpec(arr.shape, lambda nb, hb, _nd=nd: (0,) * _nd)

    in_specs = [
        # main rows of this block
        pl.BlockSpec((Nb, Th, W, Cp), lambda nb, hb: (nb, hb, 0, 0)),
        # 1-row halos (clamped at the image edges; zeroed in-kernel there)
        pl.BlockSpec((Nb, 1, W, Cp),
                     lambda nb, hb: (nb, jnp.maximum(hb * Th - 1, 0), 0, 0)),
        pl.BlockSpec((Nb, 1, W, Cp),
                     lambda nb, hb: (nb, jnp.minimum(hb * Th + Th, H - 1), 0, 0)),
        _const_spec(w1f), _const_spec(b1f),
        _const_spec(w2f), _const_spec(b2f),
        _const_spec(w3f), _const_spec(b3f),
    ]
    out_specs = pl.BlockSpec((Nb, Th, W, Cp), lambda nb, hb: (nb, hb, 0, 0))

    return pl.pallas_call(
        bottleneck_kernel,
        out_shape=jax.ShapeDtypeStruct((N, H, W, Cp), jnp.bfloat16),
        grid_spec=pltpu.PrefetchScalarGridSpec(
            num_scalar_prefetch=0,
            grid=(N // Nb, H // Th),
            in_specs=in_specs,
            out_specs=out_specs,
            scratch_shapes=[pltpu.VMEM((Nb, Th + 2, Wp, Pp), jnp.bfloat16)],
        ),
        compiler_params=pltpu.CompilerParams(
            dimension_semantics=("parallel", "parallel"),
            vmem_limit_bytes=_VMEM_LIMIT,
        ),
    )(x, x, x, w1f, b1f, w2f, b2f, w3f, b3f)


def bottleneck_forward(x_nchw, params, row_block=None, batch_block=None):
    """NCHW f32 boundary wrapper (matches the PyTorch module interface).

    For stacked Bottleneck blocks, call prepare_params once per block and chain
    bottleneck_core on padded-NHWC bf16 activations to avoid per-block transposes.
    """
    w1 = params[0]
    w3 = params[6]
    N, Cin, H, W = x_nchw.shape
    Cout = w3.shape[1]
    assert Cout == Cin, "identity downsample requires inplanes == planes*4"

    fp, Cp, _ = prepare_params(params)
    x = jnp.transpose(x_nchw, (0, 2, 3, 1)).astype(jnp.bfloat16)   # NCHW -> NHWC bf16
    if Cp != Cin:
        x = jnp.pad(x, ((0, 0), (0, 0), (0, 0), (0, Cp - Cin)))

    out = bottleneck_core(x, fp, row_block=row_block, batch_block=batch_block)
    out = out[..., :Cout]
    return jnp.transpose(out, (0, 3, 1, 2)).astype(x_nchw.dtype)   # -> NCHW


def init_params(key, inplanes, planes, eps=1e-5):
    expansion = 4
    keys = jax.random.split(key, 15)
    w1 = 0.1 * jax.random.normal(keys[0], (inplanes, planes), jnp.float32)
    w2 = 0.1 * jax.random.normal(keys[1], (3, 3, planes, planes), jnp.float32)  # HWIO
    w3 = 0.1 * jax.random.normal(keys[2], (planes, planes * expansion), jnp.float32)

    def bn(kg, kb, km, kv, c):
        gamma = 1.0 + 0.1 * jax.random.normal(kg, (c,), jnp.float32)
        beta = 0.1 * jax.random.normal(kb, (c,), jnp.float32)
        mean = 0.1 * jax.random.normal(km, (c,), jnp.float32)
        var = jax.random.uniform(kv, (c,), jnp.float32, minval=0.5, maxval=1.5)
        s = gamma / jnp.sqrt(var + eps)
        b = beta - mean * s
        return s.reshape(1, c), b.reshape(1, c)

    s1, b1 = bn(keys[3], keys[4], keys[5], keys[6], planes)
    s2, b2 = bn(keys[7], keys[8], keys[9], keys[10], planes)
    s3, b3 = bn(keys[11], keys[12], keys[13], keys[14], planes * expansion)
    return (w1, s1, b1, w2, s2, b2, w3, s3, b3)


def reference(x_nchw, params):
    # Pure-JAX f32 reference of the module forward (conv -> BN -> ReLU x3 + residual).
    w1, s1, b1, w2, s2, b2, w3, s3, b3 = params
    x = jnp.transpose(x_nchw, (0, 2, 3, 1))
    h = jnp.einsum('nhwc,cp->nhwp', x, w1)
    h = jnp.maximum(h * s1[0] + b1[0], 0.0)
    h = jax.lax.conv_general_dilated(
        h, w2, window_strides=(1, 1), padding=((1, 1), (1, 1)),
        dimension_numbers=('NHWC', 'HWIO', 'NHWC'))
    h = jnp.maximum(h * s2[0] + b2[0], 0.0)
    h = jnp.einsum('nhwc,cp->nhwp', h, w3)
    h = h * s3[0] + b3[0]
    out = jnp.maximum(h + x, 0.0)
    return jnp.transpose(out, (0, 3, 1, 2))


if __name__ == "__main__":
    key = jax.random.PRNGKey(0)
    kx, kp, kx2, kp2 = jax.random.split(key, 4)

    fwd = jax.jit(bottleneck_forward, static_argnames=("row_block", "batch_block"))

    # Config A: 16x16 image, row_block=8 -> 2 row blocks per image (exercises halo path).
    planes, N, H, W = 4, 2, 16, 16
    inplanes = planes * 4            # identity residual requires inplanes == planes*4
    x = jax.random.normal(kx, (N, inplanes, H, W), jnp.float32)   # NCHW like PyTorch
    params = init_params(kp, inplanes, planes)
    out = jax.block_until_ready(fwd(x, params, row_block=8))
    ref = reference(x, params)
    np.testing.assert_allclose(np.asarray(out, np.float32), np.asarray(ref, np.float32),
                               rtol=5e-2, atol=5e-2)

    # Config B: tiny spatial extent -> automatic batch blocking (Nb > 1), single row block.
    planes2, N2, H2, W2 = 8, 4, 8, 8
    inplanes2 = planes2 * 4
    x2 = jax.random.normal(kx2, (N2, inplanes2, H2, W2), jnp.float32)
    params2 = init_params(kp2, inplanes2, planes2)
    out2 = jax.block_until_ready(fwd(x2, params2))
    ref2 = reference(x2, params2)
    np.testing.assert_allclose(np.asarray(out2, np.float32), np.asarray(ref2, np.float32),
                               rtol=5e-2, atol=5e-2)

    print("KERNEL_OK")
</pallas_src>

<mosaic_0001>
module attributes {stable_mosaic.version = 11 : i64} {
  func.func @bottleneck_kernel(%arg0: i32, %arg1: i32, %arg2: memref<1x8x16x128xbf16, #tpu.memory_space<vmem>>, %arg3: memref<1x1x16x128xbf16, #tpu.memory_space<vmem>>, %arg4: memref<1x1x16x128xbf16, #tpu.memory_space<vmem>>, %arg5: memref<128x128xbf16, #tpu.memory_space<vmem>>, %arg6: memref<1x128xf32, #tpu.memory_space<vmem>>, %arg7: memref<9x128x128xbf16, #tpu.memory_space<vmem>>, %arg8: memref<1x128xf32, #tpu.memory_space<vmem>>, %arg9: memref<128x128xbf16, #tpu.memory_space<vmem>>, %arg10: memref<1x128xf32, #tpu.memory_space<vmem>>, %arg11: memref<1x8x16x128xbf16, #tpu.memory_space<vmem>>, %arg12: memref<1x10x32x128xbf16, #tpu.memory_space<vmem>>) attributes {dimension_semantics = [#tpu.dimension_semantics<parallel>, #tpu.dimension_semantics<parallel>], iteration_bounds = array<i64: 2, 2>, scalar_prefetch = 0 : i64, scratch_operands = 1 : i64, tpu.core_type = #tpu.core_type<tc>, window_params = [{transform_indices = @transform_0, window_bounds = array<i64: 1, 8, 16, 128>}, {transform_indices = @transform_1, window_bounds = array<i64: 1, 1, 16, 128>}, {transform_indices = @transform_2, window_bounds = array<i64: 1, 1, 16, 128>}, {pipeline_mode = #tpu.pipeline_mode<synchronous>, transform_indices = @transform_3, window_bounds = array<i64: 128, 128>}, {pipeline_mode = #tpu.pipeline_mode<synchronous>, transform_indices = @transform_4, window_bounds = array<i64: 1, 128>}, {pipeline_mode = #tpu.pipeline_mode<synchronous>, transform_indices = @transform_5, window_bounds = array<i64: 9, 128, 128>}, {pipeline_mode = #tpu.pipeline_mode<synchronous>, transform_indices = @transform_6, window_bounds = array<i64: 1, 128>}, {pipeline_mode = #tpu.pipeline_mode<synchronous>, transform_indices = @transform_7, window_bounds = array<i64: 128, 128>}, {pipeline_mode = #tpu.pipeline_mode<synchronous>, transform_indices = @transform_8, window_bounds = array<i64: 1, 128>}, {transform_indices = @transform_9, window_bounds = array<i64: 1, 8, 16, 128>}]} {
    %c0 = arith.constant 0 : index
    %c0_0 = arith.constant 0 : index
    %c0_1 = arith.constant 0 : index
    %c0_2 = arith.constant 0 : index
    %0 = vector.load %arg3[%c0, %c0_0, %c0_1, %c0_2] : memref<1x1x16x128xbf16, #tpu.memory_space<vmem>>, vector<1x1x16x128xbf16>
    %c0_3 = arith.constant 0 : index
    %c0_4 = arith.constant 0 : index
    %c0_5 = arith.constant 0 : index
    %c0_6 = arith.constant 0 : index
    %1 = vector.load %arg2[%c0_3, %c0_4, %c0_5, %c0_6] : memref<1x8x16x128xbf16, #tpu.memory_space<vmem>>, vector<1x8x16x128xbf16>
    %c0_7 = arith.constant 0 : index
    %c0_8 = arith.constant 0 : index
    %c0_9 = arith.constant 0 : index
    %c0_10 = arith.constant 0 : index
    %2 = vector.load %arg4[%c0_7, %c0_8, %c0_9, %c0_10] : memref<1x1x16x128xbf16, #tpu.memory_space<vmem>>, vector<1x1x16x128xbf16>
    %3 = tpu.concatenate %0, %1, %2 in 1 : vector<1x1x16x128xbf16>, vector<1x8x16x128xbf16>, vector<1x1x16x128xbf16> -> vector<1x10x16x128xbf16>
    %4 = vector.shape_cast %3 : vector<1x10x16x128xbf16> to vector<160x128xbf16>
    %c0_11 = arith.constant 0 : index
    %c0_12 = arith.constant 0 : index
    %5 = vector.load %arg5[%c0_11, %c0_12] : memref<128x128xbf16, #tpu.memory_space<vmem>>, vector<128x128xbf16>
    %cst = arith.constant dense<0.000000e+00> : vector<160x128xf32>
    %6 = tpu.matmul %4, %5, %cst {dimension_numbers = #tpu.dot_dimension_numbers<[1], [0], [0], [1], [0, 0, 1, 1], [], []>} : vector<160x128xbf16>, vector<128x128xbf16>, vector<160x128xf32> -> vector<160x128xf32>
    %c0_13 = arith.constant 0 : index
    %c0_14 = arith.constant 0 : index
    %7 = vector.load %arg6[%c0_13, %c0_14] : memref<1x128xf32, #tpu.memory_space<vmem>>, vector<1x128xf32>
    %8 = vector.broadcast %7 : vector<1x128xf32> to vector<160x128xf32>
    %9 = arith.addf %6, %8 : vector<160x128xf32>
    %cst_15 = arith.constant 0.000000e+00 : f32
    %10 = vector.broadcast %cst_15 : f32 to vector<160x128xf32>
    %11 = arith.maximumf %9, %10 : vector<160x128xf32>
    %cst_16 = arith.constant 0.000000e+00 : bf16
    %12 = vector.broadcast %cst_16 : bf16 to vector<1x10x8x128xbf16>
    %c0_17 = arith.constant 0 : index
    %c0_18 = arith.constant 0 : index
    %c0_19 = arith.constant 0 : index
    %c0_20 = arith.constant 0 : index
    %13 = vector.load %arg12[%c0_17, %c0_18, %c0_19, %c0_20] : memref<1x10x32x128xbf16, #tpu.memory_space<vmem>>, vector<1x10x8x128xbf16>
    tpu.vector_store %arg12[%c0_17, %c0_18, %c0_19, %c0_20], %12 {strides = array<i32>} : memref<1x10x32x128xbf16, #tpu.memory_space<vmem>>, vector<1x10x8x128xbf16>,
    %cst_21 = arith.constant 0.000000e+00 : bf16
    %14 = vector.broadcast %cst_21 : bf16 to vector<1x10x8x128xbf16>
    %c0_22 = arith.constant 0 : index
    %c0_23 = arith.constant 0 : index
    %c24 = arith.constant 24 : index
    %c0_24 = arith.constant 0 : index
    %15 = vector.load %arg12[%c0_22, %c0_23, %c24, %c0_24] : memref<1x10x32x128xbf16, #tpu.memory_space<vmem>>, vector<1x10x8x128xbf16>
    tpu.vector_store %arg12[%c0_22, %c0_23, %c24, %c0_24], %14 {strides = array<i32>} : memref<1x10x32x128xbf16, #tpu.memory_space<vmem>>, vector<1x10x8x128xbf16>,
    %16 = vector.shape_cast %11 : vector<160x128xf32> to vector<1x10x16x128xf32>
    %17 = arith.truncf %16 : vector<1x10x16x128xf32> to vector<1x10x16x128xbf16>
    %c0_25 = arith.constant 0 : index
    %c0_26 = arith.constant 0 : index
    %c8 = arith.constant 8 : index
    %c0_27 = arith.constant 0 : index
    %18 = vector.load %arg12[%c0_25, %c0_26, %c8, %c0_27] : memref<1x10x32x128xbf16, #tpu.memory_space<vmem>>, vector<1x10x16x128xbf16>
    tpu.vector_store %arg12[%c0_25, %c0_26, %c8, %c0_27], %17 {strides = array<i32>} : memref<1x10x32x128xbf16, #tpu.memory_space<vmem>>, vector<1x10x16x128xbf16>,
    %c0_i32 = arith.constant 0 : i32
    %19 = arith.cmpi eq, %arg1, %c0_i32 : i32
    %20 = arith.extui %19 : i1 to i32
    %c0_i32_28 = arith.constant 0 : i32
    %21 = arith.cmpi ne, %20, %c0_i32_28 : i32
    scf.if %21 {
      %cst_89 = arith.constant 0.000000e+00 : bf16
      %103 = vector.broadcast %cst_89 : bf16 to vector<1x1x16x128xbf16>
      %c0_90 = arith.constant 0 : index
      %c0_91 = arith.constant 0 : index
      %c8_92 = arith.constant 8 : index
      %c0_93 = arith.constant 0 : index
      %104 = vector.load %arg12[%c0_90, %c0_91, %c8_92, %c0_93] : memref<1x10x32x128xbf16, #tpu.memory_space<vmem>>, vector<1x1x16x128xbf16>
      tpu.vector_store %arg12[%c0_90, %c0_91, %c8_92, %c0_93], %103 {strides = array<i32>} : memref<1x10x32x128xbf16, #tpu.memory_space<vmem>>, vector<1x1x16x128xbf16>,
    } else {
    }
    %c1_i32 = arith.constant 1 : i32
    %22 = arith.cmpi eq, %arg1, %c1_i32 : i32
    %23 = arith.extui %22 : i1 to i32
    %c0_i32_29 = arith.constant 0 : i32
    %24 = arith.cmpi ne, %23, %c0_i32_29 : i32
    scf.if %24 {
      %cst_89 = arith.constant 0.000000e+00 : bf16
      %103 = vector.broadcast %cst_89 : bf16 to vector<1x1x16x128xbf16>
      %c0_90 = arith.constant 0 : index
      %c9 = arith.constant 9 : index
      %c8_91 = arith.constant 8 : index
      %c0_92 = arith.constant 0 : index
      %104 = vector.load %arg12[%c0_90, %c9, %c8_91, %c0_92] : memref<1x10x32x128xbf16, #tpu.memory_space<vmem>>, vector<1x1x16x128xbf16>
      tpu.vector_store %arg12[%c0_90, %c9, %c8_91, %c0_92], %103 {strides = array<i32>} : memref<1x10x32x128xbf16, #tpu.memory_space<vmem>>, vector<1x1x16x128xbf16>,
    } else {
    }
    %cst_30 = arith.constant 0.000000e+00 : f32
    %25 = vector.broadcast %cst_30 : f32 to vector<128x128xf32>
    %c0_31 = arith.constant 0 : index
    %c0_32 = arith.constant 0 : index
    %c0_33 = arith.constant 0 : index
    %c0_34 = arith.constant 0 : index
    %26 = vector.load %arg12[%c0_31, %c0_32, %c0_33, %c0_34] : memref<1x10x32x128xbf16, #tpu.memory_space<vmem>>, vector<1x8x32x128xbf16>
    %27 = vector.extract_strided_slice %26 {offsets = [0, 0, 7, 0], sizes = [1, 8, 16, 128], strides = [1, 1, 1, 1]} : vector<1x8x32x128xbf16> to vector<1x8x16x128xbf16>
    %28 = vector.shape_cast %27 : vector<1x8x16x128xbf16> to vector<128x128xbf16>
    %c0_35 = arith.constant 0 : index
    %c0_36 = arith.constant 0 : index
    %c0_37 = arith.constant 0 : index
    %29 = vector.load %arg7[%c0_35, %c0_36, %c0_37] : memref<9x128x128xbf16, #tpu.memory_space<vmem>>, vector<1x128x128xbf16>
    %30 = vector.shape_cast %29 : vector<1x128x128xbf16> to vector<128x128xbf16>
    %cst_38 = arith.constant dense<0.000000e+00> : vector<128x128xf32>
    %31 = tpu.matmul %28, %30, %cst_38 {dimension_numbers = #tpu.dot_dimension_numbers<[1], [0], [0], [1], [0, 0, 1, 1], [], []>} : vector<128x128xbf16>, vector<128x128xbf16>, vector<128x128xf32> -> vector<128x128xf32>
    %32 = arith.addf %25, %31 : vector<128x128xf32>
    %33 = vector.extract_strided_slice %26 {offsets = [0, 0, 8, 0], sizes = [1, 8, 16, 128], strides = [1, 1, 1, 1]} : vector<1x8x32x128xbf16> to vector<1x8x16x128xbf16>
    %34 = vector.shape_cast %33 : vector<1x8x16x128xbf16> to vector<128x128xbf16>
    %c1 = arith.constant 1 : index
    %c0_39 = arith.constant 0 : index
    %c0_40 = arith.constant 0 : index
    %35 = vector.load %arg7[%c1, %c0_39, %c0_40] : memref<9x128x128xbf16, #tpu.memory_space<vmem>>, vector<1x128x128xbf16>
    %36 = vector.shape_cast %35 : vector<1x128x128xbf16> to vector<128x128xbf16>
    %cst_41 = arith.constant dense<0.000000e+00> : vector<128x128xf32>
    %37 = tpu.matmul %34, %36, %cst_41 {dimension_numbers = #tpu.dot_dimension_numbers<[1], [0], [0], [1], [0, 0, 1, 1], [], []>} : vector<128x128xbf16>, vector<128x128xbf16>, vector<128x128xf32> -> vector<128x128xf32>
    %38 = arith.addf %32, %37 : vector<128x128xf32>
    %39 = vector.extract_strided_slice %26 {offsets = [0, 0, 9, 0], sizes = [1, 8, 16, 128], strides = [1, 1, 1, 1]} : vector<1x8x32x128xbf16> to vector<1x8x16x128xbf16>
    %40 = vector.shape_cast %39 : vector<1x8x16x128xbf16> to vector<128x128xbf16>
    %c2 = arith.constant 2 : index
    %c0_42 = arith.constant 0 : index
    %c0_43 = arith.constant 0 : index
    %41 = vector.load %arg7[%c2, %c0_42, %c0_43] : memref<9x128x128xbf16, #tpu.memory_space<vmem>>, vector<1x128x128xbf16>
    %42 = vector.shape_cast %41 : vector<1x128x128xbf16> to vector<128x128xbf16>
    %cst_44 = arith.constant dense<0.000000e+00> : vector<128x128xf32>
    %43 = tpu.matmul %40, %42, %cst_44 {dimension_numbers = #tpu.dot_dimension_numbers<[1], [0], [0], [1], [0, 0, 1, 1], [], []>} : vector<128x128xbf16>, vector<128x128xbf16>, vector<128x128xf32> -> vector<128x128xf32>
    %44 = arith.addf %38, %43 : vector<128x128xf32>
    %c0_45 = arith.constant 0 : index
    %c1_46 = arith.constant 1 : index
    %c0_47 = arith.constant 0 : index
    %c0_48 = arith.constant 0 : index
    %45 = vector.load %arg12[%c0_45, %c1_46, %c0_47, %c0_48] : memref<1x10x32x128xbf16, #tpu.memory_space<vmem>>, vector<1x8x32x128xbf16>
    %46 = vector.extract_strided_slice %45 {offsets = [0, 0, 7, 0], sizes = [1, 8, 16, 128], strides = [1, 1, 1, 1]} : vector<1x8x32x128xbf16> to vector<1x8x16x128xbf16>
    %47 = vector.shape_cast %46 : vector<1x8x16x128xbf16> to vector<128x128xbf16>
    %c3 = arith.constant 3 : index
    %c0_49 = arith.constant 0 : index
    %c0_50 = arith.constant 0 : index
    %48 = vector.load %arg7[%c3, %c0_49, %c0_50] : memref<9x128x128xbf16, #tpu.memory_space<vmem>>, vector<1x128x128xbf16>
    %49 = vector.shape_cast %48 : vector<1x128x128xbf16> to vector<128x128xbf16>
    %cst_51 = arith.constant dense<0.000000e+00> : vector<128x128xf32>
    %50 = tpu.matmul %47, %49, %cst_51 {dimension_numbers = #tpu.dot_dimension_numbers<[1], [0], [0], [1], [0, 0, 1, 1], [], []>} : vector<128x128xbf16>, vector<128x128xbf16>, vector<128x128xf32> -> vector<128x128xf32>
    %51 = arith.addf %44, %50 : vector<128x128xf32>
    %52 = vector.extract_strided_slice %45 {offsets = [0, 0, 8, 0], sizes = [1, 8, 16, 128], strides = [1, 1, 1, 1]} : vector<1x8x32x128xbf16> to vector<1x8x16x128xbf16>
    %53 = vector.shape_cast %52 : vector<1x8x16x128xbf16> to vector<128x128xbf16>
    %c4 = arith.constant 4 : index
    %c0_52 = arith.constant 0 : index
    %c0_53 = arith.constant 0 : index
    %54 = vector.load %arg7[%c4, %c0_52, %c0_53] : memref<9x128x128xbf16, #tpu.memory_space<vmem>>, vector<1x128x128xbf16>
    %55 = vector.shape_cast %54 : vector<1x128x128xbf16> to vector<128x128xbf16>
    %cst_54 = arith.constant dense<0.000000e+00> : vector<128x128xf32>
    %56 = tpu.matmul %53, %55, %cst_54 {dimension_numbers = #tpu.dot_dimension_numbers<[1], [0], [0], [1], [0, 0, 1, 1], [], []>} : vector<128x128xbf16>, vector<128x128xbf16>, vector<128x128xf32> -> vector<128x128xf32>
    %57 = arith.addf %51, %56 : vector<128x128xf32>
    %58 = vector.extract_strided_slice %45 {offsets = [0, 0, 9, 0], sizes = [1, 8, 16, 128], strides = [1, 1, 1, 1]} : vector<1x8x32x128xbf16> to vector<1x8x16x128xbf16>
    %59 = vector.shape_cast %58 : vector<1x8x16x128xbf16> to vector<128x128xbf16>
    %c5 = arith.constant 5 : index
    %c0_55 = arith.constant 0 : index
    %c0_56 = arith.constant 0 : index
    %60 = vector.load %arg7[%c5, %c0_55, %c0_56] : memref<9x128x128xbf16, #tpu.memory_space<vmem>>, vector<1x128x128xbf16>
    %61 = vector.shape_cast %60 : vector<1x128x128xbf16> to vector<128x128xbf16>
    %cst_57 = arith.constant dense<0.000000e+00> : vector<128x128xf32>
    %62 = tpu.matmul %59, %61, %cst_57 {dimension_numbers = #tpu.dot_dimension_numbers<[1], [0], [0], [1], [0, 0, 1, 1], [], []>} : vector<128x128xbf16>, vector<128x128xbf16>, vector<128x128xf32> -> vector<128x128xf32>
    %63 = arith.addf %57, %62 : vector<128x128xf32>
    %c0_58 = arith.constant 0 : index
    %c2_59 = arith.constant 2 : index
    %c0_60 = arith.constant 0 : index
    %c0_61 = arith.constant 0 : index
    %64 = vector.load %arg12[%c0_58, %c2_59, %c0_60, %c0_61] : memref<1x10x32x128xbf16, #tpu.memory_space<vmem>>, vector<1x8x32x128xbf16>
    %65 = vector.extract_strided_slice %64 {offsets = [0, 0, 7, 0], sizes = [1, 8, 16, 128], strides = [1, 1, 1, 1]} : vector<1x8x32x128xbf16> to vector<1x8x16x128xbf16>
    %66 = vector.shape_cast %65 : vector<1x8x16x128xbf16> to vector<128x128xbf16>
    %c6 = arith.constant 6 : index
    %c0_62 = arith.constant 0 : index
    %c0_63 = arith.constant 0 : index
    %67 = vector.load %arg7[%c6, %c0_62, %c0_63] : memref<9x128x128xbf16, #tpu.memory_space<vmem>>, vector<1x128x128xbf16>
    %68 = vector.shape_cast %67 : vector<1x128x128xbf16> to vector<128x128xbf16>
    %cst_64 = arith.constant dense<0.000000e+00> : vector<128x128xf32>
    %69 = tpu.matmul %66, %68, %cst_64 {dimension_numbers = #tpu.dot_dimension_numbers<[1], [0], [0], [1], [0, 0, 1, 1], [], []>} : vector<128x128xbf16>, vector<128x128xbf16>, vector<128x128xf32> -> vector<128x128xf32>
    %70 = arith.addf %63, %69 : vector<128x128xf32>
    %71 = vector.extract_strided_slice %64 {offsets = [0, 0, 8, 0], sizes = [1, 8, 16, 128], strides = [1, 1, 1, 1]} : vector<1x8x32x128xbf16> to vector<1x8x16x128xbf16>
    %72 = vector.shape_cast %71 : vector<1x8x16x128xbf16> to vector<128x128xbf16>
    %c7 = arith.constant 7 : index
    %c0_65 = arith.constant 0 : index
    %c0_66 = arith.constant 0 : index
    %73 = vector.load %arg7[%c7, %c0_65, %c0_66] : memref<9x128x128xbf16, #tpu.memory_space<vmem>>, vector<1x128x128xbf16>
    %74 = vector.shape_cast %73 : vector<1x128x128xbf16> to vector<128x128xbf16>
    %cst_67 = arith.constant dense<0.000000e+00> : vector<128x128xf32>
    %75 = tpu.matmul %72, %74, %cst_67 {dimension_numbers = #tpu.dot_dimension_numbers<[1], [0], [0], [1], [0, 0, 1, 1], [], []>} : vector<128x128xbf16>, vector<128x128xbf16>, vector<128x128xf32> -> vector<128x128xf32>
    %76 = arith.addf %70, %75 : vector<128x128xf32>
    %77 = vector.extract_strided_slice %64 {offsets = [0, 0, 9, 0], sizes = [1, 8, 16, 128], strides = [1, 1, 1, 1]} : vector<1x8x32x128xbf16> to vector<1x8x16x128xbf16>
    %78 = vector.shape_cast %77 : vector<1x8x16x128xbf16> to vector<128x128xbf16>
    %c8_68 = arith.constant 8 : index
    %c0_69 = arith.constant 0 : index
    %c0_70 = arith.constant 0 : index
    %79 = vector.load %arg7[%c8_68, %c0_69, %c0_70] : memref<9x128x128xbf16, #tpu.memory_space<vmem>>, vector<1x128x128xbf16>
    %80 = vector.shape_cast %79 : vector<1x128x128xbf16> to vector<128x128xbf16>
    %cst_71 = arith.constant dense<0.000000e+00> : vector<128x128xf32>
    %81 = tpu.matmul %78, %80, %cst_71 {dimension_numbers = #tpu.dot_dimension_numbers<[1], [0], [0], [1], [0, 0, 1, 1], [], []>} : vector<128x128xbf16>, vector<128x128xbf16>, vector<128x128xf32> -> vector<128x128xf32>
    %82 = arith.addf %76, %81 : vector<128x128xf32>
    %c0_72 = arith.constant 0 : index
    %c0_73 = arith.constant 0 : index
    %83 = vector.load %arg8[%c0_72, %c0_73] : memref<1x128xf32, #tpu.memory_space<vmem>>, vector<1x128xf32>
    %84 = vector.broadcast %83 : vector<1x128xf32> to vector<128x128xf32>
    %85 = arith.addf %82, %84 : vector<128x128xf32>
    %cst_74 = arith.constant 0.000000e+00 : f32
    %86 = vector.broadcast %cst_74 : f32 to vector<128x128xf32>
    %87 = arith.maximumf %85, %86 : vector<128x128xf32>
    %88 = arith.truncf %87 : vector<128x128xf32> to vector<128x128xbf16>
    %c0_75 = arith.constant 0 : index
    %c0_76 = arith.constant 0 : index
    %89 = vector.load %arg9[%c0_75, %c0_76] : memref<128x128xbf16, #tpu.memory_space<vmem>>, vector<128x128xbf16>
    %cst_77 = arith.constant dense<0.000000e+00> : vector<128x128xf32>
    %90 = tpu.matmul %88, %89, %cst_77 {dimension_numbers = #tpu.dot_dimension_numbers<[1], [0], [0], [1], [0, 0, 1, 1], [], []>} : vector<128x128xbf16>, vector<128x128xbf16>, vector<128x128xf32> -> vector<128x128xf32>
    %c0_78 = arith.constant 0 : index
    %c0_79 = arith.constant 0 : index
    %91 = vector.load %arg10[%c0_78, %c0_79] : memref<1x128xf32, #tpu.memory_space<vmem>>, vector<1x128xf32>
    %92 = vector.broadcast %91 : vector<1x128xf32> to vector<128x128xf32>
    %93 = arith.addf %90, %92 : vector<128x128xf32>
    %c0_80 = arith.constant 0 : index
    %c0_81 = arith.constant 0 : index
    %c0_82 = arith.constant 0 : index
    %c0_83 = arith.constant 0 : index
    %94 = vector.load %arg2[%c0_80, %c0_81, %c0_82, %c0_83] : memref<1x8x16x128xbf16, #tpu.memory_space<vmem>>, vector<1x8x16x128xbf16>
    %95 = vector.shape_cast %94 : vector<1x8x16x128xbf16> to vector<128x128xbf16>
    %96 = arith.extf %95 : vector<128x128xbf16> to vector<128x128xf32>
    %97 = arith.addf %93, %96 : vector<128x128xf32>
    %cst_84 = arith.constant 0.000000e+00 : f32
    %98 = vector.broadcast %cst_84 : f32 to vector<128x128xf32>
    %99 = arith.maximumf %97, %98 : vector<128x128xf32>
    %100 = vector.shape_cast %99 : vector<128x128xf32> to vector<1x8x16x128xf32>
    %101 = arith.truncf %100 : vector<1x8x16x128xf32> to vector<1x8x16x128xbf16>
    %c0_85 = arith.constant 0 : index
    %c0_86 = arith.constant 0 : index
    %c0_87 = arith.constant 0 : index
    %c0_88 = arith.constant 0 : index
    %102 = vector.load %arg11[%c0_85, %c0_86, %c0_87, %c0_88] : memref<1x8x16x128xbf16, #tpu.memory_space<vmem>>, vector<1x8x16x128xbf16>
    tpu.vector_store %arg11[%c0_85, %c0_86, %c0_87, %c0_88], %101 {strides = array<i32>} : memref<1x8x16x128xbf16, #tpu.memory_space<vmem>>, vector<1x8x16x128xbf16>,
    return
  }
  func.func @transform_0(%arg0: i32, %arg1: i32) -> (i32, i32, i32, i32) {
    %c0_i32 = arith.constant 0 : i32
    %c0_i32_0 = arith.constant 0 : i32
    %c0_i32_1 = arith.constant 0 : i32
    return %arg0, %arg1, %c0_i32, %c0_i32_0 : i32, i32, i32, i32
  }
  func.func @transform_1(%arg0: i32, %arg1: i32) -> (i32, i32, i32, i32) {
    %c8_i32 = arith.constant 8 : i32
    %0 = arith.muli %arg1, %c8_i32 : i32
    %c1_i32 = arith.constant 1 : i32
    %1 = arith.subi %0, %c1_i32 : i32
    %c0_i32 = arith.constant 0 : i32
    %2 = arith.maxsi %1, %c0_i32 : i32
    %c0_i32_0 = arith.constant 0 : i32
    %c0_i32_1 = arith.constant 0 : i32
    %c0_i32_2 = arith.constant 0 : i32
    return %arg0, %2, %c0_i32_0, %c0_i32_1 : i32, i32, i32, i32
  }
  func.func @transform_2(%arg0: i32, %arg1: i32) -> (i32, i32, i32, i32) {
    %c8_i32 = arith.constant 8 : i32
    %0 = arith.muli %arg1, %c8_i32 : i32
    %c8_i32_0 = arith.constant 8 : i32
    %1 = arith.addi %0, %c8_i32_0 : i32
    %c15_i32 = arith.constant 15 : i32
    %2 = arith.minsi %1, %c15_i32 : i32
    %c0_i32 = arith.constant 0 : i32
    %c0_i32_1 = arith.constant 0 : i32
    %c0_i32_2 = arith.constant 0 : i32
    return %arg0, %2, %c0_i32, %c0_i32_1 : i32, i32, i32, i32
  }
  func.func @transform_3(%arg0: i32, %arg1: i32) -> (i32, i32) {
    %c0_i32 = arith.constant 0 : i32
    %c0_i32_0 = arith.constant 0 : i32
    %c0_i32_1 = arith.constant 0 : i32
    return %c0_i32, %c0_i32_0 : i32, i32
  }
  func.func @transform_4(%arg0: i32, %arg1: i32) -> (i32, i32) {
    %c0_i32 = arith.constant 0 : i32
    %c0_i32_0 = arith.constant 0 : i32
    %c0_i32_1 = arith.constant 0 : i32
    return %c0_i32, %c0_i32_0 : i32, i32
  }
  func.func @transform_5(%arg0: i32, %arg1: i32) -> (i32, i32, i32) {
    %c0_i32 = arith.constant 0 : i32
    %c0_i32_0 = arith.constant 0 : i32
    %c0_i32_1 = arith.constant 0 : i32
    %c0_i32_2 = arith.constant 0 : i32
    return %c0_i32, %c0_i32_0, %c0_i32_1 : i32, i32, i32
  }
  func.func @transform_6(%arg0: i32, %arg1: i32) -> (i32, i32) {
    %c0_i32 = arith.constant 0 : i32
    %c0_i32_0 = arith.constant 0 : i32
    %c0_i32_1 = arith.constant 0 : i32
    return %c0_i32, %c0_i32_0 : i32, i32
  }
  func.func @transform_7(%arg0: i32, %arg1: i32) -> (i32, i32) {
    %c0_i32 = arith.constant 0 : i32
    %c0_i32_0 = arith.constant 0 : i32
    %c0_i32_1 = arith.constant 0 : i32
    return %c0_i32, %c0_i32_0 : i32, i32
  }
  func.func @transform_8(%arg0: i32, %arg1: i32) -> (i32, i32) {
    %c0_i32 = arith.constant 0 : i32
    %c0_i32_0 = arith.constant 0 : i32
    %c0_i32_1 = arith.constant 0 : i32
    return %c0_i32, %c0_i32_0 : i32, i32
  }
  func.func @transform_9(%arg0: i32, %arg1: i32) -> (i32, i32, i32, i32) {
    %c0_i32 = arith.constant 0 : i32
    %c0_i32_0 = arith.constant 0 : i32
    %c0_i32_1 = arith.constant 0 : i32
    return %arg0, %arg1, %c0_i32, %c0_i32_0 : i32, i32, i32, i32
  }
}

</mosaic_0001>

<llo_original>
// kernel: bottleneck_forward.1
$region0: #{bottleneck_forward.1}
  #allocation0 [shape = 'u32[]', space=smem, size = 0x4, offset = 0x4, fixed_abs, tag = 'smem constant byte address 0x4 - core index']
  #allocation1 [shape = 'u32[144,128]{1,0:T(1,128)}', space=vmem, size = 0x12000, scoped, tag = 'internal scratch']
  #allocation2 [shape = 'bf16[1,10,32,128]{3,2,1,0:T(16,128)(2,1)}', space=vmem, size = 0x14000, scoped, tag = 'scratch operand']
  %s0 = inlined_call_operand.vmem [shape: bf16[2,16,16,128], index: 0, kind: input, shape index: {}, may-alias: {0,1,2}]
  %s1 = inlined_call_operand.vmem [shape: bf16[2,16,16,128], index: 1, kind: input, shape index: {}, may-alias: {0,1,2}]
  %s2 = inlined_call_operand.vmem [shape: bf16[2,16,16,128], index: 2, kind: input, shape index: {}, may-alias: {0,1,2}]
  %s3 = inlined_call_operand.vmem [shape: bf16[128,128], index: 3, kind: input, shape index: {}]
  %s4 = inlined_call_operand.vmem [shape: f32[1,128], index: 4, kind: input, shape index: {}]
  %s5 = inlined_call_operand.vmem [shape: bf16[9,128,128], index: 5, kind: input, shape index: {}]
  %s6 = inlined_call_operand.vmem [shape: f32[1,128], index: 6, kind: input, shape index: {}]
  %s7 = inlined_call_operand.vmem [shape: bf16[128,128], index: 7, kind: input, shape index: {}]
  %s8 = inlined_call_operand.vmem [shape: f32[1,128], index: 8, kind: input, shape index: {}]
  %s9 = inlined_call_operand.vmem [shape: bf16[2,16,16,128], index: 9, kind: output, shape index: {}]
  %s10 = sld [smem:[#allocation0]]
  $region77: #{bottleneck_forward.1} parent=0
    _
  %s12 = ssub.s32 1, %s10
  %s13 = scalar_select 0, %s12, %s10
  loop: start=0, step=1, limit=6
  $region2: #{bottleneck_forward.1} parent=0 // loop_pre_header
    _
  $region3: #{bottleneck_forward.1} parent=0 // loop_header
    %s15 = sphi 0, %s19
    %p16 = scmp.ge.s32.totalorder %s15, 6
    %s22 = sphi 0, %s34
    %s23 = sphi 0, %s30
    %s24 = sphi 0, %s22
    %s25 = sphi 0, %s23
    %s26 = sphi 0, %s24
    %s27 = sphi 0, %s25
    %s39 = sphi 0, %s41
    %s42 = sphi 0, %s39
    %s43 = sphi 0, %s42
    %s59 = sphi 0, %s43
    %s75 = sphi 0, %s77
    %s78 = sphi 0, %s75
    %s79 = sphi 0, %s78
    %s95 = sphi 0, %s79
    %s111 = sphi 0, %s113
    %s114 = sphi 0, %s111
    %s115 = sphi 0, %s114
    %s131 = sphi 0, %s115
    %s135 = sphi 0, %s135
    %s137 = sphi 0, %s135
    %s138 = sphi 0, %s137
    %s152 = sphi 0, %s138
    %s156 = sphi 0, %s156
    %s158 = sphi 0, %s156
    %s159 = sphi 0, %s158
    %s173 = sphi 0, %s159
    %s177 = sphi 0, %s177
    %s179 = sphi 0, %s177
    %s180 = sphi 0, %s179
    %s194 = sphi 0, %s180
    %s198 = sphi 0, %s198
    %s200 = sphi 0, %s198
    %s201 = sphi 0, %s200
    %s215 = sphi 0, %s201
    %s219 = sphi 0, %s219
    %s221 = sphi 0, %s219
    %s222 = sphi 0, %s221
    %s236 = sphi 0, %s222
    %s240 = sphi 0, %s240
    %s242 = sphi 0, %s240
    %s243 = sphi 0, %s242
    %s257 = sphi 0, %s243
    %s265 = sphi 0, %s267
    %s268 = sphi 0, %s265
    %s269 = sphi 0, %s268
    %s285 = sphi 0, %s269
  $region4: #{bottleneck_forward.1} parent=0 // loop_header_branch
    %18 = sbr.rel (%p16) target = $region8
  $region5: #{bottleneck_forward.1} parent=0 // loop_body
    %s20 = ssub.s32 %s15, 1
    %s21 = ssub.s32 %s15, 2
    %s28 = sadd.s32 1, %s23
    %p29 = scmp.ge.s32.totalorder %s28, 2
    %s30 = scalar_select %p29, 0, %s28
    %s31 = sadd.s32 1, %s22
    %s32 = scalar_select %p29, %s31, %s22
    %p33 = scmp.ge.s32.totalorder %s32, 2
    %s34 = scalar_select %p33, 0, %s32
    %s35 = ssub.s32 %s22, %s34
    %s36 = ssub.s32 %s23, %s30
    %s37 = sor.u32 %s35, %s36
    %p38 = scmp.eq.s32.totalorder %s37, 0
    %s40 = sadd.s32 %s39, 1
    %s41 = scalar_select %p38, %s39, %s40
    %p44 = pneg %p38
    %p45 = scmp.eq.s32.totalorder %s15, 3
    %p46 = por %p44, %p45
    %p47 = scmp.ne.s32.totalorder %s39, %s42
    %p48 = scmp.eq.s32.totalorder %s15, 0
    %p49 = por %p47, %p48
    %p50 = scmp.ne.s32.totalorder %s39, %s42
    %p51 = scmp.eq.s32.totalorder %s20, 3
    %p52 = por %p50, %p51
    %p53 = scmp.ne.s32.totalorder %s42, %s43
    %p54 = scmp.eq.s32.totalorder %s20, 0
    %p55 = por %p53, %p54
    %p56 = scmp.ne.s32.totalorder %s42, %s43
    %p57 = scmp.eq.s32.totalorder %s21, 3
    %p58 = por %p56, %p57
    %p60 = scmp.ne.s32.totalorder %s43, %s59
    %p61 = scmp.eq.s32.totalorder %s21, 0
    %p62 = por %p60, %p61
    %s63 = smul.u32 %s23, 8
    %s64 = ssub.s32 %s63, 1
    %p65 = scmp.gt.s32.totalorder %s64, 0
    %s66 = scalar_select %p65, %s64, 0
    %s67 = smul.u32 %s30, 8
    %s68 = ssub.s32 %s67, 1
    %p69 = scmp.gt.s32.totalorder %s68, 0
    %s70 = scalar_select %p69, %s68, 0
    %s71 = ssub.s32 %s22, %s34
    %s72 = ssub.s32 %s66, %s70
    %s73 = sor.u32 %s71, %s72
    %p74 = scmp.eq.s32.totalorder %s73, 0
    %s76 = sadd.s32 %s75, 1
    %s77 = scalar_select %p74, %s75, %s76
    %p80 = pneg %p74
    %p81 = scmp.eq.s32.totalorder %s15, 3
    %p82 = por %p80, %p81
    %p83 = scmp.ne.s32.totalorder %s75, %s78
    %p84 = scmp.eq.s32.totalorder %s15, 0
    %p85 = por %p83, %p84
    %p86 = scmp.ne.s32.totalorder %s75, %s78
    %p87 = scmp.eq.s32.totalorder %s20, 3
    %p88 = por %p86, %p87
    %p89 = scmp.ne.s32.totalorder %s78, %s79
    %p90 = scmp.eq.s32.totalorder %s20, 0
    %p91 = por %p89, %p90
    %p92 = scmp.ne.s32.totalorder %s78, %s79
    %p93 = scmp.eq.s32.totalorder %s21, 3
    %p94 = por %p92, %p93
    %p96 = scmp.ne.s32.totalorder %s79, %s95
    %p97 = scmp.eq.s32.totalorder %s21, 0
    %p98 = por %p96, %p97
    %s99 = smul.u32 %s23, 8
    %s100 = sadd.s32 %s99, 8
    %p101 = scmp.lt.s32.totalorder %s100, 15
    %s102 = scalar_select %p101, %s100, 15
    %s103 = smul.u32 %s30, 8
    %s104 = sadd.s32 %s103, 8
    %p105 = scmp.lt.s32.totalorder %s104, 15
    %s106 = scalar_select %p105, %s104, 15
    %s107 = ssub.s32 %s22, %s34
    %s108 = ssub.s32 %s102, %s106
    %s109 = sor.u32 %s107, %s108
    %p110 = scmp.eq.s32.totalorder %s109, 0
    %s112 = sadd.s32 %s111, 1
    %s113 = scalar_select %p110, %s111, %s112
    %p116 = pneg %p110
    %p117 = scmp.eq.s32.totalorder %s15, 3
    %p118 = por %p116, %p117
    %p119 = scmp.ne.s32.totalorder %s111, %s114
    %p120 = scmp.eq.s32.totalorder %s15, 0
    %p121 = por %p119, %p120
    %p122 = scmp.ne.s32.totalorder %s111, %s114
    %p123 = scmp.eq.s32.totalorder %s20, 3
    %p124 = por %p122, %p123
    %p125 = scmp.ne.s32.totalorder %s114, %s115
    %p126 = scmp.eq.s32.totalorder %s20, 0
    %p127 = por %p125, %p126
    %p128 = scmp.ne.s32.totalorder %s114, %s115
    %p129 = scmp.eq.s32.totalorder %s21, 3
    %p130 = por %p128, %p129
    %p132 = scmp.ne.s32.totalorder %s115, %s131
    %p133 = scmp.eq.s32.totalorder %s21, 0
    %p134 = por %p132, %p133
    %s136 = sadd.s32 %s135, 1
    %p139 = scmp.eq.s32.totalorder %s15, 3
    %p140 = scmp.ne.s32.totalorder %s135, %s137
    %p141 = scmp.eq.s32.totalorder %s15, 0
    %p142 = por %p140, %p141
    %p143 = scmp.ne.s32.totalorder %s135, %s137
    %p144 = scmp.eq.s32.totalorder %s20, 3
    %p145 = por %p143, %p144
    %p146 = scmp.ne.s32.totalorder %s137, %s138
    %p147 = scmp.eq.s32.totalorder %s20, 0
    %p148 = por %p146, %p147
    %p149 = scmp.ne.s32.totalorder %s137, %s138
    %p150 = scmp.eq.s32.totalorder %s21, 3
    %p151 = por %p149, %p150
    %p153 = scmp.ne.s32.totalorder %s138, %s152
    %p154 = scmp.eq.s32.totalorder %s21, 0
    %p155 = por %p153, %p154
    %s157 = sadd.s32 %s156, 1
    %p160 = scmp.eq.s32.totalorder %s15, 3
    %p161 = scmp.ne.s32.totalorder %s156, %s158
    %p162 = scmp.eq.s32.totalorder %s15, 0
    %p163 = por %p161, %p162
    %p164 = scmp.ne.s32.totalorder %s156, %s158
    %p165 = scmp.eq.s32.totalorder %s20, 3
    %p166 = por %p164, %p165
    %p167 = scmp.ne.s32.totalorder %s158, %s159
    %p168 = scmp.eq.s32.totalorder %s20, 0
    %p169 = por %p167, %p168
    %p170 = scmp.ne.s32.totalorder %s158, %s159
    %p171 = scmp.eq.s32.totalorder %s21, 3
    %p172 = por %p170, %p171
    %p174 = scmp.ne.s32.totalorder %s159, %s173
    %p175 = scmp.eq.s32.totalorder %s21, 0
    %p176 = por %p174, %p175
    %s178 = sadd.s32 %s177, 1
    %p181 = scmp.eq.s32.totalorder %s15, 3
    %p182 = scmp.ne.s32.totalorder %s177, %s179
    %p183 = scmp.eq.s32.totalorder %s15, 0
    %p184 = por %p182, %p183
    %p185 = scmp.ne.s32.totalorder %s177, %s179
    %p186 = scmp.eq.s32.totalorder %s20, 3
    %p187 = por %p185, %p186
    %p188 = scmp.ne.s32.totalorder %s179, %s180
    %p189 = scmp.eq.s32.totalorder %s20, 0
    %p190 = por %p188, %p189
    %p191 = scmp.ne.s32.totalorder %s179, %s180
    %p192 = scmp.eq.s32.totalorder %s21, 3
    %p193 = por %p191, %p192
    %p195 = scmp.ne.s32.totalorder %s180, %s194
    %p196 = scmp.eq.s32.totalorder %s21, 0
    %p197 = por %p195, %p196
    %s199 = sadd.s32 %s198, 1
    %p202 = scmp.eq.s32.totalorder %s15, 3
    %p203 = scmp.ne.s32.totalorder %s198, %s200
    %p204 = scmp.eq.s32.totalorder %s15, 0
    %p205 = por %p203, %p204
    %p206 = scmp.ne.s32.totalorder %s198, %s200
    %p207 = scmp.eq.s32.totalorder %s20, 3
    %p208 = por %p206, %p207
    %p209 = scmp.ne.s32.totalorder %s200, %s201
    %p210 = scmp.eq.s32.totalorder %s20, 0
    %p211 = por %p209, %p210
    %p212 = scmp.ne.s32.totalorder %s200, %s201
    %p213 = scmp.eq.s32.totalorder %s21, 3
    %p214 = por %p212, %p213
    %p216 = scmp.ne.s32.totalorder %s201, %s215
    %p217 = scmp.eq.s32.totalorder %s21, 0
    %p218 = por %p216, %p217
    %s220 = sadd.s32 %s219, 1
    %p223 = scmp.eq.s32.totalorder %s15, 3
    %p224 = scmp.ne.s32.totalorder %s219, %s221
    %p225 = scmp.eq.s32.totalorder %s15, 0
    %p226 = por %p224, %p225
    %p227 = scmp.ne.s32.totalorder %s219, %s221
    %p228 = scmp.eq.s32.totalorder %s20, 3
    %p229 = por %p227, %p228
    %p230 = scmp.ne.s32.totalorder %s221, %s222
    %p231 = scmp.eq.s32.totalorder %s20, 0
    %p232 = por %p230, %p231
    %p233 = scmp.ne.s32.totalorder %s221, %s222
    %p234 = scmp.eq.s32.totalorder %s21, 3
    %p235 = por %p233, %p234
    %p237 = scmp.ne.s32.totalorder %s222, %s236
    %p238 = scmp.eq.s32.totalorder %s21, 0
    %p239 = por %p237, %p238
    %s241 = sadd.s32 %s240, 1
    %p244 = scmp.eq.s32.totalorder %s15, 3
    %p245 = scmp.ne.s32.totalorder %s240, %s242
    %p246 = scmp.eq.s32.totalorder %s15, 0
    %p247 = por %p245, %p246
    %p248 = scmp.ne.s32.totalorder %s240, %s242
    %p249 = scmp.eq.s32.totalorder %s20, 3
    %p250 = por %p248, %p249
    %p251 = scmp.ne.s32.totalorder %s242, %s243
    %p252 = scmp.eq.s32.totalorder %s20, 0
    %p253 = por %p251, %p252
    %p254 = scmp.ne.s32.totalorder %s242, %s243
    %p255 = scmp.eq.s32.totalorder %s21, 3
    %p256 = por %p254, %p255
    %p258 = scmp.ne.s32.totalorder %s243, %s257
    %p259 = scmp.eq.s32.totalorder %s21, 0
    %p260 = por %p258, %p259
    %s261 = ssub.s32 %s22, %s34
    %s262 = ssub.s32 %s23, %s30
    %s263 = sor.u32 %s261, %s262
    %p264 = scmp.eq.s32.totalorder %s263, 0
    %s266 = sadd.s32 %s265, 1
    %s267 = scalar_select %p264, %s265, %s266
    %p270 = pneg %p264
    %p271 = scmp.eq.s32.totalorder %s15, 3
    %p272 = por %p270, %p271
    %p273 = scmp.ne.s32.totalorder %s265, %s268
    %p274 = scmp.eq.s32.totalorder %s15, 0
    %p275 = por %p273, %p274
    %p276 = scmp.ne.s32.totalorder %s265, %s268
    %p277 = scmp.eq.s32.totalorder %s20, 3
    %p278 = por %p276, %p277
    %p279 = scmp.ne.s32.totalorder %s268, %s269
    %p280 = scmp.eq.s32.totalorder %s20, 0
    %p281 = por %p279, %p280
    %p282 = scmp.ne.s32.totalorder %s268, %s269
    %p283 = scmp.eq.s32.totalorder %s21, 3
    %p284 = por %p282, %p283
    %p286 = scmp.ne.s32.totalorder %s269, %s285
    %p287 = scmp.eq.s32.totalorder %s21, 0
    %p288 = por %p286, %p287
    %p289 = scmp.le.s32.totalorder 1, %s15
    %p290 = scmp.lt.s32.totalorder %s15, 5
    %p291 = pnand %p289, %p290
    %p292 = pneg %p291
    // Predicated region
    $region9: #{bottleneck_forward.1} parent=5 // pred_check
      _
    $region10: #{bottleneck_forward.1} parent=5 // pred_check_branch
      %294 = sbr.rel (%p291) target = $region12
    $region11: #{bottleneck_forward.1} parent=5 // pred_region
      %s295 = ssub.s32 %s15, 1
      // Predicated region
      $region13: #{bottleneck_forward.1} parent=11 // pred_check
        %p296 = pneg %p148
      $region14: #{bottleneck_forward.1} parent=11 // pred_check_branch
        %298 = sbr.rel (%p296) target = $region16
      $region15: #{bottleneck_forward.1} parent=11 // pred_region
        _
      $region16: #{bottleneck_forward.1} parent=11 // pred_fallthru
        _
      // Predicated region
      $region17: #{bottleneck_forward.1} parent=11 // pred_check
        %p299 = pneg %p169
      $region18: #{bottleneck_forward.1} parent=11 // pred_check_branch
        %301 = sbr.rel (%p299) target = $region20
      $region19: #{bottleneck_forward.1} parent=11 // pred_region
        _
      $region20: #{bottleneck_forward.1} parent=11 // pred_fallthru
        _
      // Predicated region
      $region21: #{bottleneck_forward.1} parent=11 // pred_check
        %p302 = pneg %p190
      $region22: #{bottleneck_forward.1} parent=11 // pred_check_branch
        %304 = sbr.rel (%p302) target = $region24
      $region23: #{bottleneck_forward.1} parent=11 // pred_region
        _
      $region24: #{bottleneck_forward.1} parent=11 // pred_fallthru
        _
      // Predicated region
      $region25: #{bottleneck_forward.1} parent=11 // pred_check
        %p305 = pneg %p211
      $region26: #{bottleneck_forward.1} parent=11 // pred_check_branch
        %307 = sbr.rel (%p305) target = $region28
      $region27: #{bottleneck_forward.1} parent=11 // pred_region
        _
      $region28: #{bottleneck_forward.1} parent=11 // pred_fallthru
        _
      // Predicated region
      $region29: #{bottleneck_forward.1} parent=11 // pred_check
        %p308 = pneg %p232
      $region30: #{bottleneck_forward.1} parent=11 // pred_check_branch
        %310 = sbr.rel (%p308) target = $region32
      $region31: #{bottleneck_forward.1} parent=11 // pred_region
        _
      $region32: #{bottleneck_forward.1} parent=11 // pred_fallthru
        _
      // Predicated region
      $region33: #{bottleneck_forward.1} parent=11 // pred_check
        %p311 = pneg %p253
      $region34: #{bottleneck_forward.1} parent=11 // pred_check_branch
        %313 = sbr.rel (%p311) target = $region36
      $region35: #{bottleneck_forward.1} parent=11 // pred_region
        _
      $region36: #{bottleneck_forward.1} parent=11 // pred_fallthru
        _
    $region12: #{bottleneck_forward.1} parent=5 // pred_fallthru
      _
    %p314 = scmp.lt.s32.totalorder %s15, 4
    // Predicated region
    $region37: #{bottleneck_forward.1} parent=5 // pred_check
      %p315 = pneg %p314
    $region38: #{bottleneck_forward.1} parent=5 // pred_check_branch
      %317 = sbr.rel (%p315) target = $region40
    $region39: #{bottleneck_forward.1} parent=5 // pred_region
      // Predicated region
      $region41: #{bottleneck_forward.1} parent=39 // pred_check
        %p318 = pneg %p49
      $region42: #{bottleneck_forward.1} parent=39 // pred_check_branch
        %320 = sbr.rel (%p318) target = $region44
      $region43: #{bottleneck_forward.1} parent=39 // pred_region
        %s321 = smul.u32 8, %s23
        %p322 = scmp.lt.s32.totalorder %s22, 1
        %s323 = scalar_select %p322, %s22, 1
        %p324 = scmp.lt.s32.totalorder %s321, 15
        %s325 = scalar_select %p324, %s321, 15
        %s326 = smul.addr %s325, 2
        %s327 = smul.addr %s323, 32
        %s328 = sadd.s32 %s326, %s327
        %s329 = smul.addr %s328, 4
        %s330 = scalar_lea.vmem %s0, %s329
        %s331 = smul.u32 8, %s23
      $region44: #{bottleneck_forward.1} parent=39 // pred_fallthru
        _
      // Predicated region
      $region45: #{bottleneck_forward.1} parent=39 // pred_check
        %p332 = pneg %p85
      $region46: #{bottleneck_forward.1} parent=39 // pred_check_branch
        %334 = sbr.rel (%p332) target = $region48
      $region47: #{bottleneck_forward.1} parent=39 // pred_region
        %s335 = smul.u32 %s23, 8
        %s336 = ssub.s32 %s335, 1
        %p337 = scmp.gt.s32.totalorder %s336, 0
        %s338 = scalar_select %p337, %s336, 0
        %p339 = scmp.lt.s32.totalorder %s22, 1
        %s340 = scalar_select %p339, %s22, 1
        %p341 = scmp.lt.s32.totalorder %s338, 15
        %s342 = scalar_select %p341, %s338, 15
        %s343 = smul.addr %s342, 2
        %s344 = smul.addr %s340, 32
        %s345 = sadd.s32 %s343, %s344
        %s346 = smul.addr %s345, 4
        %s347 = scalar_lea.vmem %s1, %s346
        %s348 = smul.u32 %s23, 8
        %s349 = ssub.s32 %s348, 1
        %p350 = scmp.gt.s32.totalorder %s349, 0
        %s351 = scalar_select %p350, %s349, 0
      $region48: #{bottleneck_forward.1} parent=39 // pred_fallthru
        _
      // Predicated region
      $region49: #{bottleneck_forward.1} parent=39 // pred_check
        %p352 = pneg %p121
      $region50: #{bottleneck_forward.1} parent=39 // pred_check_branch
        %354 = sbr.rel (%p352) target = $region52
      $region51: #{bottleneck_forward.1} parent=39 // pred_region
        %s355 = smul.u32 %s23, 8
        %s356 = sadd.s32 %s355, 8
        %p357 = scmp.lt.s32.totalorder %s356, 15
        %s358 = scalar_select %p357, %s356, 15
        %p359 = scmp.lt.s32.totalorder %s22, 1
        %s360 = scalar_select %p359, %s22, 1
        %p361 = scmp.lt.s32.totalorder %s358, 15
        %s362 = scalar_select %p361, %s358, 15
        %s363 = smul.addr %s362, 2
        %s364 = smul.addr %s360, 32
        %s365 = sadd.s32 %s363, %s364
        %s366 = smul.addr %s365, 4
        %s367 = scalar_lea.vmem %s2, %s366
        %s368 = smul.u32 %s23, 8
        %s369 = sadd.s32 %s368, 8
        %p370 = scmp.lt.s32.totalorder %s369, 15
        %s371 = scalar_select %p370, %s369, 15
      $region52: #{bottleneck_forward.1} parent=39 // pred_fallthru
        _
    $region40: #{bottleneck_forward.1} parent=5 // pred_fallthru
      _
    %p372 = scmp.le.s32.totalorder 1, %s15
    %p373 = scmp.lt.s32.totalorder %s15, 5
    %p374 = pnand %p372, %p373
    %p375 = pneg %p374
    // Predicated region
    $region53: #{bottleneck_forward.1} parent=5 // pred_check
      _
    $region54: #{bottleneck_forward.1} parent=5 // pred_check_branch
      %377 = sbr.rel (%p374) target = $region56
    $region55: #{bottleneck_forward.1} parent=5 // pred_region
      %s378 = ssub.s32 %s15, 1
      %s379 = smul.u32 8, %s25
      %p380 = scmp.lt.s32.totalorder %s24, 1
      %s381 = scalar_select %p380, %s24, 1
      %p382 = scmp.lt.s32.totalorder %s379, 15
      %s383 = scalar_select %p382, %s379, 15
      %s384 = smul.addr %s383, 2
      %s385 = smul.addr %s381, 32
      %s386 = sadd.s32 %s384, %s385
      %s387 = smul.addr %s386, 4
      %s388 = scalar_lea.vmem %s0, %s387
      %p389 = pneg %p55
      %p390 = pneg %p52
      %s391 = smul.u32 %s25, 8
      %s392 = ssub.s32 %s391, 1
      %p393 = scmp.gt.s32.totalorder %s392, 0
      %s394 = scalar_select %p393, %s392, 0
      %p395 = scmp.lt.s32.totalorder %s24, 1
      %s396 = scalar_select %p395, %s24, 1
      %p397 = scmp.lt.s32.totalorder %s394, 15
      %s398 = scalar_select %p397, %s394, 15
      %s399 = smul.addr %s398, 2
      %s400 = smul.addr %s396, 32
      %s401 = sadd.s32 %s399, %s400
      %s402 = smul.addr %s401, 4
      %s403 = scalar_lea.vmem %s1, %s402
      %p404 = pneg %p91
      %p405 = pneg %p88
      %s406 = smul.u32 %s25, 8
      %s407 = sadd.s32 %s406, 8
      %p408 = scmp.lt.s32.totalorder %s407, 15
      %s409 = scalar_select %p408, %s407, 15
      %p410 = scmp.lt.s32.totalorder %s24, 1
      %s411 = scalar_select %p410, %s24, 1
      %p412 = scmp.lt.s32.totalorder %s409, 15
      %s413 = scalar_select %p412, %s409, 15
      %s414 = smul.addr %s413, 2
      %s415 = smul.addr %s411, 32
      %s416 = sadd.s32 %s414, %s415
      %s417 = smul.addr %s416, 4
      %s418 = scalar_lea.vmem %s2, %s417
      %p419 = pneg %p127
      %p420 = pneg %p124
      %p421 = pneg %p148
      %p422 = pneg %p145
      %p423 = pneg %p169
      %p424 = pneg %p166
      %p425 = pneg %p190
      %p426 = pneg %p187
      %p427 = pneg %p211
      %p428 = pneg %p208
      %p429 = pneg %p232
      %p430 = pneg %p229
      %p431 = pneg %p253
      %p432 = pneg %p250
      %p433 = pneg %p281
      %p434 = pneg %p278
      %s435 = smul.u32 8, %s25
      %p436 = scmp.lt.s32.totalorder %s24, 1
      %s437 = scalar_select %p436, %s24, 1
      %p438 = scmp.lt.s32.totalorder %s435, 15
      %s439 = scalar_select %p438, %s435, 15
      %s440 = smul.addr %s439, 2
      %s441 = smul.addr %s437, 32
      %s442 = sadd.s32 %s440, %s441
      %s443 = smul.addr %s442, 4
      %s444 = scalar_lea.vmem %s9, %s443
      %s445 = smul.u32 8, %s25
      %p446 = scmp.lt.s32.totalorder %s24, 1
      %s447 = scalar_select %p446, %s24, 1
      %p448 = scmp.lt.s32.totalorder %s445, 15
      %s449 = scalar_select %p448, %s445, 15
      %s450 = smul.addr %s449, 2
      %s451 = smul.addr %s447, 32
      %s452 = sadd.s32 %s450, %s451
      %s453 = smul.addr %s452, 4
      %s454 = scalar_lea.vmem %s0, %s453
      %s455 = smul.u32 8, %s25
      %s456 = smul.u32 %s25, 8
      %s457 = ssub.s32 %s456, 1
      %p458 = scmp.gt.s32.totalorder %s457, 0
      %s459 = scalar_select %p458, %s457, 0
      %p460 = scmp.lt.s32.totalorder %s24, 1
      %s461 = scalar_select %p460, %s24, 1
      %p462 = scmp.lt.s32.totalorder %s459, 15
      %s463 = scalar_select %p462, %s459, 15
      %s464 = smul.addr %s463, 2
      %s465 = smul.addr %s461, 32
      %s466 = sadd.s32 %s464, %s465
      %s467 = smul.addr %s466, 4
      %s468 = scalar_lea.vmem %s1, %s467
      %s469 = smul.u32 %s25, 8
      %s470 = ssub.s32 %s469, 1
      %p471 = scmp.gt.s32.totalorder %s470, 0
      %s472 = scalar_select %p471, %s470, 0
      %s473 = smul.u32 %s25, 8
      %s474 = sadd.s32 %s473, 8
      %p475 = scmp.lt.s32.totalorder %s474, 15
      %s476 = scalar_select %p475, %s474, 15
      %p477 = scmp.lt.s32.totalorder %s24, 1
      %s478 = scalar_select %p477, %s24, 1
      %p479 = scmp.lt.s32.totalorder %s476, 15
      %s480 = scalar_select %p479, %s476, 15
      %s481 = smul.addr %s480, 2
      %s482 = smul.addr %s478, 32
      %s483 = sadd.s32 %s481, %s482
      %s484 = smul.addr %s483, 4
      %s485 = scalar_lea.vmem %s2, %s484
      %s486 = smul.u32 %s25, 8
      %s487 = sadd.s32 %s486, 8
      %p488 = scmp.lt.s32.totalorder %s487, 15
      %s489 = scalar_select %p488, %s487, 15
      %s490 = smul.u32 8, %s25
      %p491 = scmp.lt.s32.totalorder %s24, 1
      %s492 = scalar_select %p491, %s24, 1
      %p493 = scmp.lt.s32.totalorder %s490, 15
      %s494 = scalar_select %p493, %s490, 15
      %s495 = smul.addr %s494, 2
      %s496 = smul.addr %s492, 32
      %s497 = sadd.s32 %s495, %s496
      %s498 = smul.addr %s497, 4
      %s499 = scalar_lea.vmem %s9, %s498
      %s500 = smul.u32 8, %s25
      %v502 = vld [vmem:[%s468] sm:$0xf]
      %v503 = vld [vmem:[%s468 + $0x4] sm:$0xf]
      %v504 = vld [vmem:[%s454] sm:$0xf]
      %v505 = vld [vmem:[%s454 + $0x4] sm:$0xf]
      %v506 = vld [vmem:[%s454 + $0x8] sm:$0xf]
      %v507 = vld [vmem:[%s454 + $0xc] sm:$0xf]
      %v508 = vld [vmem:[%s454 + $0x10] sm:$0xf]
      %v509 = vld [vmem:[%s454 + $0x14] sm:$0xf]
      %v510 = vld [vmem:[%s454 + $0x18] sm:$0xf]
      %v511 = vld [vmem:[%s454 + $0x1c] sm:$0xf]
      %v512 = vld [vmem:[%s454 + $0x20] sm:$0xf]
      %v513 = vld [vmem:[%s454 + $0x24] sm:$0xf]
      %v514 = vld [vmem:[%s454 + $0x28] sm:$0xf]
      %v515 = vld [vmem:[%s454 + $0x2c] sm:$0xf]
      %v516 = vld [vmem:[%s454 + $0x30] sm:$0xf]
      %v517 = vld [vmem:[%s454 + $0x34] sm:$0xf]
      %v518 = vld [vmem:[%s454 + $0x38] sm:$0xf]
      %v519 = vld [vmem:[%s454 + $0x3c] sm:$0xf]
      %v520 = vld [vmem:[%s485] sm:$0xf]
      %v521 = vld [vmem:[%s485 + $0x4] sm:$0xf]
      %v522 = vld [vmem:[%s3] sm:$0xf]
      %v523 = vld [vmem:[%s3 + $0x4] sm:$0xf]
      %v524 = vld [vmem:[%s3 + $0x8] sm:$0xf]
      %v525 = vld [vmem:[%s3 + $0xc] sm:$0xf]
      %v526 = vld [vmem:[%s3 + $0x10] sm:$0xf]
      %v527 = vld [vmem:[%s3 + $0x14] sm:$0xf]
      %v528 = vld [vmem:[%s3 + $0x18] sm:$0xf]
      %v529 = vld [vmem:[%s3 + $0x1c] sm:$0xf]
      %v530 = vld [vmem:[%s3 + $0x20] sm:$0xf]
      %v531 = vld [vmem:[%s3 + $0x24] sm:$0xf]
      %v532 = vld [vmem:[%s3 + $0x28] sm:$0xf]
      %v533 = vld [vmem:[%s3 + $0x2c] sm:$0xf]
      %v534 = vld [vmem:[%s3 + $0x30] sm:$0xf]
      %v535 = vld [vmem:[%s3 + $0x34] sm:$0xf]
      %v536 = vld [vmem:[%s3 + $0x38] sm:$0xf]
      %v537 = vld [vmem:[%s3 + $0x3c] sm:$0xf]
      %v538 = vld [vmem:[%s4] sm:$0x1]
      %v540 = vlaneseq
      %v541 = vshrl.u32 %v540, 7
      %v542 = vsub.s32 0, %v541
      %v543 = vrot.slane %v538, %v542
      %v565 = vunpack.c.l.b16 %v502
      %v566 = vunpack.c.l.b16 %v503
      %v567 = vunpack.c.l.b16 %v504
      %v568 = vunpack.c.l.b16 %v505
      %v569 = vunpack.c.l.b16 %v506
      %v570 = vunpack.c.l.b16 %v507
      %v571 = vunpack.c.l.b16 %v508
      %v572 = vunpack.c.l.b16 %v509
      %v573 = vunpack.c.l.b16 %v510
      %v574 = vunpack.c.l.b16 %v511
      %v575 = vunpack.c.l.b16 %v512
      %v576 = vunpack.c.l.b16 %v513
      %v577 = vunpack.c.l.b16 %v514
      %v578 = vunpack.c.l.b16 %v515
      %v579 = vunpack.c.l.b16 %v516
      %v580 = vunpack.c.l.b16 %v517
      %v581 = vunpack.c.l.b16 %v518
      %v582 = vunpack.c.l.b16 %v519
      %v583 = vunpack.c.l.b16 %v520
      %v584 = vunpack.c.l.b16 %v521
      %v585 = vpack.c.b16 %v566, %v565
      %v586 = vpack.c.b16 %v568, %v567
      %v587 = vpack.c.b16 %v570, %v569
      %v588 = vpack.c.b16 %v572, %v571
      %v589 = vpack.c.b16 %v574, %v573
      %v590 = vpack.c.b16 %v576, %v575
      %v591 = vpack.c.b16 %v578, %v577
      %v592 = vpack.c.b16 %v580, %v579
      %v593 = vpack.c.b16 %v582, %v581
      %v594 = vpack.c.b16 %v584, %v583
      %v621 = vunpack.c.l.b16 %v522
      %v622 = vunpack.c.l.b16 %v523
      %v623 = vunpack.c.l.b16 %v524
      %v624 = vunpack.c.l.b16 %v525
      %v625 = vunpack.c.l.b16 %v526
      %v626 = vunpack.c.l.b16 %v527
      %v627 = vunpack.c.l.b16 %v528
      %v628 = vunpack.c.l.b16 %v529
      %v629 = vunpack.c.l.b16 %v530
      %v630 = vunpack.c.l.b16 %v531
      %v631 = vunpack.c.l.b16 %v532
      %v632 = vunpack.c.l.b16 %v533
      %v633 = vunpack.c.l.b16 %v534
      %v634 = vunpack.c.l.b16 %v535
      %v635 = vunpack.c.l.b16 %v536
      %v636 = vunpack.c.l.b16 %v537
      %v637 = vpack.c.b16 %v622, %v621
      %v638 = vpack.c.b16 %v624, %v623
      %v639 = vpack.c.b16 %v626, %v625
      %v640 = vpack.c.b16 %v628, %v627
      %v641 = vpack.c.b16 %v630, %v629
      %v642 = vpack.c.b16 %v632, %v631
      %v643 = vpack.c.b16 %v634, %v633
      %v644 = vpack.c.b16 %v636, %v635
      %653 = vmatprep.subr.bf16.mxu0 0
      %654 = vmatpush1.bf16.msra.mxu0 %v637
      %655 = vmatprep.subr.bf16.mxu0 0
      %656 = vmatpush1.bf16.msra.mxu0 %v638
      %657 = vmatprep.subr.bf16.mxu0 0
      %658 = vmatpush1.bf16.msra.mxu0 %v639
      %659 = vmatprep.subr.bf16.mxu0 0
      %660 = vmatpush1.bf16.msra.mxu0 %v640
      %661 = vmatprep.subr.bf16.mxu0 0
      %662 = vmatpush1.bf16.msra.mxu0 %v641
      %663 = vmatprep.subr.bf16.mxu0 0
      %664 = vmatpush1.bf16.msra.mxu0 %v642
      %665 = vmatprep.subr.bf16.mxu0 0
      %666 = vmatpush1.bf16.msra.mxu0 %v643
      %667 = vmatprep.subr.bf16.mxu0 0
      %668 = vmatpush1.bf16.msra.mxu0 %v644
      %669 = vmatprep.subr.bf16.mxu0 0
      %670 = vmatpush1.bf16.msra.mxu0 0
      %671 = vmatprep.subr.bf16.mxu0 0
      %672 = vmatpush1.bf16.msra.mxu0 0
      %673 = vmatprep.subr.bf16.mxu0 0
      %674 = vmatpush1.bf16.msra.mxu0 0
      %675 = vmatprep.subr.bf16.mxu0 0
      %676 = vmatpush1.bf16.msra.mxu0 0
      %677 = vmatprep.subr.bf16.mxu0 0
      %678 = vmatpush1.bf16.msra.mxu0 0
      %679 = vmatprep.subr.bf16.mxu0 0
      %680 = vmatpush1.bf16.msra.mxu0 0
      %681 = vmatprep.subr.bf16.mxu0 0
      %682 = vmatpush1.bf16.msra.mxu0 0
      %683 = vmatprep.subr.bf16.mxu0 0
      %684 = vmatpush1.bf16.msra.mxu0 0
      %685 = vmatprep.mubr.bf16.mxu0 0
      %686 = vmatmul.mubr.bf16.gmra.mrb[0].mxu0 %v585
      %v687 = vpop.f32.mrb[0].mxu0
      %v688 = vadd.f32 %v543, %v687
      %v689 = vpop.f32.mrb[0].mxu0
      %v690 = vpop.f32.mrb[0].mxu0
      %v691 = vadd.f32 %v543, %v690
      %v692 = vpop.f32.mrb[0].mxu0
      %693 = vmatprep.mubr.bf16.mxu0 0
      %694 = vmatmul.mubr.bf16.gmra.mrb[0].mxu0 %v586
      %v695 = vpop.f32.mrb[0].mxu0
      %v696 = vadd.f32 %v543, %v695
      %v697 = vpop.f32.mrb[0].mxu0
      %v698 = vpop.f32.mrb[0].mxu0
      %v699 = vadd.f32 %v543, %v698
      %v700 = vpop.f32.mrb[0].mxu0
      %701 = vmatprep.mubr.bf16.mxu0 0
      %702 = vmatmul.mubr.bf16.gmra.mrb[0].mxu0 %v587
      %v703 = vpop.f32.mrb[0].mxu0
      %v704 = vadd.f32 %v543, %v703
      %v705 = vpop.f32.mrb[0].mxu0
      %v706 = vpop.f32.mrb[0].mxu0
      %v707 = vadd.f32 %v543, %v706
      %v708 = vpop.f32.mrb[0].mxu0
      %709 = vmatprep.mubr.bf16.mxu0 0
      %710 = vmatmul.mubr.bf16.gmra.mrb[0].mxu0 %v588
      %v711 = vpop.f32.mrb[0].mxu0
      %v712 = vadd.f32 %v543, %v711
      %v713 = vpop.f32.mrb[0].mxu0
      %v714 = vpop.f32.mrb[0].mxu0
      %v715 = vadd.f32 %v543, %v714
      %v716 = vpop.f32.mrb[0].mxu0
      %717 = vmatprep.mubr.bf16.mxu0 0
      %718 = vmatmul.mubr.bf16.gmra.mrb[0].mxu0 %v589
      %v719 = vpop.f32.mrb[0].mxu0
      %v720 = vadd.f32 %v543, %v719
      %v721 = vpop.f32.mrb[0].mxu0
      %v722 = vpop.f32.mrb[0].mxu0
      %v723 = vadd.f32 %v543, %v722
      %v724 = vpop.f32.mrb[0].mxu0
      %725 = vmatprep.mubr.bf16.mxu0 0
      %726 = vmatmul.mubr.bf16.gmra.mrb[0].mxu0 %v590
      %v727 = vpop.f32.mrb[0].mxu0
      %v728 = vadd.f32 %v543, %v727
      %v729 = vpop.f32.mrb[0].mxu0
      %v730 = vpop.f32.mrb[0].mxu0
      %v731 = vadd.f32 %v543, %v730
      %v732 = vpop.f32.mrb[0].mxu0
      %733 = vmatprep.mubr.bf16.mxu0 0
      %734 = vmatmul.mubr.bf16.gmra.mrb[0].mxu0 %v591
      %v735 = vpop.f32.mrb[0].mxu0
      %v736 = vadd.f32 %v543, %v735
      %v737 = vpop.f32.mrb[0].mxu0
      %v738 = vpop.f32.mrb[0].mxu0
      %v739 = vadd.f32 %v543, %v738
      %v740 = vpop.f32.mrb[0].mxu0
      %741 = vmatprep.mubr.bf16.mxu0 0
      %742 = vmatmul.mubr.bf16.gmra.mrb[0].mxu0 %v592
      %v743 = vpop.f32.mrb[0].mxu0
      %v744 = vadd.f32 %v543, %v743
      %v745 = vpop.f32.mrb[0].mxu0
      %v746 = vpop.f32.mrb[0].mxu0
      %v747 = vadd.f32 %v543, %v746
      %v748 = vpop.f32.mrb[0].mxu0
      %749 = vmatprep.mubr.bf16.mxu0 0
      %750 = vmatmul.mubr.bf16.gmra.mrb[0].mxu0 %v593
      %v751 = vpop.f32.mrb[0].mxu0
      %v752 = vadd.f32 %v543, %v751
      %v753 = vpop.f32.mrb[0].mxu0
      %v754 = vpop.f32.mrb[0].mxu0
      %v755 = vadd.f32 %v543, %v754
      %v756 = vpop.f32.mrb[0].mxu0
      %757 = vmatprep.mubr.bf16.mxu0 0
      %758 = vmatmul.mubr.bf16.gmra.mrb[0].mxu0 %v594
      %v759 = vpop.f32.mrb[0].mxu0
      %v760 = vadd.f32 %v543, %v759
      %v761 = vpop.f32.mrb[0].mxu0
      %v762 = vpop.f32.mrb[0].mxu0
      %v763 = vadd.f32 %v543, %v762
      %v764 = vpop.f32.mrb[0].mxu0
      %765 = vdwg.mxu0
      %v766 = vmax.f32 %v688, 0.0
      %v767 = vmax.f32 %v691, 0.0
      %v768 = vmax.f32 %v696, 0.0
      %v769 = vmax.f32 %v699, 0.0
      %v770 = vmax.f32 %v704, 0.0
      %v771 = vmax.f32 %v707, 0.0
      %v772 = vmax.f32 %v712, 0.0
      %v773 = vmax.f32 %v715, 0.0
      %v774 = vmax.f32 %v720, 0.0
      %v775 = vmax.f32 %v723, 0.0
      %v776 = vmax.f32 %v728, 0.0
      %v777 = vmax.f32 %v731, 0.0
      %v778 = vmax.f32 %v736, 0.0
      %v779 = vmax.f32 %v739, 0.0
      %v780 = vmax.f32 %v744, 0.0
      %v781 = vmax.f32 %v747, 0.0
      %v782 = vmax.f32 %v752, 0.0
      %v783 = vmax.f32 %v755, 0.0
      %v784 = vmax.f32 %v760, 0.0
      %v785 = vmax.f32 %v763, 0.0
      %786 = vst [vmem:[#allocation2] sm:$0xf] 0
      %787 = vst [vmem:[#allocation2 + $0x10] sm:$0xf] 0
      %788 = vst [vmem:[#allocation2 + $0x20] sm:$0xf] 0
      %789 = vst [vmem:[#allocation2 + $0x30] sm:$0xf] 0
      %790 = vst [vmem:[#allocation2 + $0x40] sm:$0xf] 0
      %791 = vst [vmem:[#allocation2 + $0x50] sm:$0xf] 0
      %792 = vst [vmem:[#allocation2 + $0x60] sm:$0xf] 0
      %793 = vst [vmem:[#allocation2 + $0x70] sm:$0xf] 0
      %794 = vst [vmem:[#allocation2 + $0x80] sm:$0xf] 0
      %795 = vst [vmem:[#allocation2 + $0x90] sm:$0xf] 0
      %796 = vst [vmem:[#allocation2 + $0x8] sm:$0xf0] 0
      %797 = vst [vmem:[#allocation2 + $0x18] sm:$0xf0] 0
      %798 = vst [vmem:[#allocation2 + $0x28] sm:$0xf0] 0
      %799 = vst [vmem:[#allocation2 + $0x38] sm:$0xf0] 0
      %800 = vst [vmem:[#allocation2 + $0x48] sm:$0xf0] 0
      %801 = vst [vmem:[#allocation2 + $0x58] sm:$0xf0] 0
      %802 = vst [vmem:[#allocation2 + $0x68] sm:$0xf0] 0
      %803 = vst [vmem:[#allocation2 + $0x78] sm:$0xf0] 0
      %804 = vst [vmem:[#allocation2 + $0x88] sm:$0xf0] 0
      %805 = vst [vmem:[#allocation2 + $0x98] sm:$0xf0] 0
      %v806 = vpack.c.bf16 %v767, %v766
      %v807 = vpack.c.bf16 %v769, %v768
      %v808 = vpack.c.bf16 %v771, %v770
      %v809 = vpack.c.bf16 %v773, %v772
      %v810 = vpack.c.bf16 %v775, %v774
      %v811 = vpack.c.bf16 %v777, %v776
      %v812 = vpack.c.bf16 %v779, %v778
      %v813 = vpack.c.bf16 %v781, %v780
      %v814 = vpack.c.bf16 %v783, %v782
      %v815 = vpack.c.bf16 %v785, %v784
      %v826 = vrot.slane %v806, 4
      %v827 = vrot.slane %v807, 4
      %v828 = vrot.slane %v808, 4
      %v829 = vrot.slane %v809, 4
      %v830 = vrot.slane %v810, 4
      %v831 = vrot.slane %v811, 4
      %v832 = vrot.slane %v812, 4
      %v833 = vrot.slane %v813, 4
      %v834 = vrot.slane %v814, 4
      %v835 = vrot.slane %v815, 4
      %846 = vst [vmem:[#allocation2] sm:$0xf0] %v826
      %847 = vst [vmem:[#allocation2 + $0x8] sm:$0xf] %v826
      %848 = vst [vmem:[#allocation2 + $0x10] sm:$0xf0] %v827
      %849 = vst [vmem:[#allocation2 + $0x18] sm:$0xf] %v827
      %850 = vst [vmem:[#allocation2 + $0x20] sm:$0xf0] %v828
      %851 = vst [vmem:[#allocation2 + $0x28] sm:$0xf] %v828
      %852 = vst [vmem:[#allocation2 + $0x30] sm:$0xf0] %v829
      %853 = vst [vmem:[#allocation2 + $0x38] sm:$0xf] %v829
      %854 = vst [vmem:[#allocation2 + $0x40] sm:$0xf0] %v830
      %855 = vst [vmem:[#allocation2 + $0x48] sm:$0xf] %v830
      %856 = vst [vmem:[#allocation2 + $0x50] sm:$0xf0] %v831
      %857 = vst [vmem:[#allocation2 + $0x58] sm:$0xf] %v831
      %858 = vst [vmem:[#allocation2 + $0x60] sm:$0xf0] %v832
      %859 = vst [vmem:[#allocation2 + $0x68] sm:$0xf] %v832
      %860 = vst [vmem:[#allocation2 + $0x70] sm:$0xf0] %v833
      %861 = vst [vmem:[#allocation2 + $0x78] sm:$0xf] %v833
      %862 = vst [vmem:[#allocation2 + $0x80] sm:$0xf0] %v834
      %863 = vst [vmem:[#allocation2 + $0x88] sm:$0xf] %v834
      %864 = vst [vmem:[#allocation2 + $0x90] sm:$0xf0] %v835
      %865 = vst [vmem:[#allocation2 + $0x98] sm:$0xf] %v835
      %p866 = scmp.eq.s32.totalorder %s25, 0
      // Predicated region
      $region57: #{bottleneck_forward.1} parent=55 // pred_check
        %p867 = pneg %p866
      $region58: #{bottleneck_forward.1} parent=55 // pred_check_branch
        %869 = sbr.rel (%p867) target = $region60
      $region59: #{bottleneck_forward.1} parent=55 // pred_region
        %870 = vst [vmem:[#allocation2] sm:$0xf0] 0
        %871 = vst [vmem:[#allocation2 + $0x8] sm:$0xf] 0
      $region60: #{bottleneck_forward.1} parent=55 // pred_fallthru
        _
      %p872 = scmp.eq.s32.totalorder %s25, 1
      // Predicated region
      $region61: #{bottleneck_forward.1} parent=55 // pred_check
        %p873 = pneg %p872
      $region62: #{bottleneck_forward.1} parent=55 // pred_check_branch
        %875 = sbr.rel (%p873) target = $region64
      $region63: #{bottleneck_forward.1} parent=55 // pred_region
        %s876 = scalar_lea.vmem [#allocation2], 144
        %877 = vst [vmem:[%s876] sm:$0xf0] 0
        %878 = vst [vmem:[%s876 + $0x8] sm:$0xf] 0
      $region64: #{bottleneck_forward.1} parent=55 // pred_fallthru
        _
      %v879 = vld [vmem:[#allocation2] sm:$0xff]
      %v880 = vld [vmem:[#allocation2 + $0x8] sm:$0xff]
      %v881 = vld [vmem:[#allocation2 + $0x10] sm:$0xff]
      %v882 = vld [vmem:[#allocation2 + $0x18] sm:$0xff]
      %v883 = vld [vmem:[#allocation2 + $0x20] sm:$0xff]
      %v884 = vld [vmem:[#allocation2 + $0x28] sm:$0xff]
      %v885 = vld [vmem:[#allocation2 + $0x30] sm:$0xff]
      %v886 = vld [vmem:[#allocation2 + $0x38] sm:$0xff]
      %v887 = vld [vmem:[#allocation2 + $0x40] sm:$0xff]
      %v888 = vld [vmem:[#allocation2 + $0x48] sm:$0xff]
      %v889 = vld [vmem:[#allocation2 + $0x50] sm:$0xff]
      %v890 = vld [vmem:[#allocation2 + $0x58] sm:$0xff]
      %v891 = vld [vmem:[#allocation2 + $0x60] sm:$0xff]
      %v892 = vld [vmem:[#allocation2 + $0x68] sm:$0xff]
      %v893 = vld [vmem:[#allocation2 + $0x70] sm:$0xff]
      %v894 = vld [vmem:[#allocation2 + $0x78] sm:$0xff]
      %vm895 = vsmask.f32 4352
      %v897 = vshrl.u32 %v879, 16
      %v899 = vrot.slane %v897, 3
      %v900 = vshll.u32 %v879, 16
      %v902 = vrot.slane %v900, 4
      %v903 = vor.u32 %v899, %v902
      %v905 = vshrl.u32 %v880, 16
      %v907 = vrot.slane %v905, 3
      %v908 = vshll.u32 %v880, 16
      %v910 = vrot.slane %v908, 4
      %v911 = vor.u32 %v907, %v910
      %v912 = vsel %vm895, %v903, %v911
      %v914 = vshrl.u32 %v881, 16
      %v916 = vrot.slane %v914, 3
      %v917 = vshll.u32 %v881, 16
      %v919 = vrot.slane %v917, 4
      %v920 = vor.u32 %v916, %v919
      %v922 = vshrl.u32 %v882, 16
      %v924 = vrot.slane %v922, 3
      %v925 = vshll.u32 %v882, 16
      %v927 = vrot.slane %v925, 4
      %v928 = vor.u32 %v924, %v927
      %v929 = vsel %vm895, %v920, %v928
      %v931 = vshrl.u32 %v883, 16
      %v933 = vrot.slane %v931, 3
      %v934 = vshll.u32 %v883, 16
      %v936 = vrot.slane %v934, 4
      %v937 = vor.u32 %v933, %v936
      %v939 = vshrl.u32 %v884, 16
      %v941 = vrot.slane %v939, 3
      %v942 = vshll.u32 %v884, 16
      %v944 = vrot.slane %v942, 4
      %v945 = vor.u32 %v941, %v944
      %v946 = vsel %vm895, %v937, %v945
      %v948 = vshrl.u32 %v885, 16
      %v950 = vrot.slane %v948, 3
      %v951 = vshll.u32 %v885, 16
      %v953 = vrot.slane %v951, 4
      %v954 = vor.u32 %v950, %v953
      %v956 = vshrl.u32 %v886, 16
      %v958 = vrot.slane %v956, 3
      %v959 = vshll.u32 %v886, 16
      %v961 = vrot.slane %v959, 4
      %v962 = vor.u32 %v958, %v961
      %v963 = vsel %vm895, %v954, %v962
      %v965 = vshrl.u32 %v887, 16
      %v967 = vrot.slane %v965, 3
      %v968 = vshll.u32 %v887, 16
      %v970 = vrot.slane %v968, 4
      %v971 = vor.u32 %v967, %v970
      %v973 = vshrl.u32 %v888, 16
      %v975 = vrot.slane %v973, 3
      %v976 = vshll.u32 %v888, 16
      %v978 = vrot.slane %v976, 4
      %v979 = vor.u32 %v975, %v978
      %v980 = vsel %vm895, %v971, %v979
      %v982 = vshrl.u32 %v889, 16
      %v984 = vrot.slane %v982, 3
      %v985 = vshll.u32 %v889, 16
      %v987 = vrot.slane %v985, 4
      %v988 = vor.u32 %v984, %v987
      %v990 = vshrl.u32 %v890, 16
      %v992 = vrot.slane %v990, 3
      %v993 = vshll.u32 %v890, 16
      %v995 = vrot.slane %v993, 4
      %v996 = vor.u32 %v992, %v995
      %v997 = vsel %vm895, %v988, %v996
      %v999 = vshrl.u32 %v891, 16
      %v1001 = vrot.slane %v999, 3
      %v1002 = vshll.u32 %v891, 16
      %v1004 = vrot.slane %v1002, 4
      %v1005 = vor.u32 %v1001, %v1004
      %v1007 = vshrl.u32 %v892, 16
      %v1009 = vrot.slane %v1007, 3
      %v1010 = vshll.u32 %v892, 16
      %v1012 = vrot.slane %v1010, 4
      %v1013 = vor.u32 %v1009, %v1012
      %v1014 = vsel %vm895, %v1005, %v1013
      %v1016 = vshrl.u32 %v893, 16
      %v1018 = vrot.slane %v1016, 3
      %v1019 = vshll.u32 %v893, 16
      %v1021 = vrot.slane %v1019, 4
      %v1022 = vor.u32 %v1018, %v1021
      %v1024 = vshrl.u32 %v894, 16
      %v1026 = vrot.slane %v1024, 3
      %v1027 = vshll.u32 %v894, 16
      %v1029 = vrot.slane %v1027, 4
      %v1030 = vor.u32 %v1026, %v1029
      %v1031 = vsel %vm895, %v1022, %v1030
      %v1040 = vld [vmem:[%s5] sm:$0xf]
      %v1041 = vld [vmem:[%s5 + $0x4] sm:$0xf]
      %v1042 = vld [vmem:[%s5 + $0x8] sm:$0xf]
      %v1043 = vld [vmem:[%s5 + $0xc] sm:$0xf]
      %v1044 = vld [vmem:[%s5 + $0x10] sm:$0xf]
      %v1045 = vld [vmem:[%s5 + $0x14] sm:$0xf]
      %v1046 = vld [vmem:[%s5 + $0x18] sm:$0xf]
      %v1047 = vld [vmem:[%s5 + $0x1c] sm:$0xf]
      %v1048 = vld [vmem:[%s5 + $0x20] sm:$0xf]
      %v1049 = vld [vmem:[%s5 + $0x24] sm:$0xf]
      %v1050 = vld [vmem:[%s5 + $0x28] sm:$0xf]
      %v1051 = vld [vmem:[%s5 + $0x2c] sm:$0xf]
      %v1052 = vld [vmem:[%s5 + $0x30] sm:$0xf]
      %v1053 = vld [vmem:[%s5 + $0x34] sm:$0xf]
      %v1054 = vld [vmem:[%s5 + $0x38] sm:$0xf]
      %v1055 = vld [vmem:[%s5 + $0x3c] sm:$0xf]
      %vm1072 = vcmask 1043456
      %v1073 = vrot.slane %v879, 4
      %v1074 = vrot.slane %v880, 4
      %v1075 = vsel %vm1072, %v1073, %v1074
      %v1076 = vrot.slane %v881, 4
      %v1077 = vrot.slane %v882, 4
      %v1078 = vsel %vm1072, %v1076, %v1077
      %v1079 = vrot.slane %v883, 4
      %v1080 = vrot.slane %v884, 4
      %v1081 = vsel %vm1072, %v1079, %v1080
      %v1082 = vrot.slane %v885, 4
      %v1083 = vrot.slane %v886, 4
      %v1084 = vsel %vm1072, %v1082, %v1083
      %v1085 = vrot.slane %v887, 4
      %v1086 = vrot.slane %v888, 4
      %v1087 = vsel %vm1072, %v1085, %v1086
      %v1088 = vrot.slane %v889, 4
      %v1089 = vrot.slane %v890, 4
      %v1090 = vsel %vm1072, %v1088, %v1089
      %v1091 = vrot.slane %v891, 4
      %v1092 = vrot.slane %v892, 4
      %v1093 = vsel %vm1072, %v1091, %v1092
      %v1094 = vrot.slane %v893, 4
      %v1095 = vrot.slane %v894, 4
      %v1096 = vsel %vm1072, %v1094, %v1095
      %s1105 = scalar_lea.vmem %s5, 64
      %v1106 = vld [vmem:[%s1105] sm:$0xf]
      %v1107 = vld [vmem:[%s1105 + $0x4] sm:$0xf]
      %v1108 = vld [vmem:[%s1105 + $0x8] sm:$0xf]
      %v1109 = vld [vmem:[%s1105 + $0xc] sm:$0xf]
      %v1110 = vld [vmem:[%s1105 + $0x10] sm:$0xf]
      %v1111 = vld [vmem:[%s1105 + $0x14] sm:$0xf]
      %v1112 = vld [vmem:[%s1105 + $0x18] sm:$0xf]
      %v1113 = vld [vmem:[%s1105 + $0x1c] sm:$0xf]
      %v1114 = vld [vmem:[%s1105 + $0x20] sm:$0xf]
      %v1115 = vld [vmem:[%s1105 + $0x24] sm:$0xf]
      %v1116 = vld [vmem:[%s1105 + $0x28] sm:$0xf]
      %v1117 = vld [vmem:[%s1105 + $0x2c] sm:$0xf]
      %v1118 = vld [vmem:[%s1105 + $0x30] sm:$0xf]
      %v1119 = vld [vmem:[%s1105 + $0x34] sm:$0xf]
      %v1120 = vld [vmem:[%s1105 + $0x38] sm:$0xf]
      %v1121 = vld [vmem:[%s1105 + $0x3c] sm:$0xf]
      %v1138 = vunpack.c.l.b16 %v1106
      %v1139 = vunpack.c.l.b16 %v1107
      %v1140 = vunpack.c.l.b16 %v1108
      %v1141 = vunpack.c.l.b16 %v1109
      %v1142 = vunpack.c.l.b16 %v1110
      %v1143 = vunpack.c.l.b16 %v1111
      %v1144 = vunpack.c.l.b16 %v1112
      %v1145 = vunpack.c.l.b16 %v1113
      %v1146 = vunpack.c.l.b16 %v1114
      %v1147 = vunpack.c.l.b16 %v1115
      %v1148 = vunpack.c.l.b16 %v1116
      %v1149 = vunpack.c.l.b16 %v1117
      %v1150 = vunpack.c.l.b16 %v1118
      %v1151 = vunpack.c.l.b16 %v1119
      %v1152 = vunpack.c.l.b16 %v1120
      %v1153 = vunpack.c.l.b16 %v1121
      %v1154 = vpack.c.b16 %v1139, %v1138
      %v1155 = vpack.c.b16 %v1141, %v1140
      %v1156 = vpack.c.b16 %v1143, %v1142
      %v1157 = vpack.c.b16 %v1145, %v1144
      %v1158 = vpack.c.b16 %v1147, %v1146
      %v1159 = vpack.c.b16 %v1149, %v1148
      %v1160 = vpack.c.b16 %v1151, %v1150
      %v1161 = vpack.c.b16 %v1153, %v1152
      %1170 = vmatprep.subr.bf16.mxu0 0
      %1171 = vmatpush1.bf16.msra.mxu0 %v1154
      %1172 = vmatprep.subr.bf16.mxu0 0
      %1173 = vmatpush1.bf16.msra.mxu0 %v1155
      %1174 = vmatprep.subr.bf16.mxu0 0
      %1175 = vmatpush1.bf16.msra.mxu0 %v1156
      %1176 = vmatprep.subr.bf16.mxu0 0
      %1177 = vmatpush1.bf16.msra.mxu0 %v1157
      %1178 = vmatprep.subr.bf16.mxu0 0
      %1179 = vmatpush1.bf16.msra.mxu0 %v1158
      %1180 = vmatprep.subr.bf16.mxu0 0
      %1181 = vmatpush1.bf16.msra.mxu0 %v1159
      %1182 = vmatprep.subr.bf16.mxu0 0
      %1183 = vmatpush1.bf16.msra.mxu0 %v1160
      %1184 = vmatprep.subr.bf16.mxu0 0
      %1185 = vmatpush1.bf16.msra.mxu0 %v1161
      %1186 = vmatprep.subr.bf16.mxu0 0
      %1187 = vmatpush1.bf16.msra.mxu0 0
      %1188 = vmatprep.subr.bf16.mxu0 0
      %1189 = vmatpush1.bf16.msra.mxu0 0
      %1190 = vmatprep.subr.bf16.mxu0 0
      %1191 = vmatpush1.bf16.msra.mxu0 0
      %1192 = vmatprep.subr.bf16.mxu0 0
      %1193 = vmatpush1.bf16.msra.mxu0 0
      %1194 = vmatprep.subr.bf16.mxu0 0
      %1195 = vmatpush1.bf16.msra.mxu0 0
      %1196 = vmatprep.subr.bf16.mxu0 0
      %1197 = vmatpush1.bf16.msra.mxu0 0
      %1198 = vmatprep.subr.bf16.mxu0 0
      %1199 = vmatpush1.bf16.msra.mxu0 0
      %1200 = vmatprep.subr.bf16.mxu0 0
      %1201 = vmatpush1.bf16.msra.mxu0 0
      %1202 = vmatprep.mubr.bf16.mxu0 0
      %1203 = vmatmul.mubr.bf16.gmra.mrb[0].mxu0 %v1075
      %v1204 = vpop.f32.mrb[0].mxu0
      %v1205 = vadd.f32 0.0, %v1204
      %v1206 = vpop.f32.mrb[0].mxu0
      %v1207 = vpop.f32.mrb[0].mxu0
      %v1208 = vadd.f32 0.0, %v1207
      %v1209 = vpop.f32.mrb[0].mxu0
      %1210 = vmatprep.mubr.bf16.mxu0 0
      %1211 = vmatmul.mubr.bf16.gmra.mrb[0].mxu0 %v1078
      %v1212 = vpop.f32.mrb[0].mxu0
      %v1213 = vadd.f32 0.0, %v1212
      %v1214 = vpop.f32.mrb[0].mxu0
      %v1215 = vpop.f32.mrb[0].mxu0
      %v1216 = vadd.f32 0.0, %v1215
      %v1217 = vpop.f32.mrb[0].mxu0
      %1218 = vmatprep.mubr.bf16.mxu0 0
      %1219 = vmatmul.mubr.bf16.gmra.mrb[0].mxu0 %v1081
      %v1220 = vpop.f32.mrb[0].mxu0
      %v1221 = vadd.f32 0.0, %v1220
      %v1222 = vpop.f32.mrb[0].mxu0
      %v1223 = vpop.f32.mrb[0].mxu0
      %v1224 = vadd.f32 0.0, %v1223
      %v1225 = vpop.f32.mrb[0].mxu0
      %1226 = vmatprep.mubr.bf16.mxu0 0
      %1227 = vmatmul.mubr.bf16.gmra.mrb[0].mxu0 %v1084
      %v1228 = vpop.f32.mrb[0].mxu0
      %v1229 = vadd.f32 0.0, %v1228
      %v1230 = vpop.f32.mrb[0].mxu0
      %v1231 = vpop.f32.mrb[0].mxu0
      %v1232 = vadd.f32 0.0, %v1231
      %v1233 = vpop.f32.mrb[0].mxu0
      %1234 = vmatprep.mubr.bf16.mxu0 0
      %1235 = vmatmul.mubr.bf16.gmra.mrb[0].mxu0 %v1087
      %v1236 = vpop.f32.mrb[0].mxu0
      %v1237 = vadd.f32 0.0, %v1236
      %v1238 = vpop.f32.mrb[0].mxu0
      %v1239 = vpop.f32.mrb[0].mxu0
      %v1240 = vadd.f32 0.0, %v1239
      %v1241 = vpop.f32.mrb[0].mxu0
      %1242 = vmatprep.mubr.bf16.mxu0 0
      %1243 = vmatmul.mubr.bf16.gmra.mrb[0].mxu0 %v1090
      %v1244 = vpop.f32.mrb[0].mxu0
      %v1245 = vadd.f32 0.0, %v1244
      %v1246 = vpop.f32.mrb[0].mxu0
      %v1247 = vpop.f32.mrb[0].mxu0
      %v1248 = vadd.f32 0.0, %v1247
      %v1249 = vpop.f32.mrb[0].mxu0
      %1250 = vmatprep.mubr.bf16.mxu0 0
      %1251 = vmatmul.mubr.bf16.gmra.mrb[0].mxu0 %v1093
      %v1252 = vpop.f32.mrb[0].mxu0
      %v1253 = vadd.f32 0.0, %v1252
      %v1254 = vpop.f32.mrb[0].mxu0
      %v1255 = vpop.f32.mrb[0].mxu0
      %v1256 = vadd.f32 0.0, %v1255
      %v1257 = vpop.f32.mrb[0].mxu0
      %1258 = vmatprep.mubr.bf16.mxu0 0
      %1259 = vmatmul.mubr.bf16.gmra.mrb[0].mxu0 %v1096
      %v1260 = vpop.f32.mrb[0].mxu0
      %v1261 = vadd.f32 0.0, %v1260
      %v1262 = vpop.f32.mrb[0].mxu0
      %v1263 = vpop.f32.mrb[0].mxu0
      %v1264 = vadd.f32 0.0, %v1263
      %v1265 = vpop.f32.mrb[0].mxu0
      %1266 = vdwg.mxu0
      %v1283 = vunpack.c.l.b16 %v1040
      %v1284 = vunpack.c.l.b16 %v1041
      %v1285 = vunpack.c.l.b16 %v1042
      %v1286 = vunpack.c.l.b16 %v1043
      %v1287 = vunpack.c.l.b16 %v1044
      %v1288 = vunpack.c.l.b16 %v1045
      %v1289 = vunpack.c.l.b16 %v1046
      %v1290 = vunpack.c.l.b16 %v1047
      %v1291 = vunpack.c.l.b16 %v1048
      %v1292 = vunpack.c.l.b16 %v1049
      %v1293 = vunpack.c.l.b16 %v1050
      %v1294 = vunpack.c.l.b16 %v1051
      %v1295 = vunpack.c.l.b16 %v1052
      %v1296 = vunpack.c.l.b16 %v1053
      %v1297 = vunpack.c.l.b16 %v1054
      %v1298 = vunpack.c.l.b16 %v1055
      %v1299 = vpack.c.b16 %v1284, %v1283
      %v1300 = vpack.c.b16 %v1286, %v1285
      %v1301 = vpack.c.b16 %v1288, %v1287
      %v1302 = vpack.c.b16 %v1290, %v1289
      %v1303 = vpack.c.b16 %v1292, %v1291
      %v1304 = vpack.c.b16 %v1294, %v1293
      %v1305 = vpack.c.b16 %v1296, %v1295
      %v1306 = vpack.c.b16 %v1298, %v1297
      %1315 = vmatprep.subr.bf16.mxu0 0
      %1316 = vmatpush1.bf16.msra.mxu0 %v1299
      %1317 = vmatprep.subr.bf16.mxu0 0
      %1318 = vmatpush1.bf16.msra.mxu0 %v1300
      %1319 = vmatprep.subr.bf16.mxu0 0
      %1320 = vmatpush1.bf16.msra.mxu0 %v1301
      %1321 = vmatprep.subr.bf16.mxu0 0
      %1322 = vmatpush1.bf16.msra.mxu0 %v1302
      %1323 = vmatprep.subr.bf16.mxu0 0
      %1324 = vmatpush1.bf16.msra.mxu0 %v1303
      %1325 = vmatprep.subr.bf16.mxu0 0
      %1326 = vmatpush1.bf16.msra.mxu0 %v1304
      %1327 = vmatprep.subr.bf16.mxu0 0
      %1328 = vmatpush1.bf16.msra.mxu0 %v1305
      %1329 = vmatprep.subr.bf16.mxu0 0
      %1330 = vmatpush1.bf16.msra.mxu0 %v1306
      %1331 = vmatprep.subr.bf16.mxu0 0
      %1332 = vmatpush1.bf16.msra.mxu0 0
      %1333 = vmatprep.subr.bf16.mxu0 0
      %1334 = vmatpush1.bf16.msra.mxu0 0
      %1335 = vmatprep.subr.bf16.mxu0 0
      %1336 = vmatpush1.bf16.msra.mxu0 0
      %1337 = vmatprep.subr.bf16.mxu0 0
      %1338 = vmatpush1.bf16.msra.mxu0 0
      %1339 = vmatprep.subr.bf16.mxu0 0
      %1340 = vmatpush1.bf16.msra.mxu0 0
      %1341 = vmatprep.subr.bf16.mxu0 0
      %1342 = vmatpush1.bf16.msra.mxu0 0
      %1343 = vmatprep.subr.bf16.mxu0 0
      %1344 = vmatpush1.bf16.msra.mxu0 0
      %1345 = vmatprep.subr.bf16.mxu0 0
      %1346 = vmatpush1.bf16.msra.mxu0 0
      %1347 = vmatprep.mubr.bf16.mxu0 0
      %1348 = vmatmul.mubr.bf16.gmra.mrb[0].mxu0 %v912
      %v1349 = vpop.f32.mrb[0].mxu0
      %v1350 = vadd.f32 %v1205, %v1349
      %v1351 = vpop.f32.mrb[0].mxu0
      %v1352 = vpop.f32.mrb[0].mxu0
      %v1353 = vadd.f32 %v1208, %v1352
      %v1354 = vpop.f32.mrb[0].mxu0
      %1355 = vmatprep.mubr.bf16.mxu0 0
      %1356 = vmatmul.mubr.bf16.gmra.mrb[0].mxu0 %v929
      %v1357 = vpop.f32.mrb[0].mxu0
      %v1358 = vadd.f32 %v1213, %v1357
      %v1359 = vpop.f32.mrb[0].mxu0
      %v1360 = vpop.f32.mrb[0].mxu0
      %v1361 = vadd.f32 %v1216, %v1360
      %v1362 = vpop.f32.mrb[0].mxu0
      %1363 = vmatprep.mubr.bf16.mxu0 0
      %1364 = vmatmul.mubr.bf16.gmra.mrb[0].mxu0 %v946
      %v1365 = vpop.f32.mrb[0].mxu0
      %v1366 = vadd.f32 %v1221, %v1365
      %v1367 = vpop.f32.mrb[0].mxu0
      %v1368 = vpop.f32.mrb[0].mxu0
      %v1369 = vadd.f32 %v1224, %v1368
      %v1370 = vpop.f32.mrb[0].mxu0
      %1371 = vmatprep.mubr.bf16.mxu0 0
      %1372 = vmatmul.mubr.bf16.gmra.mrb[0].mxu0 %v963
      %v1373 = vpop.f32.mrb[0].mxu0
      %v1374 = vadd.f32 %v1229, %v1373
      %v1375 = vpop.f32.mrb[0].mxu0
      %v1376 = vpop.f32.mrb[0].mxu0
      %v1377 = vadd.f32 %v1232, %v1376
      %v1378 = vpop.f32.mrb[0].mxu0
      %1379 = vmatprep.mubr.bf16.mxu0 0
      %1380 = vmatmul.mubr.bf16.gmra.mrb[0].mxu0 %v980
      %v1381 = vpop.f32.mrb[0].mxu0
      %v1382 = vadd.f32 %v1237, %v1381
      %v1383 = vpop.f32.mrb[0].mxu0
      %v1384 = vpop.f32.mrb[0].mxu0
      %v1385 = vadd.f32 %v1240, %v1384
      %v1386 = vpop.f32.mrb[0].mxu0
      %1387 = vmatprep.mubr.bf16.mxu0 0
      %1388 = vmatmul.mubr.bf16.gmra.mrb[0].mxu0 %v997
      %v1389 = vpop.f32.mrb[0].mxu0
      %v1390 = vadd.f32 %v1245, %v1389
      %v1391 = vpop.f32.mrb[0].mxu0
      %v1392 = vpop.f32.mrb[0].mxu0
      %v1393 = vadd.f32 %v1248, %v1392
      %v1394 = vpop.f32.mrb[0].mxu0
      %1395 = vmatprep.mubr.bf16.mxu0 0
      %1396 = vmatmul.mubr.bf16.gmra.mrb[0].mxu0 %v1014
      %v1397 = vpop.f32.mrb[0].mxu0
      %v1398 = vadd.f32 %v1253, %v1397
      %v1399 = vpop.f32.mrb[0].mxu0
      %v1400 = vpop.f32.mrb[0].mxu0
      %v1401 = vadd.f32 %v1256, %v1400
      %v1402 = vpop.f32.mrb[0].mxu0
      %1403 = vmatprep.mubr.bf16.mxu0 0
      %1404 = vmatmul.mubr.bf16.gmra.mrb[0].mxu0 %v1031
      %v1405 = vpop.f32.mrb[0].mxu0
      %v1406 = vadd.f32 %v1261, %v1405
      %v1407 = vpop.f32.mrb[0].mxu0
      %v1408 = vpop.f32.mrb[0].mxu0
      %v1409 = vadd.f32 %v1264, %v1408
      %v1410 = vpop.f32.mrb[0].mxu0
      %1411 = vdwg.mxu0
      %vm1412 = vsmask.f32 3328
      %v1413 = vrot.slane %v897, 4
      %v1414 = vrot.slane %v900, 5
      %v1415 = vor.u32 %v1413, %v1414
      %v1416 = vrot.slane %v905, 4
      %v1417 = vrot.slane %v908, 5
      %v1418 = vor.u32 %v1416, %v1417
      %v1419 = vsel %vm1412, %v1415, %v1418
      %v1420 = vrot.slane %v914, 4
      %v1421 = vrot.slane %v917, 5
      %v1422 = vor.u32 %v1420, %v1421
      %v1423 = vrot.slane %v922, 4
      %v1424 = vrot.slane %v925, 5
      %v1425 = vor.u32 %v1423, %v1424
      %v1426 = vsel %vm1412, %v1422, %v1425
      %v1427 = vrot.slane %v931, 4
      %v1428 = vrot.slane %v934, 5
      %v1429 = vor.u32 %v1427, %v1428
      %v1430 = vrot.slane %v939, 4
      %v1431 = vrot.slane %v942, 5
      %v1432 = vor.u32 %v1430, %v1431
      %v1433 = vsel %vm1412, %v1429, %v1432
      %v1434 = vrot.slane %v948, 4
      %v1435 = vrot.slane %v951, 5
      %v1436 = vor.u32 %v1434, %v1435
      %v1437 = vrot.slane %v956, 4
      %v1438 = vrot.slane %v959, 5
      %v1439 = vor.u32 %v1437, %v1438
      %v1440 = vsel %vm1412, %v1436, %v1439
      %v1441 = vrot.slane %v965, 4
      %v1442 = vrot.slane %v968, 5
      %v1443 = vor.u32 %v1441, %v1442
      %v1444 = vrot.slane %v973, 4
      %v1445 = vrot.slane %v976, 5
      %v1446 = vor.u32 %v1444, %v1445
      %v1447 = vsel %vm1412, %v1443, %v1446
      %v1448 = vrot.slane %v982, 4
      %v1449 = vrot.slane %v985, 5
      %v1450 = vor.u32 %v1448, %v1449
      %v1451 = vrot.slane %v990, 4
      %v1452 = vrot.slane %v993, 5
      %v1453 = vor.u32 %v1451, %v1452
      %v1454 = vsel %vm1412, %v1450, %v1453
      %v1455 = vrot.slane %v999, 4
      %v1456 = vrot.slane %v1002, 5
      %v1457 = vor.u32 %v1455, %v1456
      %v1458 = vrot.slane %v1007, 4
      %v1459 = vrot.slane %v1010, 5
      %v1460 = vor.u32 %v1458, %v1459
      %v1461 = vsel %vm1412, %v1457, %v1460
      %v1462 = vrot.slane %v1016, 4
      %v1463 = vrot.slane %v1019, 5
      %v1464 = vor.u32 %v1462, %v1463
      %v1465 = vrot.slane %v1024, 4
      %v1466 = vrot.slane %v1027, 5
      %v1467 = vor.u32 %v1465, %v1466
      %v1468 = vsel %vm1412, %v1464, %v1467
      %s1477 = scalar_lea.vmem %s5, 128
      %v1478 = vld [vmem:[%s1477] sm:$0xf]
      %v1479 = vld [vmem:[%s1477 + $0x4] sm:$0xf]
      %v1480 = vld [vmem:[%s1477 + $0x8] sm:$0xf]
      %v1481 = vld [vmem:[%s1477 + $0xc] sm:$0xf]
      %v1482 = vld [vmem:[%s1477 + $0x10] sm:$0xf]
      %v1483 = vld [vmem:[%s1477 + $0x14] sm:$0xf]
      %v1484 = vld [vmem:[%s1477 + $0x18] sm:$0xf]
      %v1485 = vld [vmem:[%s1477 + $0x1c] sm:$0xf]
      %v1486 = vld [vmem:[%s1477 + $0x20] sm:$0xf]
      %v1487 = vld [vmem:[%s1477 + $0x24] sm:$0xf]
      %v1488 = vld [vmem:[%s1477 + $0x28] sm:$0xf]
      %v1489 = vld [vmem:[%s1477 + $0x2c] sm:$0xf]
      %v1490 = vld [vmem:[%s1477 + $0x30] sm:$0xf]
      %v1491 = vld [vmem:[%s1477 + $0x34] sm:$0xf]
      %v1492 = vld [vmem:[%s1477 + $0x38] sm:$0xf]
      %v1493 = vld [vmem:[%s1477 + $0x3c] sm:$0xf]
      %v1510 = vunpack.c.l.b16 %v1478
      %v1511 = vunpack.c.l.b16 %v1479
      %v1512 = vunpack.c.l.b16 %v1480
      %v1513 = vunpack.c.l.b16 %v1481
      %v1514 = vunpack.c.l.b16 %v1482
      %v1515 = vunpack.c.l.b16 %v1483
      %v1516 = vunpack.c.l.b16 %v1484
      %v1517 = vunpack.c.l.b16 %v1485
      %v1518 = vunpack.c.l.b16 %v1486
      %v1519 = vunpack.c.l.b16 %v1487
      %v1520 = vunpack.c.l.b16 %v1488
      %v1521 = vunpack.c.l.b16 %v1489
      %v1522 = vunpack.c.l.b16 %v1490
      %v1523 = vunpack.c.l.b16 %v1491
      %v1524 = vunpack.c.l.b16 %v1492
      %v1525 = vunpack.c.l.b16 %v1493
      %v1526 = vpack.c.b16 %v1511, %v1510
      %v1527 = vpack.c.b16 %v1513, %v1512
      %v1528 = vpack.c.b16 %v1515, %v1514
      %v1529 = vpack.c.b16 %v1517, %v1516
      %v1530 = vpack.c.b16 %v1519, %v1518
      %v1531 = vpack.c.b16 %v1521, %v1520
      %v1532 = vpack.c.b16 %v1523, %v1522
      %v1533 = vpack.c.b16 %v1525, %v1524
      %1542 = vmatprep.subr.bf16.mxu0 0
      %1543 = vmatpush1.bf16.msra.mxu0 %v1526
      %1544 = vmatprep.subr.bf16.mxu0 0
      %1545 = vmatpush1.bf16.msra.mxu0 %v1527
      %1546 = vmatprep.subr.bf16.mxu0 0
      %1547 = vmatpush1.bf16.msra.mxu0 %v1528
      %1548 = vmatprep.subr.bf16.mxu0 0
      %1549 = vmatpush1.bf16.msra.mxu0 %v1529
      %1550 = vmatprep.subr.bf16.mxu0 0
      %1551 = vmatpush1.bf16.msra.mxu0 %v1530
      %1552 = vmatprep.subr.bf16.mxu0 0
      %1553 = vmatpush1.bf16.msra.mxu0 %v1531
      %1554 = vmatprep.subr.bf16.mxu0 0
      %1555 = vmatpush1.bf16.msra.mxu0 %v1532
      %1556 = vmatprep.subr.bf16.mxu0 0
      %1557 = vmatpush1.bf16.msra.mxu0 %v1533
      %1558 = vmatprep.subr.bf16.mxu0 0
      %1559 = vmatpush1.bf16.msra.mxu0 0
      %1560 = vmatprep.subr.bf16.mxu0 0
      %1561 = vmatpush1.bf16.msra.mxu0 0
      %1562 = vmatprep.subr.bf16.mxu0 0
      %1563 = vmatpush1.bf16.msra.mxu0 0
      %1564 = vmatprep.subr.bf16.mxu0 0
      %1565 = vmatpush1.bf16.msra.mxu0 0
      %1566 = vmatprep.subr.bf16.mxu0 0
      %1567 = vmatpush1.bf16.msra.mxu0 0
      %1568 = vmatprep.subr.bf16.mxu0 0
      %1569 = vmatpush1.bf16.msra.mxu0 0
      %1570 = vmatprep.subr.bf16.mxu0 0
      %1571 = vmatpush1.bf16.msra.mxu0 0
      %1572 = vmatprep.subr.bf16.mxu0 0
      %1573 = vmatpush1.bf16.msra.mxu0 0
      %1574 = vmatprep.mubr.bf16.mxu0 0
      %1575 = vmatmul.mubr.bf16.gmra.mrb[0].mxu0 %v1419
      %v1576 = vpop.f32.mrb[0].mxu0
      %v1577 = vadd.f32 0.0, %v1576
      %v1578 = vpop.f32.mrb[0].mxu0
      %v1579 = vpop.f32.mrb[0].mxu0
      %v1580 = vadd.f32 0.0, %v1579
      %v1581 = vpop.f32.mrb[0].mxu0
      %1582 = vmatprep.mubr.bf16.mxu0 0
      %1583 = vmatmul.mubr.bf16.gmra.mrb[0].mxu0 %v1426
      %v1584 = vpop.f32.mrb[0].mxu0
      %v1585 = vadd.f32 0.0, %v1584
      %v1586 = vpop.f32.mrb[0].mxu0
      %v1587 = vpop.f32.mrb[0].mxu0
      %v1588 = vadd.f32 0.0, %v1587
      %v1589 = vpop.f32.mrb[0].mxu0
      %1590 = vmatprep.mubr.bf16.mxu0 0
      %1591 = vmatmul.mubr.bf16.gmra.mrb[0].mxu0 %v1433
      %v1592 = vpop.f32.mrb[0].mxu0
      %v1593 = vadd.f32 0.0, %v1592
      %v1594 = vpop.f32.mrb[0].mxu0
      %v1595 = vpop.f32.mrb[0].mxu0
      %v1596 = vadd.f32 0.0, %v1595
      %v1597 = vpop.f32.mrb[0].mxu0
      %1598 = vmatprep.mubr.bf16.mxu0 0
      %1599 = vmatmul.mubr.bf16.gmra.mrb[0].mxu0 %v1440
      %v1600 = vpop.f32.mrb[0].mxu0
      %v1601 = vadd.f32 0.0, %v1600
      %v1602 = vpop.f32.mrb[0].mxu0
      %v1603 = vpop.f32.mrb[0].mxu0
      %v1604 = vadd.f32 0.0, %v1603
      %v1605 = vpop.f32.mrb[0].mxu0
      %1606 = vmatprep.mubr.bf16.mxu0 0
      %1607 = vmatmul.mubr.bf16.gmra.mrb[0].mxu0 %v1447
      %v1608 = vpop.f32.mrb[0].mxu0
      %v1609 = vadd.f32 0.0, %v1608
      %v1610 = vpop.f32.mrb[0].mxu0
      %v1611 = vpop.f32.mrb[0].mxu0
      %v1612 = vadd.f32 0.0, %v1611
      %v1613 = vpop.f32.mrb[0].mxu0
      %1614 = vmatprep.mubr.bf16.mxu0 0
      %1615 = vmatmul.mubr.bf16.gmra.mrb[0].mxu0 %v1454
      %v1616 = vpop.f32.mrb[0].mxu0
      %v1617 = vadd.f32 0.0, %v1616
      %v1618 = vpop.f32.mrb[0].mxu0
      %v1619 = vpop.f32.mrb[0].mxu0
      %v1620 = vadd.f32 0.0, %v1619
      %v1621 = vpop.f32.mrb[0].mxu0
      %1622 = vmatprep.mubr.bf16.mxu0 0
      %1623 = vmatmul.mubr.bf16.gmra.mrb[0].mxu0 %v1461
      %v1624 = vpop.f32.mrb[0].mxu0
      %v1625 = vadd.f32 0.0, %v1624
      %v1626 = vpop.f32.mrb[0].mxu0
      %v1627 = vpop.f32.mrb[0].mxu0
      %v1628 = vadd.f32 0.0, %v1627
      %v1629 = vpop.f32.mrb[0].mxu0
      %1630 = vmatprep.mubr.bf16.mxu0 0
      %1631 = vmatmul.mubr.bf16.gmra.mrb[0].mxu0 %v1468
      %v1632 = vpop.f32.mrb[0].mxu0
      %v1633 = vadd.f32 0.0, %v1632
      %v1634 = vpop.f32.mrb[0].mxu0
      %v1635 = vpop.f32.mrb[0].mxu0
      %v1636 = vadd.f32 0.0, %v1635
      %v1637 = vpop.f32.mrb[0].mxu0
      %1638 = vdwg.mxu0
      %v1639 = vadd.f32 %v1350, %v1577
      %v1640 = vadd.f32 %v1353, %v1580
      %v1641 = vadd.f32 %v1358, %v1585
      %v1642 = vadd.f32 %v1361, %v1588
      %v1643 = vadd.f32 %v1366, %v1593
      %v1644 = vadd.f32 %v1369, %v1596
      %v1645 = vadd.f32 %v1374, %v1601
      %v1646 = vadd.f32 %v1377, %v1604
      %v1647 = vadd.f32 %v1382, %v1609
      %v1648 = vadd.f32 %v1385, %v1612
      %v1649 = vadd.f32 %v1390, %v1617
      %v1650 = vadd.f32 %v1393, %v1620
      %v1651 = vadd.f32 %v1398, %v1625
      %v1652 = vadd.f32 %v1401, %v1628
      %v1653 = vadd.f32 %v1406, %v1633
      %v1654 = vadd.f32 %v1409, %v1636
      %s1655 = scalar_lea.vmem [#allocation2], 16
      %v1656 = vld [vmem:[%s1655] sm:$0xff]
      %v1657 = vld [vmem:[%s1655 + $0x8] sm:$0xff]
      %v1658 = vld [vmem:[%s1655 + $0x10] sm:$0xff]
      %v1659 = vld [vmem:[%s1655 + $0x18] sm:$0xff]
      %v1660 = vld [vmem:[%s1655 + $0x20] sm:$0xff]
      %v1661 = vld [vmem:[%s1655 + $0x28] sm:$0xff]
      %v1662 = vld [vmem:[%s1655 + $0x30] sm:$0xff]
      %v1663 = vld [vmem:[%s1655 + $0x38] sm:$0xff]
      %v1664 = vld [vmem:[%s1655 + $0x40] sm:$0xff]
      %v1665 = vld [vmem:[%s1655 + $0x48] sm:$0xff]
      %v1666 = vld [vmem:[%s1655 + $0x50] sm:$0xff]
      %v1667 = vld [vmem:[%s1655 + $0x58] sm:$0xff]
      %v1668 = vld [vmem:[%s1655 + $0x60] sm:$0xff]
      %v1669 = vld [vmem:[%s1655 + $0x68] sm:$0xff]
      %v1670 = vld [vmem:[%s1655 + $0x70] sm:$0xff]
      %v1671 = vld [vmem:[%s1655 + $0x78] sm:$0xff]
      %v1673 = vshrl.u32 %v1656, 16
      %v1675 = vrot.slane %v1673, 3
      %v1676 = vshll.u32 %v1656, 16
      %v1678 = vrot.slane %v1676, 4
      %v1679 = vor.u32 %v1675, %v1678
      %v1681 = vshrl.u32 %v1657, 16
      %v1683 = vrot.slane %v1681, 3
      %v1684 = vshll.u32 %v1657, 16
      %v1686 = vrot.slane %v1684, 4
      %v1687 = vor.u32 %v1683, %v1686
      %v1688 = vsel %vm895, %v1679, %v1687
      %v1690 = vshrl.u32 %v1658, 16
      %v1692 = vrot.slane %v1690, 3
      %v1693 = vshll.u32 %v1658, 16
      %v1695 = vrot.slane %v1693, 4
      %v1696 = vor.u32 %v1692, %v1695
      %v1698 = vshrl.u32 %v1659, 16
      %v1700 = vrot.slane %v1698, 3
      %v1701 = vshll.u32 %v1659, 16
      %v1703 = vrot.slane %v1701, 4
      %v1704 = vor.u32 %v1700, %v1703
      %v1705 = vsel %vm895, %v1696, %v1704
      %v1707 = vshrl.u32 %v1660, 16
      %v1709 = vrot.slane %v1707, 3
      %v1710 = vshll.u32 %v1660, 16
      %v1712 = vrot.slane %v1710, 4
      %v1713 = vor.u32 %v1709, %v1712
      %v1715 = vshrl.u32 %v1661, 16
      %v1717 = vrot.slane %v1715, 3
      %v1718 = vshll.u32 %v1661, 16
      %v1720 = vrot.slane %v1718, 4
      %v1721 = vor.u32 %v1717, %v1720
      %v1722 = vsel %vm895, %v1713, %v1721
      %v1724 = vshrl.u32 %v1662, 16
      %v1726 = vrot.slane %v1724, 3
      %v1727 = vshll.u32 %v1662, 16
      %v1729 = vrot.slane %v1727, 4
      %v1730 = vor.u32 %v1726, %v1729
      %v1732 = vshrl.u32 %v1663, 16
      %v1734 = vrot.slane %v1732, 3
      %v1735 = vshll.u32 %v1663, 16
      %v1737 = vrot.slane %v1735, 4
      %v1738 = vor.u32 %v1734, %v1737
      %v1739 = vsel %vm895, %v1730, %v1738
      %v1741 = vshrl.u32 %v1664, 16
      %v1743 = vrot.slane %v1741, 3
      %v1744 = vshll.u32 %v1664, 16
      %v1746 = vrot.slane %v1744, 4
      %v1747 = vor.u32 %v1743, %v1746
      %v1749 = vshrl.u32 %v1665, 16
      %v1751 = vrot.slane %v1749, 3
      %v1752 = vshll.u32 %v1665, 16
      %v1754 = vrot.slane %v1752, 4
      %v1755 = vor.u32 %v1751, %v1754
      %v1756 = vsel %vm895, %v1747, %v1755
      %v1758 = vshrl.u32 %v1666, 16
      %v1760 = vrot.slane %v1758, 3
      %v1761 = vshll.u32 %v1666, 16
      %v1763 = vrot.slane %v1761, 4
      %v1764 = vor.u32 %v1760, %v1763
      %v1766 = vshrl.u32 %v1667, 16
      %v1768 = vrot.slane %v1766, 3
      %v1769 = vshll.u32 %v1667, 16
      %v1771 = vrot.slane %v1769, 4
      %v1772 = vor.u32 %v1768, %v1771
      %v1773 = vsel %vm895, %v1764, %v1772
      %v1775 = vshrl.u32 %v1668, 16
      %v1777 = vrot.slane %v1775, 3
      %v1778 = vshll.u32 %v1668, 16
      %v1780 = vrot.slane %v1778, 4
      %v1781 = vor.u32 %v1777, %v1780
      %v1783 = vshrl.u32 %v1669, 16
      %v1785 = vrot.slane %v1783, 3
      %v1786 = vshll.u32 %v1669, 16
      %v1788 = vrot.slane %v1786, 4
      %v1789 = vor.u32 %v1785, %v1788
      %v1790 = vsel %vm895, %v1781, %v1789
      %v1792 = vshrl.u32 %v1670, 16
      %v1794 = vrot.slane %v1792, 3
      %v1795 = vshll.u32 %v1670, 16
      %v1797 = vrot.slane %v1795, 4
      %v1798 = vor.u32 %v1794, %v1797
      %v1800 = vshrl.u32 %v1671, 16
      %v1802 = vrot.slane %v1800, 3
      %v1803 = vshll.u32 %v1671, 16
      %v1805 = vrot.slane %v1803, 4
      %v1806 = vor.u32 %v1802, %v1805
      %v1807 = vsel %vm895, %v1798, %v1806
      %s1816 = scalar_lea.vmem %s5, 192
      %v1817 = vld [vmem:[%s1816] sm:$0xf]
      %v1818 = vld [vmem:[%s1816 + $0x4] sm:$0xf]
      %v1819 = vld [vmem:[%s1816 + $0x8] sm:$0xf]
      %v1820 = vld [vmem:[%s1816 + $0xc] sm:$0xf]
      %v1821 = vld [vmem:[%s1816 + $0x10] sm:$0xf]
      %v1822 = vld [vmem:[%s1816 + $0x14] sm:$0xf]
      %v1823 = vld [vmem:[%s1816 + $0x18] sm:$0xf]
      %v1824 = vld [vmem:[%s1816 + $0x1c] sm:$0xf]
      %v1825 = vld [vmem:[%s1816 + $0x20] sm:$0xf]
      %v1826 = vld [vmem:[%s1816 + $0x24] sm:$0xf]
      %v1827 = vld [vmem:[%s1816 + $0x28] sm:$0xf]
      %v1828 = vld [vmem:[%s1816 + $0x2c] sm:$0xf]
      %v1829 = vld [vmem:[%s1816 + $0x30] sm:$0xf]
      %v1830 = vld [vmem:[%s1816 + $0x34] sm:$0xf]
      %v1831 = vld [vmem:[%s1816 + $0x38] sm:$0xf]
      %v1832 = vld [vmem:[%s1816 + $0x3c] sm:$0xf]
      %v1849 = vunpack.c.l.b16 %v1817
      %v1850 = vunpack.c.l.b16 %v1818
      %v1851 = vunpack.c.l.b16 %v1819
      %v1852 = vunpack.c.l.b16 %v1820
      %v1853 = vunpack.c.l.b16 %v1821
      %v1854 = vunpack.c.l.b16 %v1822
      %v1855 = vunpack.c.l.b16 %v1823
      %v1856 = vunpack.c.l.b16 %v1824
      %v1857 = vunpack.c.l.b16 %v1825
      %v1858 = vunpack.c.l.b16 %v1826
      %v1859 = vunpack.c.l.b16 %v1827
      %v1860 = vunpack.c.l.b16 %v1828
      %v1861 = vunpack.c.l.b16 %v1829
      %v1862 = vunpack.c.l.b16 %v1830
      %v1863 = vunpack.c.l.b16 %v1831
      %v1864 = vunpack.c.l.b16 %v1832
      %v1865 = vpack.c.b16 %v1850, %v1849
      %v1866 = vpack.c.b16 %v1852, %v1851
      %v1867 = vpack.c.b16 %v1854, %v1853
      %v1868 = vpack.c.b16 %v1856, %v1855
      %v1869 = vpack.c.b16 %v1858, %v1857
      %v1870 = vpack.c.b16 %v1860, %v1859
      %v1871 = vpack.c.b16 %v1862, %v1861
      %v1872 = vpack.c.b16 %v1864, %v1863
      %1881 = vmatprep.subr.bf16.mxu0 0
      %1882 = vmatpush1.bf16.msra.mxu0 %v1865
      %1883 = vmatprep.subr.bf16.mxu0 0
      %1884 = vmatpush1.bf16.msra.mxu0 %v1866
      %1885 = vmatprep.subr.bf16.mxu0 0
      %1886 = vmatpush1.bf16.msra.mxu0 %v1867
      %1887 = vmatprep.subr.bf16.mxu0 0
      %1888 = vmatpush1.bf16.msra.mxu0 %v1868
      %1889 = vmatprep.subr.bf16.mxu0 0
      %1890 = vmatpush1.bf16.msra.mxu0 %v1869
      %1891 = vmatprep.subr.bf16.mxu0 0
      %1892 = vmatpush1.bf16.msra.mxu0 %v1870
      %1893 = vmatprep.subr.bf16.mxu0 0
      %1894 = vmatpush1.bf16.msra.mxu0 %v1871
      %1895 = vmatprep.subr.bf16.mxu0 0
      %1896 = vmatpush1.bf16.msra.mxu0 %v1872
      %1897 = vmatprep.subr.bf16.mxu0 0
      %1898 = vmatpush1.bf16.msra.mxu0 0
      %1899 = vmatprep.subr.bf16.mxu0 0
      %1900 = vmatpush1.bf16.msra.mxu0 0
      %1901 = vmatprep.subr.bf16.mxu0 0
      %1902 = vmatpush1.bf16.msra.mxu0 0
      %1903 = vmatprep.subr.bf16.mxu0 0
      %1904 = vmatpush1.bf16.msra.mxu0 0
      %1905 = vmatprep.subr.bf16.mxu0 0
      %1906 = vmatpush1.bf16.msra.mxu0 0
      %1907 = vmatprep.subr.bf16.mxu0 0
      %1908 = vmatpush1.bf16.msra.mxu0 0
      %1909 = vmatprep.subr.bf16.mxu0 0
      %1910 = vmatpush1.bf16.msra.mxu0 0
      %1911 = vmatprep.subr.bf16.mxu0 0
      %1912 = vmatpush1.bf16.msra.mxu0 0
      %1913 = vmatprep.mubr.bf16.mxu0 0
      %1914 = vmatmul.mubr.bf16.gmra.mrb[0].mxu0 %v1688
      %v1915 = vpop.f32.mrb[0].mxu0
      %v1916 = vadd.f32 0.0, %v1915
      %v1917 = vpop.f32.mrb[0].mxu0
      %v1918 = vpop.f32.mrb[0].mxu0
      %v1919 = vadd.f32 0.0, %v1918
      %v1920 = vpop.f32.mrb[0].mxu0
      %1921 = vmatprep.mubr.bf16.mxu0 0
      %1922 = vmatmul.mubr.bf16.gmra.mrb[0].mxu0 %v1705
      %v1923 = vpop.f32.mrb[0].mxu0
      %v1924 = vadd.f32 0.0, %v1923
      %v1925 = vpop.f32.mrb[0].mxu0
      %v1926 = vpop.f32.mrb[0].mxu0
      %v1927 = vadd.f32 0.0, %v1926
      %v1928 = vpop.f32.mrb[0].mxu0
      %1929 = vmatprep.mubr.bf16.mxu0 0
      %1930 = vmatmul.mubr.bf16.gmra.mrb[0].mxu0 %v1722
      %v1931 = vpop.f32.mrb[0].mxu0
      %v1932 = vadd.f32 0.0, %v1931
      %v1933 = vpop.f32.mrb[0].mxu0
      %v1934 = vpop.f32.mrb[0].mxu0
      %v1935 = vadd.f32 0.0, %v1934
      %v1936 = vpop.f32.mrb[0].mxu0
      %1937 = vmatprep.mubr.bf16.mxu0 0
      %1938 = vmatmul.mubr.bf16.gmra.mrb[0].mxu0 %v1739
      %v1939 = vpop.f32.mrb[0].mxu0
      %v1940 = vadd.f32 0.0, %v1939
      %v1941 = vpop.f32.mrb[0].mxu0
      %v1942 = vpop.f32.mrb[0].mxu0
      %v1943 = vadd.f32 0.0, %v1942
      %v1944 = vpop.f32.mrb[0].mxu0
      %1945 = vmatprep.mubr.bf16.mxu0 0
      %1946 = vmatmul.mubr.bf16.gmra.mrb[0].mxu0 %v1756
      %v1947 = vpop.f32.mrb[0].mxu0
      %v1948 = vadd.f32 0.0, %v1947
      %v1949 = vpop.f32.mrb[0].mxu0
      %v1950 = vpop.f32.mrb[0].mxu0
      %v1951 = vadd.f32 0.0, %v1950
      %v1952 = vpop.f32.mrb[0].mxu0
      %1953 = vmatprep.mubr.bf16.mxu0 0
      %1954 = vmatmul.mubr.bf16.gmra.mrb[0].mxu0 %v1773
      %v1955 = vpop.f32.mrb[0].mxu0
      %v1956 = vadd.f32 0.0, %v1955
      %v1957 = vpop.f32.mrb[0].mxu0
      %v1958 = vpop.f32.mrb[0].mxu0
      %v1959 = vadd.f32 0.0, %v1958
      %v1960 = vpop.f32.mrb[0].mxu0
      %1961 = vmatprep.mubr.bf16.mxu0 0
      %1962 = vmatmul.mubr.bf16.gmra.mrb[0].mxu0 %v1790
      %v1963 = vpop.f32.mrb[0].mxu0
      %v1964 = vadd.f32 0.0, %v1963
      %v1965 = vpop.f32.mrb[0].mxu0
      %v1966 = vpop.f32.mrb[0].mxu0
      %v1967 = vadd.f32 0.0, %v1966
      %v1968 = vpop.f32.mrb[0].mxu0
      %1969 = vmatprep.mubr.bf16.mxu0 0
      %1970 = vmatmul.mubr.bf16.gmra.mrb[0].mxu0 %v1807
      %v1971 = vpop.f32.mrb[0].mxu0
      %v1972 = vadd.f32 0.0, %v1971
      %v1973 = vpop.f32.mrb[0].mxu0
      %v1974 = vpop.f32.mrb[0].mxu0
      %v1975 = vadd.f32 0.0, %v1974
      %v1976 = vpop.f32.mrb[0].mxu0
      %1977 = vdwg.mxu0
      %v1978 = vadd.f32 %v1639, %v1916
      %v1979 = vadd.f32 %v1640, %v1919
      %v1980 = vadd.f32 %v1641, %v1924
      %v1981 = vadd.f32 %v1642, %v1927
      %v1982 = vadd.f32 %v1643, %v1932
      %v1983 = vadd.f32 %v1644, %v1935
      %v1984 = vadd.f32 %v1645, %v1940
      %v1985 = vadd.f32 %v1646, %v1943
      %v1986 = vadd.f32 %v1647, %v1948
      %v1987 = vadd.f32 %v1648, %v1951
      %v1988 = vadd.f32 %v1649, %v1956
      %v1989 = vadd.f32 %v1650, %v1959
      %v1990 = vadd.f32 %v1651, %v1964
      %v1991 = vadd.f32 %v1652, %v1967
      %v1992 = vadd.f32 %v1653, %v1972
      %v1993 = vadd.f32 %v1654, %v1975
      %v2010 = vrot.slane %v1656, 4
      %v2011 = vrot.slane %v1657, 4
      %v2012 = vsel %vm1072, %v2010, %v2011
      %v2013 = vrot.slane %v1658, 4
      %v2014 = vrot.slane %v1659, 4
      %v2015 = vsel %vm1072, %v2013, %v2014
      %v2016 = vrot.slane %v1660, 4
      %v2017 = vrot.slane %v1661, 4
      %v2018 = vsel %vm1072, %v2016, %v2017
      %v2019 = vrot.slane %v1662, 4
      %v2020 = vrot.slane %v1663, 4
      %v2021 = vsel %vm1072, %v2019, %v2020
      %v2022 = vrot.slane %v1664, 4
      %v2023 = vrot.slane %v1665, 4
      %v2024 = vsel %vm1072, %v2022, %v2023
      %v2025 = vrot.slane %v1666, 4
      %v2026 = vrot.slane %v1667, 4
      %v2027 = vsel %vm1072, %v2025, %v2026
      %v2028 = vrot.slane %v1668, 4
      %v2029 = vrot.slane %v1669, 4
      %v2030 = vsel %vm1072, %v2028, %v2029
      %v2031 = vrot.slane %v1670, 4
      %v2032 = vrot.slane %v1671, 4
      %v2033 = vsel %vm1072, %v2031, %v2032
      %s2042 = scalar_lea.vmem %s5, 256
      %v2043 = vld [vmem:[%s2042] sm:$0xf]
      %v2044 = vld [vmem:[%s2042 + $0x4] sm:$0xf]
      %v2045 = vld [vmem:[%s2042 + $0x8] sm:$0xf]
      %v2046 = vld [vmem:[%s2042 + $0xc] sm:$0xf]
      %v2047 = vld [vmem:[%s2042 + $0x10] sm:$0xf]
      %v2048 = vld [vmem:[%s2042 + $0x14] sm:$0xf]
      %v2049 = vld [vmem:[%s2042 + $0x18] sm:$0xf]
      %v2050 = vld [vmem:[%s2042 + $0x1c] sm:$0xf]
      %v2051 = vld [vmem:[%s2042 + $0x20] sm:$0xf]
      %v2052 = vld [vmem:[%s2042 + $0x24] sm:$0xf]
      %v2053 = vld [vmem:[%s2042 + $0x28] sm:$0xf]
      %v2054 = vld [vmem:[%s2042 + $0x2c] sm:$0xf]
      %v2055 = vld [vmem:[%s2042 + $0x30] sm:$0xf]
      %v2056 = vld [vmem:[%s2042 + $0x34] sm:$0xf]
      %v2057 = vld [vmem:[%s2042 + $0x38] sm:$0xf]
      %v2058 = vld [vmem:[%s2042 + $0x3c] sm:$0xf]
      %v2075 = vunpack.c.l.b16 %v2043
      %v2076 = vunpack.c.l.b16 %v2044
      %v2077 = vunpack.c.l.b16 %v2045
      %v2078 = vunpack.c.l.b16 %v2046
      %v2079 = vunpack.c.l.b16 %v2047
      %v2080 = vunpack.c.l.b16 %v2048
      %v2081 = vunpack.c.l.b16 %v2049
      %v2082 = vunpack.c.l.b16 %v2050
      %v2083 = vunpack.c.l.b16 %v2051
      %v2084 = vunpack.c.l.b16 %v2052
      %v2085 = vunpack.c.l.b16 %v2053
      %v2086 = vunpack.c.l.b16 %v2054
      %v2087 = vunpack.c.l.b16 %v2055
      %v2088 = vunpack.c.l.b16 %v2056
      %v2089 = vunpack.c.l.b16 %v2057
      %v2090 = vunpack.c.l.b16 %v2058
      %v2091 = vpack.c.b16 %v2076, %v2075
      %v2092 = vpack.c.b16 %v2078, %v2077
      %v2093 = vpack.c.b16 %v2080, %v2079
      %v2094 = vpack.c.b16 %v2082, %v2081
      %v2095 = vpack.c.b16 %v2084, %v2083
      %v2096 = vpack.c.b16 %v2086, %v2085
      %v2097 = vpack.c.b16 %v2088, %v2087
      %v2098 = vpack.c.b16 %v2090, %v2089
      %2107 = vmatprep.subr.bf16.mxu0 0
      %2108 = vmatpush1.bf16.msra.mxu0 %v2091
      %2109 = vmatprep.subr.bf16.mxu0 0
      %2110 = vmatpush1.bf16.msra.mxu0 %v2092
      %2111 = vmatprep.subr.bf16.mxu0 0
      %2112 = vmatpush1.bf16.msra.mxu0 %v2093
      %2113 = vmatprep.subr.bf16.mxu0 0
      %2114 = vmatpush1.bf16.msra.mxu0 %v2094
      %2115 = vmatprep.subr.bf16.mxu0 0
      %2116 = vmatpush1.bf16.msra.mxu0 %v2095
      %2117 = vmatprep.subr.bf16.mxu0 0
      %2118 = vmatpush1.bf16.msra.mxu0 %v2096
      %2119 = vmatprep.subr.bf16.mxu0 0
      %2120 = vmatpush1.bf16.msra.mxu0 %v2097
      %2121 = vmatprep.subr.bf16.mxu0 0
      %2122 = vmatpush1.bf16.msra.mxu0 %v2098
      %2123 = vmatprep.subr.bf16.mxu0 0
      %2124 = vmatpush1.bf16.msra.mxu0 0
      %2125 = vmatprep.subr.bf16.mxu0 0
      %2126 = vmatpush1.bf16.msra.mxu0 0
      %2127 = vmatprep.subr.bf16.mxu0 0
      %2128 = vmatpush1.bf16.msra.mxu0 0
      %2129 = vmatprep.subr.bf16.mxu0 0
      %2130 = vmatpush1.bf16.msra.mxu0 0
      %2131 = vmatprep.subr.bf16.mxu0 0
      %2132 = vmatpush1.bf16.msra.mxu0 0
      %2133 = vmatprep.subr.bf16.mxu0 0
      %2134 = vmatpush1.bf16.msra.mxu0 0
      %2135 = vmatprep.subr.bf16.mxu0 0
      %2136 = vmatpush1.bf16.msra.mxu0 0
      %2137 = vmatprep.subr.bf16.mxu0 0
      %2138 = vmatpush1.bf16.msra.mxu0 0
      %2139 = vmatprep.mubr.bf16.mxu0 0
      %2140 = vmatmul.mubr.bf16.gmra.mrb[0].mxu0 %v2012
      %v2141 = vpop.f32.mrb[0].mxu0
      %v2142 = vadd.f32 0.0, %v2141
      %v2143 = vpop.f32.mrb[0].mxu0
      %v2144 = vpop.f32.mrb[0].mxu0
      %v2145 = vadd.f32 0.0, %v2144
      %v2146 = vpop.f32.mrb[0].mxu0
      %2147 = vmatprep.mubr.bf16.mxu0 0
      %2148 = vmatmul.mubr.bf16.gmra.mrb[0].mxu0 %v2015
      %v2149 = vpop.f32.mrb[0].mxu0
      %v2150 = vadd.f32 0.0, %v2149
      %v2151 = vpop.f32.mrb[0].mxu0
      %v2152 = vpop.f32.mrb[0].mxu0
      %v2153 = vadd.f32 0.0, %v2152
      %v2154 = vpop.f32.mrb[0].mxu0
      %2155 = vmatprep.mubr.bf16.mxu0 0
      %2156 = vmatmul.mubr.bf16.gmra.mrb[0].mxu0 %v2018
      %v2157 = vpop.f32.mrb[0].mxu0
      %v2158 = vadd.f32 0.0, %v2157
      %v2159 = vpop.f32.mrb[0].mxu0
      %v2160 = vpop.f32.mrb[0].mxu0
      %v2161 = vadd.f32 0.0, %v2160
      %v2162 = vpop.f32.mrb[0].mxu0
      %2163 = vmatprep.mubr.bf16.mxu0 0
      %2164 = vmatmul.mubr.bf16.gmra.mrb[0].mxu0 %v2021
      %v2165 = vpop.f32.mrb[0].mxu0
      %v2166 = vadd.f32 0.0, %v2165
      %v2167 = vpop.f32.mrb[0].mxu0
      %v2168 = vpop.f32.mrb[0].mxu0
      %v2169 = vadd.f32 0.0, %v2168
      %v2170 = vpop.f32.mrb[0].mxu0
      %2171 = vmatprep.mubr.bf16.mxu0 0
      %2172 = vmatmul.mubr.bf16.gmra.mrb[0].mxu0 %v2024
      %v2173 = vpop.f32.mrb[0].mxu0
      %v2174 = vadd.f32 0.0, %v2173
      %v2175 = vpop.f32.mrb[0].mxu0
      %v2176 = vpop.f32.mrb[0].mxu0
      %v2177 = vadd.f32 0.0, %v2176
      %v2178 = vpop.f32.mrb[0].mxu0
      %2179 = vmatprep.mubr.bf16.mxu0 0
      %2180 = vmatmul.mubr.bf16.gmra.mrb[0].mxu0 %v2027
      %v2181 = vpop.f32.mrb[0].mxu0
      %v2182 = vadd.f32 0.0, %v2181
      %v2183 = vpop.f32.mrb[0].mxu0
      %v2184 = vpop.f32.mrb[0].mxu0
      %v2185 = vadd.f32 0.0, %v2184
      %v2186 = vpop.f32.mrb[0].mxu0
      %2187 = vmatprep.mubr.bf16.mxu0 0
      %2188 = vmatmul.mubr.bf16.gmra.mrb[0].mxu0 %v2030
      %v2189 = vpop.f32.mrb[0].mxu0
      %v2190 = vadd.f32 0.0, %v2189
      %v2191 = vpop.f32.mrb[0].mxu0
      %v2192 = vpop.f32.mrb[0].mxu0
      %v2193 = vadd.f32 0.0, %v2192
      %v2194 = vpop.f32.mrb[0].mxu0
      %2195 = vmatprep.mubr.bf16.mxu0 0
      %2196 = vmatmul.mubr.bf16.gmra.mrb[0].mxu0 %v2033
      %v2197 = vpop.f32.mrb[0].mxu0
      %v2198 = vadd.f32 0.0, %v2197
      %v2199 = vpop.f32.mrb[0].mxu0
      %v2200 = vpop.f32.mrb[0].mxu0
      %v2201 = vadd.f32 0.0, %v2200
      %v2202 = vpop.f32.mrb[0].mxu0
      %2203 = vdwg.mxu0
      %v2204 = vadd.f32 %v1978, %v2142
      %v2205 = vadd.f32 %v1979, %v2145
      %v2206 = vadd.f32 %v1980, %v2150
      %v2207 = vadd.f32 %v1981, %v2153
      %v2208 = vadd.f32 %v1982, %v2158
      %v2209 = vadd.f32 %v1983, %v2161
      %v2210 = vadd.f32 %v1984, %v2166
      %v2211 = vadd.f32 %v1985, %v2169
      %v2212 = vadd.f32 %v1986, %v2174
      %v2213 = vadd.f32 %v1987, %v2177
      %v2214 = vadd.f32 %v1988, %v2182
      %v2215 = vadd.f32 %v1989, %v2185
      %v2216 = vadd.f32 %v1990, %v2190
      %v2217 = vadd.f32 %v1991, %v2193
      %v2218 = vadd.f32 %v1992, %v2198
      %v2219 = vadd.f32 %v1993, %v2201
      %v2220 = vrot.slane %v1673, 4
      %v2221 = vrot.slane %v1676, 5
      %v2222 = vor.u32 %v2220, %v2221
      %v2223 = vrot.slane %v1681, 4
      %v2224 = vrot.slane %v1684, 5
      %v2225 = vor.u32 %v2223, %v2224
      %v2226 = vsel %vm1412, %v2222, %v2225
      %v2227 = vrot.slane %v1690, 4
      %v2228 = vrot.slane %v1693, 5
      %v2229 = vor.u32 %v2227, %v2228
      %v2230 = vrot.slane %v1698, 4
      %v2231 = vrot.slane %v1701, 5
      %v2232 = vor.u32 %v2230, %v2231
      %v2233 = vsel %vm1412, %v2229, %v2232
      %v2234 = vrot.slane %v1707, 4
      %v2235 = vrot.slane %v1710, 5
      %v2236 = vor.u32 %v2234, %v2235
      %v2237 = vrot.slane %v1715, 4
      %v2238 = vrot.slane %v1718, 5
      %v2239 = vor.u32 %v2237, %v2238
      %v2240 = vsel %vm1412, %v2236, %v2239
      %v2241 = vrot.slane %v1724, 4
      %v2242 = vrot.slane %v1727, 5
      %v2243 = vor.u32 %v2241, %v2242
      %v2244 = vrot.slane %v1732, 4
      %v2245 = vrot.slane %v1735, 5
      %v2246 = vor.u32 %v2244, %v2245
      %v2247 = vsel %vm1412, %v2243, %v2246
      %v2248 = vrot.slane %v1741, 4
      %v2249 = vrot.slane %v1744, 5
      %v2250 = vor.u32 %v2248, %v2249
      %v2251 = vrot.slane %v1749, 4
      %v2252 = vrot.slane %v1752, 5
      %v2253 = vor.u32 %v2251, %v2252
      %v2254 = vsel %vm1412, %v2250, %v2253
      %v2255 = vrot.slane %v1758, 4
      %v2256 = vrot.slane %v1761, 5
      %v2257 = vor.u32 %v2255, %v2256
      %v2258 = vrot.slane %v1766, 4
      %v2259 = vrot.slane %v1769, 5
      %v2260 = vor.u32 %v2258, %v2259
      %v2261 = vsel %vm1412, %v2257, %v2260
      %v2262 = vrot.slane %v1775, 4
      %v2263 = vrot.slane %v1778, 5
      %v2264 = vor.u32 %v2262, %v2263
      %v2265 = vrot.slane %v1783, 4
      %v2266 = vrot.slane %v1786, 5
      %v2267 = vor.u32 %v2265, %v2266
      %v2268 = vsel %vm1412, %v2264, %v2267
      %v2269 = vrot.slane %v1792, 4
      %v2270 = vrot.slane %v1795, 5
      %v2271 = vor.u32 %v2269, %v2270
      %v2272 = vrot.slane %v1800, 4
      %v2273 = vrot.slane %v1803, 5
      %v2274 = vor.u32 %v2272, %v2273
      %v2275 = vsel %vm1412, %v2271, %v2274
      %s2284 = scalar_lea.vmem %s5, 320
      %v2285 = vld [vmem:[%s2284] sm:$0xf]
      %v2286 = vld [vmem:[%s2284 + $0x4] sm:$0xf]
      %v2287 = vld [vmem:[%s2284 + $0x8] sm:$0xf]
      %v2288 = vld [vmem:[%s2284 + $0xc] sm:$0xf]
      %v2289 = vld [vmem:[%s2284 + $0x10] sm:$0xf]
      %v2290 = vld [vmem:[%s2284 + $0x14] sm:$0xf]
      %v2291 = vld [vmem:[%s2284 + $0x18] sm:$0xf]
      %v2292 = vld [vmem:[%s2284 + $0x1c] sm:$0xf]
      %v2293 = vld [vmem:[%s2284 + $0x20] sm:$0xf]
      %v2294 = vld [vmem:[%s2284 + $0x24] sm:$0xf]
      %v2295 = vld [vmem:[%s2284 + $0x28] sm:$0xf]
      %v2296 = vld [vmem:[%s2284 + $0x2c] sm:$0xf]
      %v2297 = vld [vmem:[%s2284 + $0x30] sm:$0xf]
      %v2298 = vld [vmem:[%s2284 + $0x34] sm:$0xf]
      %v2299 = vld [vmem:[%s2284 + $0x38] sm:$0xf]
      %v2300 = vld [vmem:[%s2284 + $0x3c] sm:$0xf]
      %v2317 = vunpack.c.l.b16 %v2285
      %v2318 = vunpack.c.l.b16 %v2286
      %v2319 = vunpack.c.l.b16 %v2287
      %v2320 = vunpack.c.l.b16 %v2288
      %v2321 = vunpack.c.l.b16 %v2289
      %v2322 = vunpack.c.l.b16 %v2290
      %v2323 = vunpack.c.l.b16 %v2291
      %v2324 = vunpack.c.l.b16 %v2292
      %v2325 = vunpack.c.l.b16 %v2293
      %v2326 = vunpack.c.l.b16 %v2294
      %v2327 = vunpack.c.l.b16 %v2295
      %v2328 = vunpack.c.l.b16 %v2296
      %v2329 = vunpack.c.l.b16 %v2297
      %v2330 = vunpack.c.l.b16 %v2298
      %v2331 = vunpack.c.l.b16 %v2299
      %v2332 = vunpack.c.l.b16 %v2300
      %v2333 = vpack.c.b16 %v2318, %v2317
      %v2334 = vpack.c.b16 %v2320, %v2319
      %v2335 = vpack.c.b16 %v2322, %v2321
      %v2336 = vpack.c.b16 %v2324, %v2323
      %v2337 = vpack.c.b16 %v2326, %v2325
      %v2338 = vpack.c.b16 %v2328, %v2327
      %v2339 = vpack.c.b16 %v2330, %v2329
      %v2340 = vpack.c.b16 %v2332, %v2331
      %2349 = vmatprep.subr.bf16.mxu0 0
      %2350 = vmatpush1.bf16.msra.mxu0 %v2333
      %2351 = vmatprep.subr.bf16.mxu0 0
      %2352 = vmatpush1.bf16.msra.mxu0 %v2334
      %2353 = vmatprep.subr.bf16.mxu0 0
      %2354 = vmatpush1.bf16.msra.mxu0 %v2335
      %2355 = vmatprep.subr.bf16.mxu0 0
      %2356 = vmatpush1.bf16.msra.mxu0 %v2336
      %2357 = vmatprep.subr.bf16.mxu0 0
      %2358 = vmatpush1.bf16.msra.mxu0 %v2337
      %2359 = vmatprep.subr.bf16.mxu0 0
      %2360 = vmatpush1.bf16.msra.mxu0 %v2338
      %2361 = vmatprep.subr.bf16.mxu0 0
      %2362 = vmatpush1.bf16.msra.mxu0 %v2339
      %2363 = vmatprep.subr.bf16.mxu0 0
      %2364 = vmatpush1.bf16.msra.mxu0 %v2340
      %2365 = vmatprep.subr.bf16.mxu0 0
      %2366 = vmatpush1.bf16.msra.mxu0 0
      %2367 = vmatprep.subr.bf16.mxu0 0
      %2368 = vmatpush1.bf16.msra.mxu0 0
      %2369 = vmatprep.subr.bf16.mxu0 0
      %2370 = vmatpush1.bf16.msra.mxu0 0
      %2371 = vmatprep.subr.bf16.mxu0 0
      %2372 = vmatpush1.bf16.msra.mxu0 0
      %2373 = vmatprep.subr.bf16.mxu0 0
      %2374 = vmatpush1.bf16.msra.mxu0 0
      %2375 = vmatprep.subr.bf16.mxu0 0
      %2376 = vmatpush1.bf16.msra.mxu0 0
      %2377 = vmatprep.subr.bf16.mxu0 0
      %2378 = vmatpush1.bf16.msra.mxu0 0
      %2379 = vmatprep.subr.bf16.mxu0 0
      %2380 = vmatpush1.bf16.msra.mxu0 0
      %2381 = vmatprep.mubr.bf16.mxu0 0
      %2382 = vmatmul.mubr.bf16.gmra.mrb[0].mxu0 %v2226
      %v2383 = vpop.f32.mrb[0].mxu0
      %v2384 = vadd.f32 0.0, %v2383
      %v2385 = vpop.f32.mrb[0].mxu0
      %v2386 = vpop.f32.mrb[0].mxu0
      %v2387 = vadd.f32 0.0, %v2386
      %v2388 = vpop.f32.mrb[0].mxu0
      %2389 = vmatprep.mubr.bf16.mxu0 0
      %2390 = vmatmul.mubr.bf16.gmra.mrb[0].mxu0 %v2233
      %v2391 = vpop.f32.mrb[0].mxu0
      %v2392 = vadd.f32 0.0, %v2391
      %v2393 = vpop.f32.mrb[0].mxu0
      %v2394 = vpop.f32.mrb[0].mxu0
      %v2395 = vadd.f32 0.0, %v2394
      %v2396 = vpop.f32.mrb[0].mxu0
      %2397 = vmatprep.mubr.bf16.mxu0 0
      %2398 = vmatmul.mubr.bf16.gmra.mrb[0].mxu0 %v2240
      %v2399 = vpop.f32.mrb[0].mxu0
      %v2400 = vadd.f32 0.0, %v2399
      %v2401 = vpop.f32.mrb[0].mxu0
      %v2402 = vpop.f32.mrb[0].mxu0
      %v2403 = vadd.f32 0.0, %v2402
      %v2404 = vpop.f32.mrb[0].mxu0
      %2405 = vmatprep.mubr.bf16.mxu0 0
      %2406 = vmatmul.mubr.bf16.gmra.mrb[0].mxu0 %v2247
      %v2407 = vpop.f32.mrb[0].mxu0
      %v2408 = vadd.f32 0.0, %v2407
      %v2409 = vpop.f32.mrb[0].mxu0
      %v2410 = vpop.f32.mrb[0].mxu0
      %v2411 = vadd.f32 0.0, %v2410
      %v2412 = vpop.f32.mrb[0].mxu0
      %2413 = vmatprep.mubr.bf16.mxu0 0
      %2414 = vmatmul.mubr.bf16.gmra.mrb[0].mxu0 %v2254
      %v2415 = vpop.f32.mrb[0].mxu0
      %v2416 = vadd.f32 0.0, %v2415
      %v2417 = vpop.f32.mrb[0].mxu0
      %v2418 = vpop.f32.mrb[0].mxu0
      %v2419 = vadd.f32 0.0, %v2418
      %v2420 = vpop.f32.mrb[0].mxu0
      %2421 = vmatprep.mubr.bf16.mxu0 0
      %2422 = vmatmul.mubr.bf16.gmra.mrb[0].mxu0 %v2261
      %v2423 = vpop.f32.mrb[0].mxu0
      %v2424 = vadd.f32 0.0, %v2423
      %v2425 = vpop.f32.mrb[0].mxu0
      %v2426 = vpop.f32.mrb[0].mxu0
      %v2427 = vadd.f32 0.0, %v2426
      %v2428 = vpop.f32.mrb[0].mxu0
      %2429 = vmatprep.mubr.bf16.mxu0 0
      %2430 = vmatmul.mubr.bf16.gmra.mrb[0].mxu0 %v2268
      %v2431 = vpop.f32.mrb[0].mxu0
      %v2432 = vadd.f32 0.0, %v2431
      %v2433 = vpop.f32.mrb[0].mxu0
      %v2434 = vpop.f32.mrb[0].mxu0
      %v2435 = vadd.f32 0.0, %v2434
      %v2436 = vpop.f32.mrb[0].mxu0
      %2437 = vmatprep.mubr.bf16.mxu0 0
      %2438 = vmatmul.mubr.bf16.gmra.mrb[0].mxu0 %v2275
      %v2439 = vpop.f32.mrb[0].mxu0
      %v2440 = vadd.f32 0.0, %v2439
      %v2441 = vpop.f32.mrb[0].mxu0
      %v2442 = vpop.f32.mrb[0].mxu0
      %v2443 = vadd.f32 0.0, %v2442
      %v2444 = vpop.f32.mrb[0].mxu0
      %2445 = vdwg.mxu0
      %v2446 = vadd.f32 %v2204, %v2384
      %v2447 = vadd.f32 %v2205, %v2387
      %v2448 = vadd.f32 %v2206, %v2392
      %v2449 = vadd.f32 %v2207, %v2395
      %v2450 = vadd.f32 %v2208, %v2400
      %v2451 = vadd.f32 %v2209, %v2403
      %v2452 = vadd.f32 %v2210, %v2408
      %v2453 = vadd.f32 %v2211, %v2411
      %v2454 = vadd.f32 %v2212, %v2416
      %v2455 = vadd.f32 %v2213, %v2419
      %v2456 = vadd.f32 %v2214, %v2424
      %v2457 = vadd.f32 %v2215, %v2427
      %v2458 = vadd.f32 %v2216, %v2432
      %v2459 = vadd.f32 %v2217, %v2435
      %v2460 = vadd.f32 %v2218, %v2440
      %v2461 = vadd.f32 %v2219, %v2443
      %s2462 = scalar_lea.vmem [#allocation2], 32
      %v2463 = vld [vmem:[%s2462] sm:$0xff]
      %v2464 = vld [vmem:[%s2462 + $0x8] sm:$0xff]
      %v2465 = vld [vmem:[%s2462 + $0x10] sm:$0xff]
      %v2466 = vld [vmem:[%s2462 + $0x18] sm:$0xff]
      %v2467 = vld [vmem:[%s2462 + $0x20] sm:$0xff]
      %v2468 = vld [vmem:[%s2462 + $0x28] sm:$0xff]
      %v2469 = vld [vmem:[%s2462 + $0x30] sm:$0xff]
      %v2470 = vld [vmem:[%s2462 + $0x38] sm:$0xff]
      %v2471 = vld [vmem:[%s2462 + $0x40] sm:$0xff]
      %v2472 = vld [vmem:[%s2462 + $0x48] sm:$0xff]
      %v2473 = vld [vmem:[%s2462 + $0x50] sm:$0xff]
      %v2474 = vld [vmem:[%s2462 + $0x58] sm:$0xff]
      %v2475 = vld [vmem:[%s2462 + $0x60] sm:$0xff]
      %v2476 = vld [vmem:[%s2462 + $0x68] sm:$0xff]
      %v2477 = vld [vmem:[%s2462 + $0x70] sm:$0xff]
      %v2478 = vld [vmem:[%s2462 + $0x78] sm:$0xff]
      %v2480 = vshrl.u32 %v2463, 16
      %v2482 = vrot.slane %v2480, 3
      %v2483 = vshll.u32 %v2463, 16
      %v2485 = vrot.slane %v2483, 4
      %v2486 = vor.u32 %v2482, %v2485
      %v2488 = vshrl.u32 %v2464, 16
      %v2490 = vrot.slane %v2488, 3
      %v2491 = vshll.u32 %v2464, 16
      %v2493 = vrot.slane %v2491, 4
      %v2494 = vor.u32 %v2490, %v2493
      %v2495 = vsel %vm895, %v2486, %v2494
      %v2497 = vshrl.u32 %v2465, 16
      %v2499 = vrot.slane %v2497, 3
      %v2500 = vshll.u32 %v2465, 16
      %v2502 = vrot.slane %v2500, 4
      %v2503 = vor.u32 %v2499, %v2502
      %v2505 = vshrl.u32 %v2466, 16
      %v2507 = vrot.slane %v2505, 3
      %v2508 = vshll.u32 %v2466, 16
      %v2510 = vrot.slane %v2508, 4
      %v2511 = vor.u32 %v2507, %v2510
      %v2512 = vsel %vm895, %v2503, %v2511
      %v2514 = vshrl.u32 %v2467, 16
      %v2516 = vrot.slane %v2514, 3
      %v2517 = vshll.u32 %v2467, 16
      %v2519 = vrot.slane %v2517, 4
      %v2520 = vor.u32 %v2516, %v2519
      %v2522 = vshrl.u32 %v2468, 16
      %v2524 = vrot.slane %v2522, 3
      %v2525 = vshll.u32 %v2468, 16
      %v2527 = vrot.slane %v2525, 4
      %v2528 = vor.u32 %v2524, %v2527
      %v2529 = vsel %vm895, %v2520, %v2528
      %v2531 = vshrl.u32 %v2469, 16
      %v2533 = vrot.slane %v2531, 3
      %v2534 = vshll.u32 %v2469, 16
      %v2536 = vrot.slane %v2534, 4
      %v2537 = vor.u32 %v2533, %v2536
      %v2539 = vshrl.u32 %v2470, 16
      %v2541 = vrot.slane %v2539, 3
      %v2542 = vshll.u32 %v2470, 16
      %v2544 = vrot.slane %v2542, 4
      %v2545 = vor.u32 %v2541, %v2544
      %v2546 = vsel %vm895, %v2537, %v2545
      %v2548 = vshrl.u32 %v2471, 16
      %v2550 = vrot.slane %v2548, 3
      %v2551 = vshll.u32 %v2471, 16
      %v2553 = vrot.slane %v2551, 4
      %v2554 = vor.u32 %v2550, %v2553
      %v2556 = vshrl.u32 %v2472, 16
      %v2558 = vrot.slane %v2556, 3
      %v2559 = vshll.u32 %v2472, 16
      %v2561 = vrot.slane %v2559, 4
      %v2562 = vor.u32 %v2558, %v2561
      %v2563 = vsel %vm895, %v2554, %v2562
      %v2565 = vshrl.u32 %v2473, 16
      %v2567 = vrot.slane %v2565, 3
      %v2568 = vshll.u32 %v2473, 16
      %v2570 = vrot.slane %v2568, 4
      %v2571 = vor.u32 %v2567, %v2570
      %v2573 = vshrl.u32 %v2474, 16
      %v2575 = vrot.slane %v2573, 3
      %v2576 = vshll.u32 %v2474, 16
      %v2578 = vrot.slane %v2576, 4
      %v2579 = vor.u32 %v2575, %v2578
      %v2580 = vsel %vm895, %v2571, %v2579
      %v2582 = vshrl.u32 %v2475, 16
      %v2584 = vrot.slane %v2582, 3
      %v2585 = vshll.u32 %v2475, 16
      %v2587 = vrot.slane %v2585, 4
      %v2588 = vor.u32 %v2584, %v2587
      %v2590 = vshrl.u32 %v2476, 16
      %v2592 = vrot.slane %v2590, 3
      %v2593 = vshll.u32 %v2476, 16
      %v2595 = vrot.slane %v2593, 4
      %v2596 = vor.u32 %v2592, %v2595
      %v2597 = vsel %vm895, %v2588, %v2596
      %v2599 = vshrl.u32 %v2477, 16
      %v2601 = vrot.slane %v2599, 3
      %v2602 = vshll.u32 %v2477, 16
      %v2604 = vrot.slane %v2602, 4
      %v2605 = vor.u32 %v2601, %v2604
      %v2607 = vshrl.u32 %v2478, 16
      %v2609 = vrot.slane %v2607, 3
      %v2610 = vshll.u32 %v2478, 16
      %v2612 = vrot.slane %v2610, 4
      %v2613 = vor.u32 %v2609, %v2612
      %v2614 = vsel %vm895, %v2605, %v2613
      %s2623 = scalar_lea.vmem %s5, 384
      %v2624 = vld [vmem:[%s2623] sm:$0xf]
      %v2625 = vld [vmem:[%s2623 + $0x4] sm:$0xf]
      %v2626 = vld [vmem:[%s2623 + $0x8] sm:$0xf]
      %v2627 = vld [vmem:[%s2623 + $0xc] sm:$0xf]
      %v2628 = vld [vmem:[%s2623 + $0x10] sm:$0xf]
      %v2629 = vld [vmem:[%s2623 + $0x14] sm:$0xf]
      %v2630 = vld [vmem:[%s2623 + $0x18] sm:$0xf]
      %v2631 = vld [vmem:[%s2623 + $0x1c] sm:$0xf]
      %v2632 = vld [vmem:[%s2623 + $0x20] sm:$0xf]
      %v2633 = vld [vmem:[%s2623 + $0x24] sm:$0xf]
      %v2634 = vld [vmem:[%s2623 + $0x28] sm:$0xf]
      %v2635 = vld [vmem:[%s2623 + $0x2c] sm:$0xf]
      %v2636 = vld [vmem:[%s2623 + $0x30] sm:$0xf]
      %v2637 = vld [vmem:[%s2623 + $0x34] sm:$0xf]
      %v2638 = vld [vmem:[%s2623 + $0x38] sm:$0xf]
      %v2639 = vld [vmem:[%s2623 + $0x3c] sm:$0xf]
      %v2656 = vunpack.c.l.b16 %v2624
      %v2657 = vunpack.c.l.b16 %v2625
      %v2658 = vunpack.c.l.b16 %v2626
      %v2659 = vunpack.c.l.b16 %v2627
      %v2660 = vunpack.c.l.b16 %v2628
      %v2661 = vunpack.c.l.b16 %v2629
      %v2662 = vunpack.c.l.b16 %v2630
      %v2663 = vunpack.c.l.b16 %v2631
      %v2664 = vunpack.c.l.b16 %v2632
      %v2665 = vunpack.c.l.b16 %v2633
      %v2666 = vunpack.c.l.b16 %v2634
      %v2667 = vunpack.c.l.b16 %v2635
      %v2668 = vunpack.c.l.b16 %v2636
      %v2669 = vunpack.c.l.b16 %v2637
      %v2670 = vunpack.c.l.b16 %v2638
      %v2671 = vunpack.c.l.b16 %v2639
      %v2672 = vpack.c.b16 %v2657, %v2656
      %v2673 = vpack.c.b16 %v2659, %v2658
      %v2674 = vpack.c.b16 %v2661, %v2660
      %v2675 = vpack.c.b16 %v2663, %v2662
      %v2676 = vpack.c.b16 %v2665, %v2664
      %v2677 = vpack.c.b16 %v2667, %v2666
      %v2678 = vpack.c.b16 %v2669, %v2668
      %v2679 = vpack.c.b16 %v2671, %v2670
      %2688 = vmatprep.subr.bf16.mxu0 0
      %2689 = vmatpush1.bf16.msra.mxu0 %v2672
      %2690 = vmatprep.subr.bf16.mxu0 0
      %2691 = vmatpush1.bf16.msra.mxu0 %v2673
      %2692 = vmatprep.subr.bf16.mxu0 0
      %2693 = vmatpush1.bf16.msra.mxu0 %v2674
      %2694 = vmatprep.subr.bf16.mxu0 0
      %2695 = vmatpush1.bf16.msra.mxu0 %v2675
      %2696 = vmatprep.subr.bf16.mxu0 0
      %2697 = vmatpush1.bf16.msra.mxu0 %v2676
      %2698 = vmatprep.subr.bf16.mxu0 0
      %2699 = vmatpush1.bf16.msra.mxu0 %v2677
      %2700 = vmatprep.subr.bf16.mxu0 0
      %2701 = vmatpush1.bf16.msra.mxu0 %v2678
      %2702 = vmatprep.subr.bf16.mxu0 0
      %2703 = vmatpush1.bf16.msra.mxu0 %v2679
      %2704 = vmatprep.subr.bf16.mxu0 0
      %2705 = vmatpush1.bf16.msra.mxu0 0
      %2706 = vmatprep.subr.bf16.mxu0 0
      %2707 = vmatpush1.bf16.msra.mxu0 0
      %2708 = vmatprep.subr.bf16.mxu0 0
      %2709 = vmatpush1.bf16.msra.mxu0 0
      %2710 = vmatprep.subr.bf16.mxu0 0
      %2711 = vmatpush1.bf16.msra.mxu0 0
      %2712 = vmatprep.subr.bf16.mxu0 0
      %2713 = vmatpush1.bf16.msra.mxu0 0
      %2714 = vmatprep.subr.bf16.mxu0 0
      %2715 = vmatpush1.bf16.msra.mxu0 0
      %2716 = vmatprep.subr.bf16.mxu0 0
      %2717 = vmatpush1.bf16.msra.mxu0 0
      %2718 = vmatprep.subr.bf16.mxu0 0
      %2719 = vmatpush1.bf16.msra.mxu0 0
      %2720 = vmatprep.mubr.bf16.mxu0 0
      %2721 = vmatmul.mubr.bf16.gmra.mrb[0].mxu0 %v2495
      %v2722 = vpop.f32.mrb[0].mxu0
      %v2723 = vadd.f32 0.0, %v2722
      %v2724 = vpop.f32.mrb[0].mxu0
      %v2725 = vpop.f32.mrb[0].mxu0
      %v2726 = vadd.f32 0.0, %v2725
      %v2727 = vpop.f32.mrb[0].mxu0
      %2728 = vmatprep.mubr.bf16.mxu0 0
      %2729 = vmatmul.mubr.bf16.gmra.mrb[0].mxu0 %v2512
      %v2730 = vpop.f32.mrb[0].mxu0
      %v2731 = vadd.f32 0.0, %v2730
      %v2732 = vpop.f32.mrb[0].mxu0
      %v2733 = vpop.f32.mrb[0].mxu0
      %v2734 = vadd.f32 0.0, %v2733
      %v2735 = vpop.f32.mrb[0].mxu0
      %2736 = vmatprep.mubr.bf16.mxu0 0
      %2737 = vmatmul.mubr.bf16.gmra.mrb[0].mxu0 %v2529
      %v2738 = vpop.f32.mrb[0].mxu0
      %v2739 = vadd.f32 0.0, %v2738
      %v2740 = vpop.f32.mrb[0].mxu0
      %v2741 = vpop.f32.mrb[0].mxu0
      %v2742 = vadd.f32 0.0, %v2741
      %v2743 = vpop.f32.mrb[0].mxu0
      %2744 = vmatprep.mubr.bf16.mxu0 0
      %2745 = vmatmul.mubr.bf16.gmra.mrb[0].mxu0 %v2546
      %v2746 = vpop.f32.mrb[0].mxu0
      %v2747 = vadd.f32 0.0, %v2746
      %v2748 = vpop.f32.mrb[0].mxu0
      %v2749 = vpop.f32.mrb[0].mxu0
      %v2750 = vadd.f32 0.0, %v2749
      %v2751 = vpop.f32.mrb[0].mxu0
      %2752 = vmatprep.mubr.bf16.mxu0 0
      %2753 = vmatmul.mubr.bf16.gmra.mrb[0].mxu0 %v2563
      %v2754 = vpop.f32.mrb[0].mxu0
      %v2755 = vadd.f32 0.0, %v2754
      %v2756 = vpop.f32.mrb[0].mxu0
      %v2757 = vpop.f32.mrb[0].mxu0
      %v2758 = vadd.f32 0.0, %v2757
      %v2759 = vpop.f32.mrb[0].mxu0
      %2760 = vmatprep.mubr.bf16.mxu0 0
      %2761 = vmatmul.mubr.bf16.gmra.mrb[0].mxu0 %v2580
      %v2762 = vpop.f32.mrb[0].mxu0
      %v2763 = vadd.f32 0.0, %v2762
      %v2764 = vpop.f32.mrb[0].mxu0
      %v2765 = vpop.f32.mrb[0].mxu0
      %v2766 = vadd.f32 0.0, %v2765
      %v2767 = vpop.f32.mrb[0].mxu0
      %2768 = vmatprep.mubr.bf16.mxu0 0
      %2769 = vmatmul.mubr.bf16.gmra.mrb[0].mxu0 %v2597
      %v2770 = vpop.f32.mrb[0].mxu0
      %v2771 = vadd.f32 0.0, %v2770
      %v2772 = vpop.f32.mrb[0].mxu0
      %v2773 = vpop.f32.mrb[0].mxu0
      %v2774 = vadd.f32 0.0, %v2773
      %v2775 = vpop.f32.mrb[0].mxu0
      %2776 = vmatprep.mubr.bf16.mxu0 0
      %2777 = vmatmul.mubr.bf16.gmra.mrb[0].mxu0 %v2614
      %v2778 = vpop.f32.mrb[0].mxu0
      %v2779 = vadd.f32 0.0, %v2778
      %v2780 = vpop.f32.mrb[0].mxu0
      %v2781 = vpop.f32.mrb[0].mxu0
      %v2782 = vadd.f32 0.0, %v2781
      %v2783 = vpop.f32.mrb[0].mxu0
      %2784 = vdwg.mxu0
      %v2785 = vadd.f32 %v2446, %v2723
      %v2786 = vadd.f32 %v2447, %v2726
      %v2787 = vadd.f32 %v2448, %v2731
      %v2788 = vadd.f32 %v2449, %v2734
      %v2789 = vadd.f32 %v2450, %v2739
      %v2790 = vadd.f32 %v2451, %v2742
      %v2791 = vadd.f32 %v2452, %v2747
      %v2792 = vadd.f32 %v2453, %v2750
      %v2793 = vadd.f32 %v2454, %v2755
      %v2794 = vadd.f32 %v2455, %v2758
      %v2795 = vadd.f32 %v2456, %v2763
      %v2796 = vadd.f32 %v2457, %v2766
      %v2797 = vadd.f32 %v2458, %v2771
      %v2798 = vadd.f32 %v2459, %v2774
      %v2799 = vadd.f32 %v2460, %v2779
      %v2800 = vadd.f32 %v2461, %v2782
      %v2817 = vrot.slane %v2463, 4
      %v2818 = vrot.slane %v2464, 4
      %v2819 = vsel %vm1072, %v2817, %v2818
      %v2820 = vrot.slane %v2465, 4
      %v2821 = vrot.slane %v2466, 4
      %v2822 = vsel %vm1072, %v2820, %v2821
      %v2823 = vrot.slane %v2467, 4
      %v2824 = vrot.slane %v2468, 4
      %v2825 = vsel %vm1072, %v2823, %v2824
      %v2826 = vrot.slane %v2469, 4
      %v2827 = vrot.slane %v2470, 4
      %v2828 = vsel %vm1072, %v2826, %v2827
      %v2829 = vrot.slane %v2471, 4
      %v2830 = vrot.slane %v2472, 4
      %v2831 = vsel %vm1072, %v2829, %v2830
      %v2832 = vrot.slane %v2473, 4
      %v2833 = vrot.slane %v2474, 4
      %v2834 = vsel %vm1072, %v2832, %v2833
      %v2835 = vrot.slane %v2475, 4
      %v2836 = vrot.slane %v2476, 4
      %v2837 = vsel %vm1072, %v2835, %v2836
      %v2838 = vrot.slane %v2477, 4
      %v2839 = vrot.slane %v2478, 4
      %v2840 = vsel %vm1072, %v2838, %v2839
      %s2849 = scalar_lea.vmem %s5, 448
      %v2850 = vld [vmem:[%s2849] sm:$0xf]
      %v2851 = vld [vmem:[%s2849 + $0x4] sm:$0xf]
      %v2852 = vld [vmem:[%s2849 + $0x8] sm:$0xf]
      %v2853 = vld [vmem:[%s2849 + $0xc] sm:$0xf]
      %v2854 = vld [vmem:[%s2849 + $0x10] sm:$0xf]
      %v2855 = vld [vmem:[%s2849 + $0x14] sm:$0xf]
      %v2856 = vld [vmem:[%s2849 + $0x18] sm:$0xf]
      %v2857 = vld [vmem:[%s2849 + $0x1c] sm:$0xf]
      %v2858 = vld [vmem:[%s2849 + $0x20] sm:$0xf]
      %v2859 = vld [vmem:[%s2849 + $0x24] sm:$0xf]
      %v2860 = vld [vmem:[%s2849 + $0x28] sm:$0xf]
      %v2861 = vld [vmem:[%s2849 + $0x2c] sm:$0xf]
      %v2862 = vld [vmem:[%s2849 + $0x30] sm:$0xf]
      %v2863 = vld [vmem:[%s2849 + $0x34] sm:$0xf]
      %v2864 = vld [vmem:[%s2849 + $0x38] sm:$0xf]
      %v2865 = vld [vmem:[%s2849 + $0x3c] sm:$0xf]
      %v2882 = vunpack.c.l.b16 %v2850
      %v2883 = vunpack.c.l.b16 %v2851
      %v2884 = vunpack.c.l.b16 %v2852
      %v2885 = vunpack.c.l.b16 %v2853
      %v2886 = vunpack.c.l.b16 %v2854
      %v2887 = vunpack.c.l.b16 %v2855
      %v2888 = vunpack.c.l.b16 %v2856
      %v2889 = vunpack.c.l.b16 %v2857
      %v2890 = vunpack.c.l.b16 %v2858
      %v2891 = vunpack.c.l.b16 %v2859
      %v2892 = vunpack.c.l.b16 %v2860
      %v2893 = vunpack.c.l.b16 %v2861
      %v2894 = vunpack.c.l.b16 %v2862
      %v2895 = vunpack.c.l.b16 %v2863
      %v2896 = vunpack.c.l.b16 %v2864
      %v2897 = vunpack.c.l.b16 %v2865
      %v2898 = vpack.c.b16 %v2883, %v2882
      %v2899 = vpack.c.b16 %v2885, %v2884
      %v2900 = vpack.c.b16 %v2887, %v2886
      %v2901 = vpack.c.b16 %v2889, %v2888
      %v2902 = vpack.c.b16 %v2891, %v2890
      %v2903 = vpack.c.b16 %v2893, %v2892
      %v2904 = vpack.c.b16 %v2895, %v2894
      %v2905 = vpack.c.b16 %v2897, %v2896
      %2914 = vmatprep.subr.bf16.mxu0 0
      %2915 = vmatpush1.bf16.msra.mxu0 %v2898
      %2916 = vmatprep.subr.bf16.mxu0 0
      %2917 = vmatpush1.bf16.msra.mxu0 %v2899
      %2918 = vmatprep.subr.bf16.mxu0 0
      %2919 = vmatpush1.bf16.msra.mxu0 %v2900
      %2920 = vmatprep.subr.bf16.mxu0 0
      %2921 = vmatpush1.bf16.msra.mxu0 %v2901
      %2922 = vmatprep.subr.bf16.mxu0 0
      %2923 = vmatpush1.bf16.msra.mxu0 %v2902
      %2924 = vmatprep.subr.bf16.mxu0 0
      %2925 = vmatpush1.bf16.msra.mxu0 %v2903
      %2926 = vmatprep.subr.bf16.mxu0 0
      %2927 = vmatpush1.bf16.msra.mxu0 %v2904
      %2928 = vmatprep.subr.bf16.mxu0 0
      %2929 = vmatpush1.bf16.msra.mxu0 %v2905
      %2930 = vmatprep.subr.bf16.mxu0 0
      %2931 = vmatpush1.bf16.msra.mxu0 0
      %2932 = vmatprep.subr.bf16.mxu0 0
      %2933 = vmatpush1.bf16.msra.mxu0 0
      %2934 = vmatprep.subr.bf16.mxu0 0
      %2935 = vmatpush1.bf16.msra.mxu0 0
      %2936 = vmatprep.subr.bf16.mxu0 0
      %2937 = vmatpush1.bf16.msra.mxu0 0
      %2938 = vmatprep.subr.bf16.mxu0 0
      %2939 = vmatpush1.bf16.msra.mxu0 0
      %2940 = vmatprep.subr.bf16.mxu0 0
      %2941 = vmatpush1.bf16.msra.mxu0 0
      %2942 = vmatprep.subr.bf16.mxu0 0
      %2943 = vmatpush1.bf16.msra.mxu0 0
      %2944 = vmatprep.subr.bf16.mxu0 0
      %2945 = vmatpush1.bf16.msra.mxu0 0
      %2946 = vmatprep.mubr.bf16.mxu0 0
      %2947 = vmatmul.mubr.bf16.gmra.mrb[0].mxu0 %v2819
      %v2948 = vpop.f32.mrb[0].mxu0
      %v2949 = vadd.f32 0.0, %v2948
      %v2950 = vpop.f32.mrb[0].mxu0
      %v2951 = vpop.f32.mrb[0].mxu0
      %v2952 = vadd.f32 0.0, %v2951
      %v2953 = vpop.f32.mrb[0].mxu0
      %2954 = vmatprep.mubr.bf16.mxu0 0
      %2955 = vmatmul.mubr.bf16.gmra.mrb[0].mxu0 %v2822
      %v2956 = vpop.f32.mrb[0].mxu0
      %v2957 = vadd.f32 0.0, %v2956
      %v2958 = vpop.f32.mrb[0].mxu0
      %v2959 = vpop.f32.mrb[0].mxu0
      %v2960 = vadd.f32 0.0, %v2959
      %v2961 = vpop.f32.mrb[0].mxu0
      %2962 = vmatprep.mubr.bf16.mxu0 0
      %2963 = vmatmul.mubr.bf16.gmra.mrb[0].mxu0 %v2825
      %v2964 = vpop.f32.mrb[0].mxu0
      %v2965 = vadd.f32 0.0, %v2964
      %v2966 = vpop.f32.mrb[0].mxu0
      %v2967 = vpop.f32.mrb[0].mxu0
      %v2968 = vadd.f32 0.0, %v2967
      %v2969 = vpop.f32.mrb[0].mxu0
      %2970 = vmatprep.mubr.bf16.mxu0 0
      %2971 = vmatmul.mubr.bf16.gmra.mrb[0].mxu0 %v2828
      %v2972 = vpop.f32.mrb[0].mxu0
      %v2973 = vadd.f32 0.0, %v2972
      %v2974 = vpop.f32.mrb[0].mxu0
      %v2975 = vpop.f32.mrb[0].mxu0
      %v2976 = vadd.f32 0.0, %v2975
      %v2977 = vpop.f32.mrb[0].mxu0
      %2978 = vmatprep.mubr.bf16.mxu0 0
      %2979 = vmatmul.mubr.bf16.gmra.mrb[0].mxu0 %v2831
      %v2980 = vpop.f32.mrb[0].mxu0
      %v2981 = vadd.f32 0.0, %v2980
      %v2982 = vpop.f32.mrb[0].mxu0
      %v2983 = vpop.f32.mrb[0].mxu0
      %v2984 = vadd.f32 0.0, %v2983
      %v2985 = vpop.f32.mrb[0].mxu0
      %2986 = vmatprep.mubr.bf16.mxu0 0
      %2987 = vmatmul.mubr.bf16.gmra.mrb[0].mxu0 %v2834
      %v2988 = vpop.f32.mrb[0].mxu0
      %v2989 = vadd.f32 0.0, %v2988
      %v2990 = vpop.f32.mrb[0].mxu0
      %v2991 = vpop.f32.mrb[0].mxu0
      %v2992 = vadd.f32 0.0, %v2991
      %v2993 = vpop.f32.mrb[0].mxu0
      %2994 = vmatprep.mubr.bf16.mxu0 0
      %2995 = vmatmul.mubr.bf16.gmra.mrb[0].mxu0 %v2837
      %v2996 = vpop.f32.mrb[0].mxu0
      %v2997 = vadd.f32 0.0, %v2996
      %v2998 = vpop.f32.mrb[0].mxu0
      %v2999 = vpop.f32.mrb[0].mxu0
      %v3000 = vadd.f32 0.0, %v2999
      %v3001 = vpop.f32.mrb[0].mxu0
      %3002 = vmatprep.mubr.bf16.mxu0 0
      %3003 = vmatmul.mubr.bf16.gmra.mrb[0].mxu0 %v2840
      %v3004 = vpop.f32.mrb[0].mxu0
      %v3005 = vadd.f32 0.0, %v3004
      %v3006 = vpop.f32.mrb[0].mxu0
      %v3007 = vpop.f32.mrb[0].mxu0
      %v3008 = vadd.f32 0.0, %v3007
      %v3009 = vpop.f32.mrb[0].mxu0
      %3010 = vdwg.mxu0
      %v3011 = vadd.f32 %v2785, %v2949
      %v3012 = vadd.f32 %v2786, %v2952
      %v3013 = vadd.f32 %v2787, %v2957
      %v3014 = vadd.f32 %v2788, %v2960
      %v3015 = vadd.f32 %v2789, %v2965
      %v3016 = vadd.f32 %v2790, %v2968
      %v3017 = vadd.f32 %v2791, %v2973
      %v3018 = vadd.f32 %v2792, %v2976
      %v3019 = vadd.f32 %v2793, %v2981
      %v3020 = vadd.f32 %v2794, %v2984
      %v3021 = vadd.f32 %v2795, %v2989
      %v3022 = vadd.f32 %v2796, %v2992
      %v3023 = vadd.f32 %v2797, %v2997
      %v3024 = vadd.f32 %v2798, %v3000
      %v3025 = vadd.f32 %v2799, %v3005
      %v3026 = vadd.f32 %v2800, %v3008
      %v3027 = vrot.slane %v2480, 4
      %v3028 = vrot.slane %v2483, 5
      %v3029 = vor.u32 %v3027, %v3028
      %v3030 = vrot.slane %v2488, 4
      %v3031 = vrot.slane %v2491, 5
      %v3032 = vor.u32 %v3030, %v3031
      %v3033 = vsel %vm1412, %v3029, %v3032
      %v3034 = vrot.slane %v2497, 4
      %v3035 = vrot.slane %v2500, 5
      %v3036 = vor.u32 %v3034, %v3035
      %v3037 = vrot.slane %v2505, 4
      %v3038 = vrot.slane %v2508, 5
      %v3039 = vor.u32 %v3037, %v3038
      %v3040 = vsel %vm1412, %v3036, %v3039
      %v3041 = vrot.slane %v2514, 4
      %v3042 = vrot.slane %v2517, 5
      %v3043 = vor.u32 %v3041, %v3042
      %v3044 = vrot.slane %v2522, 4
      %v3045 = vrot.slane %v2525, 5
      %v3046 = vor.u32 %v3044, %v3045
      %v3047 = vsel %vm1412, %v3043, %v3046
      %v3048 = vrot.slane %v2531, 4
      %v3049 = vrot.slane %v2534, 5
      %v3050 = vor.u32 %v3048, %v3049
      %v3051 = vrot.slane %v2539, 4
      %v3052 = vrot.slane %v2542, 5
      %v3053 = vor.u32 %v3051, %v3052
      %v3054 = vsel %vm1412, %v3050, %v3053
      %v3055 = vrot.slane %v2548, 4
      %v3056 = vrot.slane %v2551, 5
      %v3057 = vor.u32 %v3055, %v3056
      %v3058 = vrot.slane %v2556, 4
      %v3059 = vrot.slane %v2559, 5
      %v3060 = vor.u32 %v3058, %v3059
      %v3061 = vsel %vm1412, %v3057, %v3060
      %v3062 = vrot.slane %v2565, 4
      %v3063 = vrot.slane %v2568, 5
      %v3064 = vor.u32 %v3062, %v3063
      %v3065 = vrot.slane %v2573, 4
      %v3066 = vrot.slane %v2576, 5
      %v3067 = vor.u32 %v3065, %v3066
      %v3068 = vsel %vm1412, %v3064, %v3067
      %v3069 = vrot.slane %v2582, 4
      %v3070 = vrot.slane %v2585, 5
      %v3071 = vor.u32 %v3069, %v3070
      %v3072 = vrot.slane %v2590, 4
      %v3073 = vrot.slane %v2593, 5
      %v3074 = vor.u32 %v3072, %v3073
      %v3075 = vsel %vm1412, %v3071, %v3074
      %v3076 = vrot.slane %v2599, 4
      %v3077 = vrot.slane %v2602, 5
      %v3078 = vor.u32 %v3076, %v3077
      %v3079 = vrot.slane %v2607, 4
      %v3080 = vrot.slane %v2610, 5
      %v3081 = vor.u32 %v3079, %v3080
      %v3082 = vsel %vm1412, %v3078, %v3081
      %s3091 = scalar_lea.vmem %s5, 512
      %v3092 = vld [vmem:[%s3091] sm:$0xf]
      %v3093 = vld [vmem:[%s3091 + $0x4] sm:$0xf]
      %v3094 = vld [vmem:[%s3091 + $0x8] sm:$0xf]
      %v3095 = vld [vmem:[%s3091 + $0xc] sm:$0xf]
      %v3096 = vld [vmem:[%s3091 + $0x10] sm:$0xf]
      %v3097 = vld [vmem:[%s3091 + $0x14] sm:$0xf]
      %v3098 = vld [vmem:[%s3091 + $0x18] sm:$0xf]
      %v3099 = vld [vmem:[%s3091 + $0x1c] sm:$0xf]
      %v3100 = vld [vmem:[%s3091 + $0x20] sm:$0xf]
      %v3101 = vld [vmem:[%s3091 + $0x24] sm:$0xf]
      %v3102 = vld [vmem:[%s3091 + $0x28] sm:$0xf]
      %v3103 = vld [vmem:[%s3091 + $0x2c] sm:$0xf]
      %v3104 = vld [vmem:[%s3091 + $0x30] sm:$0xf]
      %v3105 = vld [vmem:[%s3091 + $0x34] sm:$0xf]
      %v3106 = vld [vmem:[%s3091 + $0x38] sm:$0xf]
      %v3107 = vld [vmem:[%s3091 + $0x3c] sm:$0xf]
      %v3124 = vunpack.c.l.b16 %v3092
      %v3125 = vunpack.c.l.b16 %v3093
      %v3126 = vunpack.c.l.b16 %v3094
      %v3127 = vunpack.c.l.b16 %v3095
      %v3128 = vunpack.c.l.b16 %v3096
      %v3129 = vunpack.c.l.b16 %v3097
      %v3130 = vunpack.c.l.b16 %v3098
      %v3131 = vunpack.c.l.b16 %v3099
      %v3132 = vunpack.c.l.b16 %v3100
      %v3133 = vunpack.c.l.b16 %v3101
      %v3134 = vunpack.c.l.b16 %v3102
      %v3135 = vunpack.c.l.b16 %v3103
      %v3136 = vunpack.c.l.b16 %v3104
      %v3137 = vunpack.c.l.b16 %v3105
      %v3138 = vunpack.c.l.b16 %v3106
      %v3139 = vunpack.c.l.b16 %v3107
      %v3140 = vpack.c.b16 %v3125, %v3124
      %v3141 = vpack.c.b16 %v3127, %v3126
      %v3142 = vpack.c.b16 %v3129, %v3128
      %v3143 = vpack.c.b16 %v3131, %v3130
      %v3144 = vpack.c.b16 %v3133, %v3132
      %v3145 = vpack.c.b16 %v3135, %v3134
      %v3146 = vpack.c.b16 %v3137, %v3136
      %v3147 = vpack.c.b16 %v3139, %v3138
      %3156 = vmatprep.subr.bf16.mxu0 0
      %3157 = vmatpush1.bf16.msra.mxu0 %v3140
      %3158 = vmatprep.subr.bf16.mxu0 0
      %3159 = vmatpush1.bf16.msra.mxu0 %v3141
      %3160 = vmatprep.subr.bf16.mxu0 0
      %3161 = vmatpush1.bf16.msra.mxu0 %v3142
      %3162 = vmatprep.subr.bf16.mxu0 0
      %3163 = vmatpush1.bf16.msra.mxu0 %v3143
      %3164 = vmatprep.subr.bf16.mxu0 0
      %3165 = vmatpush1.bf16.msra.mxu0 %v3144
      %3166 = vmatprep.subr.bf16.mxu0 0
      %3167 = vmatpush1.bf16.msra.mxu0 %v3145
      %3168 = vmatprep.subr.bf16.mxu0 0
      %3169 = vmatpush1.bf16.msra.mxu0 %v3146
      %3170 = vmatprep.subr.bf16.mxu0 0
      %3171 = vmatpush1.bf16.msra.mxu0 %v3147
      %3172 = vmatprep.subr.bf16.mxu0 0
      %3173 = vmatpush1.bf16.msra.mxu0 0
      %3174 = vmatprep.subr.bf16.mxu0 0
      %3175 = vmatpush1.bf16.msra.mxu0 0
      %3176 = vmatprep.subr.bf16.mxu0 0
      %3177 = vmatpush1.bf16.msra.mxu0 0
      %3178 = vmatprep.subr.bf16.mxu0 0
      %3179 = vmatpush1.bf16.msra.mxu0 0
      %3180 = vmatprep.subr.bf16.mxu0 0
      %3181 = vmatpush1.bf16.msra.mxu0 0
      %3182 = vmatprep.subr.bf16.mxu0 0
      %3183 = vmatpush1.bf16.msra.mxu0 0
      %3184 = vmatprep.subr.bf16.mxu0 0
      %3185 = vmatpush1.bf16.msra.mxu0 0
      %3186 = vmatprep.subr.bf16.mxu0 0
      %3187 = vmatpush1.bf16.msra.mxu0 0
      %3188 = vmatprep.mubr.bf16.mxu0 0
      %3189 = vmatmul.mubr.bf16.gmra.mrb[0].mxu0 %v3033
      %v3190 = vpop.f32.mrb[0].mxu0
      %v3191 = vadd.f32 0.0, %v3190
      %v3192 = vpop.f32.mrb[0].mxu0
      %v3193 = vpop.f32.mrb[0].mxu0
      %v3194 = vadd.f32 0.0, %v3193
      %v3195 = vpop.f32.mrb[0].mxu0
      %3196 = vmatprep.mubr.bf16.mxu0 0
      %3197 = vmatmul.mubr.bf16.gmra.mrb[0].mxu0 %v3040
      %v3198 = vpop.f32.mrb[0].mxu0
      %v3199 = vadd.f32 0.0, %v3198
      %v3200 = vpop.f32.mrb[0].mxu0
      %v3201 = vpop.f32.mrb[0].mxu0
      %v3202 = vadd.f32 0.0, %v3201
      %v3203 = vpop.f32.mrb[0].mxu0
      %3204 = vmatprep.mubr.bf16.mxu0 0
      %3205 = vmatmul.mubr.bf16.gmra.mrb[0].mxu0 %v3047
      %v3206 = vpop.f32.mrb[0].mxu0
      %v3207 = vadd.f32 0.0, %v3206
      %v3208 = vpop.f32.mrb[0].mxu0
      %v3209 = vpop.f32.mrb[0].mxu0
      %v3210 = vadd.f32 0.0, %v3209
      %v3211 = vpop.f32.mrb[0].mxu0
      %3212 = vmatprep.mubr.bf16.mxu0 0
      %3213 = vmatmul.mubr.bf16.gmra.mrb[0].mxu0 %v3054
      %v3214 = vpop.f32.mrb[0].mxu0
      %v3215 = vadd.f32 0.0, %v3214
      %v3216 = vpop.f32.mrb[0].mxu0
      %v3217 = vpop.f32.mrb[0].mxu0
      %v3218 = vadd.f32 0.0, %v3217
      %v3219 = vpop.f32.mrb[0].mxu0
      %3220 = vmatprep.mubr.bf16.mxu0 0
      %3221 = vmatmul.mubr.bf16.gmra.mrb[0].mxu0 %v3061
      %v3222 = vpop.f32.mrb[0].mxu0
      %v3223 = vadd.f32 0.0, %v3222
      %v3224 = vpop.f32.mrb[0].mxu0
      %v3225 = vpop.f32.mrb[0].mxu0
      %v3226 = vadd.f32 0.0, %v3225
      %v3227 = vpop.f32.mrb[0].mxu0
      %3228 = vmatprep.mubr.bf16.mxu0 0
      %3229 = vmatmul.mubr.bf16.gmra.mrb[0].mxu0 %v3068
      %v3230 = vpop.f32.mrb[0].mxu0
      %v3231 = vadd.f32 0.0, %v3230
      %v3232 = vpop.f32.mrb[0].mxu0
      %v3233 = vpop.f32.mrb[0].mxu0
      %v3234 = vadd.f32 0.0, %v3233
      %v3235 = vpop.f32.mrb[0].mxu0
      %3236 = vmatprep.mubr.bf16.mxu0 0
      %3237 = vmatmul.mubr.bf16.gmra.mrb[0].mxu0 %v3075
      %v3238 = vpop.f32.mrb[0].mxu0
      %v3239 = vadd.f32 0.0, %v3238
      %v3240 = vpop.f32.mrb[0].mxu0
      %v3241 = vpop.f32.mrb[0].mxu0
      %v3242 = vadd.f32 0.0, %v3241
      %v3243 = vpop.f32.mrb[0].mxu0
      %3244 = vmatprep.mubr.bf16.mxu0 0
      %3245 = vmatmul.mubr.bf16.gmra.mrb[0].mxu0 %v3082
      %v3246 = vpop.f32.mrb[0].mxu0
      %v3247 = vadd.f32 0.0, %v3246
      %v3248 = vpop.f32.mrb[0].mxu0
      %v3249 = vpop.f32.mrb[0].mxu0
      %v3250 = vadd.f32 0.0, %v3249
      %v3251 = vpop.f32.mrb[0].mxu0
      %3252 = vdwg.mxu0
      %v3253 = vadd.f32 %v3011, %v3191
      %v3254 = vadd.f32 %v3012, %v3194
      %v3255 = vadd.f32 %v3013, %v3199
      %v3256 = vadd.f32 %v3014, %v3202
      %v3257 = vadd.f32 %v3015, %v3207
      %v3258 = vadd.f32 %v3016, %v3210
      %v3259 = vadd.f32 %v3017, %v3215
      %v3260 = vadd.f32 %v3018, %v3218
      %v3261 = vadd.f32 %v3019, %v3223
      %v3262 = vadd.f32 %v3020, %v3226
      %v3263 = vadd.f32 %v3021, %v3231
      %v3264 = vadd.f32 %v3022, %v3234
      %v3265 = vadd.f32 %v3023, %v3239
      %v3266 = vadd.f32 %v3024, %v3242
      %v3267 = vadd.f32 %v3025, %v3247
      %v3268 = vadd.f32 %v3026, %v3250
      %v3269 = vld [vmem:[%s6] sm:$0x1]
      %v3271 = vlaneseq
      %v3272 = vshrl.u32 %v3271, 7
      %v3273 = vsub.s32 0, %v3272
      %v3274 = vrot.slane %v3269, %v3273
      %v3276 = vadd.f32 %v3253, %v3274
      %v3277 = vadd.f32 %v3254, %v3274
      %v3278 = vadd.f32 %v3255, %v3274
      %v3279 = vadd.f32 %v3256, %v3274
      %v3280 = vadd.f32 %v3257, %v3274
      %v3281 = vadd.f32 %v3258, %v3274
      %v3282 = vadd.f32 %v3259, %v3274
      %v3283 = vadd.f32 %v3260, %v3274
      %v3284 = vadd.f32 %v3261, %v3274
      %v3285 = vadd.f32 %v3262, %v3274
      %v3286 = vadd.f32 %v3263, %v3274
      %v3287 = vadd.f32 %v3264, %v3274
      %v3288 = vadd.f32 %v3265, %v3274
      %v3289 = vadd.f32 %v3266, %v3274
      %v3290 = vadd.f32 %v3267, %v3274
      %v3291 = vadd.f32 %v3268, %v3274
      %v3292 = vmax.f32 %v3276, 0.0
      %v3293 = vmax.f32 %v3277, 0.0
      %v3294 = vmax.f32 %v3278, 0.0
      %v3295 = vmax.f32 %v3279, 0.0
      %v3296 = vmax.f32 %v3280, 0.0
      %v3297 = vmax.f32 %v3281, 0.0
      %v3298 = vmax.f32 %v3282, 0.0
      %v3299 = vmax.f32 %v3283, 0.0
      %v3300 = vmax.f32 %v3284, 0.0
      %v3301 = vmax.f32 %v3285, 0.0
      %v3302 = vmax.f32 %v3286, 0.0
      %v3303 = vmax.f32 %v3287, 0.0
      %v3304 = vmax.f32 %v3288, 0.0
      %v3305 = vmax.f32 %v3289, 0.0
      %v3306 = vmax.f32 %v3290, 0.0
      %v3307 = vmax.f32 %v3291, 0.0
      %v3308 = vpack.c.bf16 %v3293, %v3292
      %v3309 = vpack.c.bf16 %v3295, %v3294
      %v3310 = vpack.c.bf16 %v3297, %v3296
      %v3311 = vpack.c.bf16 %v3299, %v3298
      %v3312 = vpack.c.bf16 %v3301, %v3300
      %v3313 = vpack.c.bf16 %v3303, %v3302
      %v3314 = vpack.c.bf16 %v3305, %v3304
      %v3315 = vpack.c.bf16 %v3307, %v3306
      %v3316 = vld [vmem:[%s7] sm:$0xf]
      %v3317 = vld [vmem:[%s7 + $0x4] sm:$0xf]
      %v3318 = vld [vmem:[%s7 + $0x8] sm:$0xf]
      %v3319 = vld [vmem:[%s7 + $0xc] sm:$0xf]
      %v3320 = vld [vmem:[%s7 + $0x10] sm:$0xf]
      %v3321 = vld [vmem:[%s7 + $0x14] sm:$0xf]
      %v3322 = vld [vmem:[%s7 + $0x18] sm:$0xf]
      %v3323 = vld [vmem:[%s7 + $0x1c] sm:$0xf]
      %v3324 = vld [vmem:[%s7 + $0x20] sm:$0xf]
      %v3325 = vld [vmem:[%s7 + $0x24] sm:$0xf]
      %v3326 = vld [vmem:[%s7 + $0x28] sm:$0xf]
      %v3327 = vld [vmem:[%s7 + $0x2c] sm:$0xf]
      %v3328 = vld [vmem:[%s7 + $0x30] sm:$0xf]
      %v3329 = vld [vmem:[%s7 + $0x34] sm:$0xf]
      %v3330 = vld [vmem:[%s7 + $0x38] sm:$0xf]
      %v3331 = vld [vmem:[%s7 + $0x3c] sm:$0xf]
      %v3332 = vld [vmem:[%s8] sm:$0x1]
      %v3334 = vlaneseq
      %v3335 = vshrl.u32 %v3334, 7
      %v3336 = vsub.s32 0, %v3335
      %v3337 = vrot.slane %v3332, %v3336
      %v3355 = vunpack.c.l.b16 %v3316
      %v3356 = vunpack.c.l.b16 %v3317
      %v3357 = vunpack.c.l.b16 %v3318
      %v3358 = vunpack.c.l.b16 %v3319
      %v3359 = vunpack.c.l.b16 %v3320
      %v3360 = vunpack.c.l.b16 %v3321
      %v3361 = vunpack.c.l.b16 %v3322
      %v3362 = vunpack.c.l.b16 %v3323
      %v3363 = vunpack.c.l.b16 %v3324
      %v3364 = vunpack.c.l.b16 %v3325
      %v3365 = vunpack.c.l.b16 %v3326
      %v3366 = vunpack.c.l.b16 %v3327
      %v3367 = vunpack.c.l.b16 %v3328
      %v3368 = vunpack.c.l.b16 %v3329
      %v3369 = vunpack.c.l.b16 %v3330
      %v3370 = vunpack.c.l.b16 %v3331
      %v3371 = vpack.c.b16 %v3356, %v3355
      %v3372 = vpack.c.b16 %v3358, %v3357
      %v3373 = vpack.c.b16 %v3360, %v3359
      %v3374 = vpack.c.b16 %v3362, %v3361
      %v3375 = vpack.c.b16 %v3364, %v3363
      %v3376 = vpack.c.b16 %v3366, %v3365
      %v3377 = vpack.c.b16 %v3368, %v3367
      %v3378 = vpack.c.b16 %v3370, %v3369
      %3387 = vmatprep.subr.bf16.mxu0 0
      %3388 = vmatpush1.bf16.msra.mxu0 %v3371
      %3389 = vmatprep.subr.bf16.mxu0 0
      %3390 = vmatpush1.bf16.msra.mxu0 %v3372
      %3391 = vmatprep.subr.bf16.mxu0 0
      %3392 = vmatpush1.bf16.msra.mxu0 %v3373
      %3393 = vmatprep.subr.bf16.mxu0 0
      %3394 = vmatpush1.bf16.msra.mxu0 %v3374
      %3395 = vmatprep.subr.bf16.mxu0 0
      %3396 = vmatpush1.bf16.msra.mxu0 %v3375
      %3397 = vmatprep.subr.bf16.mxu0 0
      %3398 = vmatpush1.bf16.msra.mxu0 %v3376
      %3399 = vmatprep.subr.bf16.mxu0 0
      %3400 = vmatpush1.bf16.msra.mxu0 %v3377
      %3401 = vmatprep.subr.bf16.mxu0 0
      %3402 = vmatpush1.bf16.msra.mxu0 %v3378
      %3403 = vmatprep.subr.bf16.mxu0 0
      %3404 = vmatpush1.bf16.msra.mxu0 0
      %3405 = vmatprep.subr.bf16.mxu0 0
      %3406 = vmatpush1.bf16.msra.mxu0 0
      %3407 = vmatprep.subr.bf16.mxu0 0
      %3408 = vmatpush1.bf16.msra.mxu0 0
      %3409 = vmatprep.subr.bf16.mxu0 0
      %3410 = vmatpush1.bf16.msra.mxu0 0
      %3411 = vmatprep.subr.bf16.mxu0 0
      %3412 = vmatpush1.bf16.msra.mxu0 0
      %3413 = vmatprep.subr.bf16.mxu0 0
      %3414 = vmatpush1.bf16.msra.mxu0 0
      %3415 = vmatprep.subr.bf16.mxu0 0
      %3416 = vmatpush1.bf16.msra.mxu0 0
      %3417 = vmatprep.subr.bf16.mxu0 0
      %3418 = vmatpush1.bf16.msra.mxu0 0
      %3419 = vmatprep.mubr.bf16.mxu0 0
      %3420 = vmatmul.mubr.bf16.gmra.mrb[0].mxu0 %v3308
      %v3421 = vpop.f32.mrb[0].mxu0
      %v3422 = vadd.f32 %v3337, %v3421
      %v3423 = vpop.f32.mrb[0].mxu0
      %v3424 = vpop.f32.mrb[0].mxu0
      %v3425 = vadd.f32 %v3337, %v3424
      %v3426 = vpop.f32.mrb[0].mxu0
      %3427 = vmatprep.mubr.bf16.mxu0 0
      %3428 = vmatmul.mubr.bf16.gmra.mrb[0].mxu0 %v3309
      %v3429 = vpop.f32.mrb[0].mxu0
      %v3430 = vadd.f32 %v3337, %v3429
      %v3431 = vpop.f32.mrb[0].mxu0
      %v3432 = vpop.f32.mrb[0].mxu0
      %v3433 = vadd.f32 %v3337, %v3432
      %v3434 = vpop.f32.mrb[0].mxu0
      %3435 = vmatprep.mubr.bf16.mxu0 0
      %3436 = vmatmul.mubr.bf16.gmra.mrb[0].mxu0 %v3310
      %v3437 = vpop.f32.mrb[0].mxu0
      %v3438 = vadd.f32 %v3337, %v3437
      %v3439 = vpop.f32.mrb[0].mxu0
      %v3440 = vpop.f32.mrb[0].mxu0
      %v3441 = vadd.f32 %v3337, %v3440
      %v3442 = vpop.f32.mrb[0].mxu0
      %3443 = vmatprep.mubr.bf16.mxu0 0
      %3444 = vmatmul.mubr.bf16.gmra.mrb[0].mxu0 %v3311
      %v3445 = vpop.f32.mrb[0].mxu0
      %v3446 = vadd.f32 %v3337, %v3445
      %v3447 = vpop.f32.mrb[0].mxu0
      %v3448 = vpop.f32.mrb[0].mxu0
      %v3449 = vadd.f32 %v3337, %v3448
      %v3450 = vpop.f32.mrb[0].mxu0
      %3451 = vmatprep.mubr.bf16.mxu0 0
      %3452 = vmatmul.mubr.bf16.gmra.mrb[0].mxu0 %v3312
      %v3453 = vpop.f32.mrb[0].mxu0
      %v3454 = vadd.f32 %v3337, %v3453
      %v3455 = vpop.f32.mrb[0].mxu0
      %v3456 = vpop.f32.mrb[0].mxu0
      %v3457 = vadd.f32 %v3337, %v3456
      %v3458 = vpop.f32.mrb[0].mxu0
      %3459 = vmatprep.mubr.bf16.mxu0 0
      %3460 = vmatmul.mubr.bf16.gmra.mrb[0].mxu0 %v3313
      %v3461 = vpop.f32.mrb[0].mxu0
      %v3462 = vadd.f32 %v3337, %v3461
      %v3463 = vpop.f32.mrb[0].mxu0
      %v3464 = vpop.f32.mrb[0].mxu0
      %v3465 = vadd.f32 %v3337, %v3464
      %v3466 = vpop.f32.mrb[0].mxu0
      %3467 = vmatprep.mubr.bf16.mxu0 0
      %3468 = vmatmul.mubr.bf16.gmra.mrb[0].mxu0 %v3314
      %v3469 = vpop.f32.mrb[0].mxu0
      %v3470 = vadd.f32 %v3337, %v3469
      %v3471 = vpop.f32.mrb[0].mxu0
      %v3472 = vpop.f32.mrb[0].mxu0
      %v3473 = vadd.f32 %v3337, %v3472
      %v3474 = vpop.f32.mrb[0].mxu0
      %3475 = vmatprep.mubr.bf16.mxu0 0
      %3476 = vmatmul.mubr.bf16.gmra.mrb[0].mxu0 %v3315
      %v3477 = vpop.f32.mrb[0].mxu0
      %v3478 = vadd.f32 %v3337, %v3477
      %v3479 = vpop.f32.mrb[0].mxu0
      %v3480 = vpop.f32.mrb[0].mxu0
      %v3481 = vadd.f32 %v3337, %v3480
      %v3482 = vpop.f32.mrb[0].mxu0
      %3483 = vdwg.mxu0
      %v3484 = vld [vmem:[%s454] sm:$0xf]
      %v3485 = vld [vmem:[%s454 + $0x4] sm:$0xf]
      %v3486 = vld [vmem:[%s454 + $0x8] sm:$0xf]
      %v3487 = vld [vmem:[%s454 + $0xc] sm:$0xf]
      %v3488 = vld [vmem:[%s454 + $0x10] sm:$0xf]
      %v3489 = vld [vmem:[%s454 + $0x14] sm:$0xf]
      %v3490 = vld [vmem:[%s454 + $0x18] sm:$0xf]
      %v3491 = vld [vmem:[%s454 + $0x1c] sm:$0xf]
      %v3492 = vld [vmem:[%s454 + $0x20] sm:$0xf]
      %v3493 = vld [vmem:[%s454 + $0x24] sm:$0xf]
      %v3494 = vld [vmem:[%s454 + $0x28] sm:$0xf]
      %v3495 = vld [vmem:[%s454 + $0x2c] sm:$0xf]
      %v3496 = vld [vmem:[%s454 + $0x30] sm:$0xf]
      %v3497 = vld [vmem:[%s454 + $0x34] sm:$0xf]
      %v3498 = vld [vmem:[%s454 + $0x38] sm:$0xf]
      %v3499 = vld [vmem:[%s454 + $0x3c] sm:$0xf]
      %v3500 = vunpack.c.l.bf16 %v3484
      %v3501 = vunpack.c.l.bf16 %v3485
      %v3502 = vunpack.c.l.bf16 %v3486
      %v3503 = vunpack.c.l.bf16 %v3487
      %v3504 = vunpack.c.l.bf16 %v3488
      %v3505 = vunpack.c.l.bf16 %v3489
      %v3506 = vunpack.c.l.bf16 %v3490
      %v3507 = vunpack.c.l.bf16 %v3491
      %v3508 = vunpack.c.l.bf16 %v3492
      %v3509 = vunpack.c.l.bf16 %v3493
      %v3510 = vunpack.c.l.bf16 %v3494
      %v3511 = vunpack.c.l.bf16 %v3495
      %v3512 = vunpack.c.l.bf16 %v3496
      %v3513 = vunpack.c.l.bf16 %v3497
      %v3514 = vunpack.c.l.bf16 %v3498
      %v3515 = vunpack.c.l.bf16 %v3499
      %v3516 = vadd.f32 %v3422, %v3500
      %v3517 = vadd.f32 %v3425, %v3501
      %v3518 = vadd.f32 %v3430, %v3502
      %v3519 = vadd.f32 %v3433, %v3503
      %v3520 = vadd.f32 %v3438, %v3504
      %v3521 = vadd.f32 %v3441, %v3505
      %v3522 = vadd.f32 %v3446, %v3506
      %v3523 = vadd.f32 %v3449, %v3507
      %v3524 = vadd.f32 %v3454, %v3508
      %v3525 = vadd.f32 %v3457, %v3509
      %v3526 = vadd.f32 %v3462, %v3510
      %v3527 = vadd.f32 %v3465, %v3511
      %v3528 = vadd.f32 %v3470, %v3512
      %v3529 = vadd.f32 %v3473, %v3513
      %v3530 = vadd.f32 %v3478, %v3514
      %v3531 = vadd.f32 %v3481, %v3515
      %v3532 = vmax.f32 %v3516, 0.0
      %v3533 = vmax.f32 %v3517, 0.0
      %v3534 = vmax.f32 %v3518, 0.0
      %v3535 = vmax.f32 %v3519, 0.0
      %v3536 = vmax.f32 %v3520, 0.0
      %v3537 = vmax.f32 %v3521, 0.0
      %v3538 = vmax.f32 %v3522, 0.0
      %v3539 = vmax.f32 %v3523, 0.0
      %v3540 = vmax.f32 %v3524, 0.0
      %v3541 = vmax.f32 %v3525, 0.0
      %v3542 = vmax.f32 %v3526, 0.0
      %v3543 = vmax.f32 %v3527, 0.0
      %v3544 = vmax.f32 %v3528, 0.0
      %v3545 = vmax.f32 %v3529, 0.0
      %v3546 = vmax.f32 %v3530, 0.0
      %v3547 = vmax.f32 %v3531, 0.0
      %v3548 = vpack.c.bf16 %v3533, %v3532
      %v3549 = vpack.c.bf16 %v3535, %v3534
      %v3550 = vpack.c.bf16 %v3537, %v3536
      %v3551 = vpack.c.bf16 %v3539, %v3538
      %v3552 = vpack.c.bf16 %v3541, %v3540
      %v3553 = vpack.c.bf16 %v3543, %v3542
      %v3554 = vpack.c.bf16 %v3545, %v3544
      %v3555 = vpack.c.bf16 %v3547, %v3546
      %v3564 = vunpack.c.l.b16 %v3548
      %v3565 = vunpack.c.h.b16 %v3548
      %v3566 = vunpack.c.l.b16 %v3549
      %v3567 = vunpack.c.h.b16 %v3549
      %v3568 = vunpack.c.l.b16 %v3550
      %v3569 = vunpack.c.h.b16 %v3550
      %v3570 = vunpack.c.l.b16 %v3551
      %v3571 = vunpack.c.h.b16 %v3551
      %v3572 = vunpack.c.l.b16 %v3552
      %v3573 = vunpack.c.h.b16 %v3552
      %v3574 = vunpack.c.l.b16 %v3553
      %v3575 = vunpack.c.h.b16 %v3553
      %v3576 = vunpack.c.l.b16 %v3554
      %v3577 = vunpack.c.h.b16 %v3554
      %v3578 = vunpack.c.l.b16 %v3555
      %v3579 = vunpack.c.h.b16 %v3555
      %v3580 = vpack.c.b16 %v3564, %v3564
      %v3581 = vpack.c.b16 %v3565, %v3565
      %v3582 = vpack.c.b16 %v3566, %v3566
      %v3583 = vpack.c.b16 %v3567, %v3567
      %v3584 = vpack.c.b16 %v3568, %v3568
      %v3585 = vpack.c.b16 %v3569, %v3569
      %v3586 = vpack.c.b16 %v3570, %v3570
      %v3587 = vpack.c.b16 %v3571, %v3571
      %v3588 = vpack.c.b16 %v3572, %v3572
      %v3589 = vpack.c.b16 %v3573, %v3573
      %v3590 = vpack.c.b16 %v3574, %v3574
      %v3591 = vpack.c.b16 %v3575, %v3575
      %v3592 = vpack.c.b16 %v3576, %v3576
      %v3593 = vpack.c.b16 %v3577, %v3577
      %v3594 = vpack.c.b16 %v3578, %v3578
      %v3595 = vpack.c.b16 %v3579, %v3579
      %3612 = vst [vmem:[%s499] sm:$0xf] %v3580
      %3613 = vst [vmem:[%s499 + $0x4] sm:$0xf] %v3581
      %3614 = vst [vmem:[%s499 + $0x8] sm:$0xf] %v3582
      %3615 = vst [vmem:[%s499 + $0xc] sm:$0xf] %v3583
      %3616 = vst [vmem:[%s499 + $0x10] sm:$0xf] %v3584
      %3617 = vst [vmem:[%s499 + $0x14] sm:$0xf] %v3585
      %3618 = vst [vmem:[%s499 + $0x18] sm:$0xf] %v3586
      %3619 = vst [vmem:[%s499 + $0x1c] sm:$0xf] %v3587
      %3620 = vst [vmem:[%s499 + $0x20] sm:$0xf] %v3588
      %3621 = vst [vmem:[%s499 + $0x24] sm:$0xf] %v3589
      %3622 = vst [vmem:[%s499 + $0x28] sm:$0xf] %v3590
      %3623 = vst [vmem:[%s499 + $0x2c] sm:$0xf] %v3591
      %3624 = vst [vmem:[%s499 + $0x30] sm:$0xf] %v3592
      %3625 = vst [vmem:[%s499 + $0x34] sm:$0xf] %v3593
      %3626 = vst [vmem:[%s499 + $0x38] sm:$0xf] %v3594
      %3627 = vst [vmem:[%s499 + $0x3c] sm:$0xf] %v3595
      %s3628 = smul.u32 8, %s25
      %p3629 = scmp.lt.s32.totalorder %s24, 1
      %s3630 = scalar_select %p3629, %s24, 1
      %p3631 = scmp.lt.s32.totalorder %s3628, 15
      %s3632 = scalar_select %p3631, %s3628, 15
      %s3633 = smul.addr %s3632, 2
      %s3634 = smul.addr %s3630, 32
      %s3635 = sadd.s32 %s3633, %s3634
      %s3636 = smul.addr %s3635, 4
      %s3637 = scalar_lea.vmem %s9, %s3636
      // Predicated region
      $region65: #{bottleneck_forward.1} parent=55 // pred_check
        %p3638 = pneg %p278
      $region66: #{bottleneck_forward.1} parent=55 // pred_check_branch
        %3640 = sbr.rel (%p3638) target = $region68
      $region67: #{bottleneck_forward.1} parent=55 // pred_region
        %s3641 = smul.u32 8, %s25
      $region68: #{bottleneck_forward.1} parent=55 // pred_fallthru
        _
    $region56: #{bottleneck_forward.1} parent=5 // pred_fallthru
      _
    %p3642 = scmp.le.s32.totalorder 2, %s15
    // Predicated region
    $region69: #{bottleneck_forward.1} parent=5 // pred_check
      %p3643 = pneg %p3642
    $region70: #{bottleneck_forward.1} parent=5 // pred_check_branch
      %3645 = sbr.rel (%p3643) target = $region72
    $region71: #{bottleneck_forward.1} parent=5 // pred_region
      %s3646 = ssub.s32 %s15, 2
      // Predicated region
      $region73: #{bottleneck_forward.1} parent=71 // pred_check
        %p3647 = pneg %p284
      $region74: #{bottleneck_forward.1} parent=71 // pred_check_branch
        %3649 = sbr.rel (%p3647) target = $region76
      $region75: #{bottleneck_forward.1} parent=71 // pred_region
        %s3650 = smul.u32 8, %s27
        %p3651 = scmp.lt.s32.totalorder %s26, 1
        %s3652 = scalar_select %p3651, %s26, 1
        %p3653 = scmp.lt.s32.totalorder %s3650, 15
        %s3654 = scalar_select %p3653, %s3650, 15
        %s3655 = smul.addr %s3654, 2
        %s3656 = smul.addr %s3652, 32
        %s3657 = sadd.s32 %s3655, %s3656
        %s3658 = smul.addr %s3657, 4
        %s3659 = scalar_lea.vmem %s9, %s3658
      $region76: #{bottleneck_forward.1} parent=71 // pred_fallthru
        _
    $region72: #{bottleneck_forward.1} parent=5 // pred_fallthru
      _
  $region6: #{bottleneck_forward.1} parent=0 // loop_footer
    %s19 = sadd.s32 1, %s15
  $region7: #{bottleneck_forward.1} parent=0 // loop_footer_branch
    %14 = sbr.rel target = $region3
  $region8: #{bottleneck_forward.1} parent=0 // loop_exit
    _

</llo_original>
